<compile_context>
chip_gen: v5e
topology: v5e:2x2
jax: 0.10.0
libtpu: 0.0.40
codegen_flags: <defaults>
</compile_context>

<pallas_src>
import functools

import jax
import jax.numpy as jnp
import numpy as np
from jax.experimental import pallas as pl
from jax.experimental.pallas import tpu as pltpu

_MB = 1024 * 1024


def t5_block_kernel(hidden_ref, mask_ref, bias_ref,
                    ln1_ref, wq_ref, wk_ref, wv_ref, wo_ref,
                    ln2_ref, wi_ref, wff_ref,
                    out_ref,
                    qcache_ref, kcache_ref, vcache_ref, ctx_ref,
                    *, num_heads, d_kv, q_tile):
    eps = 1e-6
    f32 = jnp.float32
    cdt = jnp.bfloat16          # MXU operand dtype; accumulation stays f32.

    def rms(x, w):
        return x * jax.lax.rsqrt(jnp.mean(x * x, axis=-1, keepdims=True) + eps) * w

    ln1 = ln1_ref[0].astype(f32)
    qi = pl.program_id(1)

    # ---- Q/K/V projections + full-seq RMSNorm once per batch (qi == 0) -----
    # Cached in bf16 VMEM scratch and reused by every query tile of this batch
    # (weights arrive already in bf16 from the host).
    @pl.when(qi == 0)
    def _():
        h_all = hidden_ref[0].astype(f32)                        # (S, D)
        normed_all = rms(h_all, ln1).astype(cdt)
        qcache_ref[...] = jnp.dot(normed_all, wq_ref[...],
                                  preferred_element_type=f32).astype(cdt)
        kcache_ref[...] = jnp.dot(normed_all, wk_ref[...],
                                  preferred_element_type=f32).astype(cdt)
        vcache_ref[...] = jnp.dot(normed_all, wv_ref[...],
                                  preferred_element_type=f32).astype(cdt)

    seq_len = kcache_ref.shape[0]
    row0 = pl.multiple_of(qi * q_tile, q_tile)
    h_q = hidden_ref[0, pl.ds(row0, q_tile), :].astype(f32)      # (TQ, D) residual rows
    q_rows = qcache_ref[pl.ds(row0, q_tile), :]                  # (TQ, H*dkv) bf16
    mask = mask_ref[0, 0].astype(f32)                            # (1, S) additive

    # Heads processed in pairs (when H is even): slices start on 128-lane
    # boundaries for d_kv=64 and each ctx store is a lane-dense 2*d_kv slab.
    group = 2 if num_heads % 2 == 0 else 1
    for g in range(num_heads // group):
        h_lo = g * group
        lo = h_lo * d_kv
        hi = lo + group * d_kv
        qg = q_rows[:, lo:hi].reshape(q_tile, group, d_kv)       # (TQ, G, dkv)
        kg = kcache_ref[:, lo:hi].reshape(seq_len, group, d_kv)  # (S,  G, dkv)
        vg = vcache_ref[:, lo:hi].reshape(seq_len, group, d_kv)  # (S,  G, dkv)
        # T5 attention does NOT scale by 1/sqrt(d_kv).
        s = jnp.einsum('qgd,kgd->gqk', qg, kg,
                       preferred_element_type=f32)               # (G, TQ, S) f32
        s = s + bias_ref[0, h_lo:h_lo + group].astype(f32) + mask
        m = jnp.max(s, axis=-1, keepdims=True)
        # TODO(synk): on v6e/v7x the exp could run in bf16 (~2x EUP throughput);
        # kept f32 so a single code path validates on all generations incl. v5e.
        e = jnp.exp(s - m)
        denom = jnp.sum(e, axis=-1, keepdims=True)
        p = (e * pl.reciprocal(denom, approx=True)).astype(cdt)  # EUP reciprocal
        ctx = jnp.einsum('gqk,kgd->qgd', p, vg,
                         preferred_element_type=f32)             # (TQ, G, dkv)
        ctx_ref[:, lo:hi] = ctx.reshape(q_tile, group * d_kv).astype(cdt)

    # Single full-contraction output projection: (TQ, H*dkv) @ (H*dkv, D).
    attn_out = jnp.dot(ctx_ref[...], wo_ref[...], preferred_element_type=f32)
    h = h_q + attn_out                                           # f32 residual

    ln2 = ln2_ref[0].astype(f32)
    normed2 = rms(h, ln2).astype(cdt)
    ff = jnp.dot(normed2, wi_ref[...], preferred_element_type=f32)
    ff = jnp.maximum(ff, 0.0).astype(cdt)
    ff = jnp.dot(ff, wff_ref[...], preferred_element_type=f32)
    h = h + ff                                                   # f32 residual

    out_ref[0] = h.astype(out_ref.dtype)


def _vmem_capacity_bytes():
    try:
        return int(pltpu.get_tpu_info().vmem_capacity_bytes)
    except Exception:
        return 64 * _MB        # conservative (v7x-sized) fallback


def _pick_q_tile(seq_len, max_tile):
    """Largest sequence tile <= max_tile that divides S (sublane friendly)."""
    if seq_len <= max_tile:
        return seq_len
    for t in (512, 256, 128, 64, 32, 16, 8):
        if t <= max_tile and seq_len % t == 0:
            return t
    return seq_len


def checkpoint_wrapper_forward(hidden_states, attention_mask, position_bias,
                               params, *, num_heads, d_kv, q_tile=None):
    """CheckpointWrapper.forward (eval / use_checkpoint=False): pass-through to
    the wrapped T5 block, executed as one Pallas kernel tiled over
    (batch, query-tile)."""
    B, S, D = hidden_states.shape
    H = num_heads
    hdkv = H * d_kv
    dff = params['wi'].shape[1]

    # Generation-aware VMEM budget / max tile (64 MiB parts = v7x-class).
    vmem_cap = _vmem_capacity_bytes()
    small_vmem = vmem_cap <= 64 * _MB
    vmem_limit = 40 * _MB if small_vmem else 96 * _MB
    max_tile = 256 if small_vmem else 512

    TQ = q_tile if q_tile is not None else _pick_q_tile(S, max_tile)
    assert S % TQ == 0, "sequence length must be divisible by the q tile"
    n_qt = S // TQ

    f32 = jnp.float32
    bf16 = jnp.bfloat16
    # Weights pre-cast to bf16 on the host (MXU operands are bf16 anyway):
    # halves weight HBM->VMEM traffic and VMEM residency, removes VPU casts.
    ln1 = params['ln1'].astype(f32)
    ln2 = params['ln2'].astype(f32)
    wq = params['wq'].astype(bf16)
    wk = params['wk'].astype(bf16)
    wv = params['wv'].astype(bf16)
    wo = params['wo'].astype(bf16)
    wi = params['wi'].astype(bf16)
    wff = params['wff'].astype(bf16)
    # position_bias streamed as bf16: it is the largest per-step DMA tile.
    bias_bf16 = position_bias.astype(bf16)

    kernel = functools.partial(t5_block_kernel, num_heads=H, d_kv=d_kv,
                               q_tile=TQ)

    # Advisory cost estimate: Q/K/V projections now run once per batch row.
    flops = int(B * (6 * S * D * hdkv          # Q/K/V projections
                     + 4 * H * S * S * d_kv    # QK^T + PV
                     + 2 * S * hdkv * D        # output projection
                     + 4 * S * D * dff))       # FFN (wi + wff)
    transcendentals = int(B * (H * S * S + H * S + 2 * S))
    weight_bytes = sum(int(w.size) * w.dtype.itemsize
                       for w in (ln1, ln2, wq, wk, wv, wo, wi, wff))
    bytes_accessed = int(
        hidden_states.size * hidden_states.dtype.itemsize          # hidden read (1x/batch)
        + hidden_states.size * hidden_states.dtype.itemsize        # output write
        + attention_mask.size * attention_mask.dtype.itemsize
        + B * bias_bf16.size * bias_bf16.dtype.itemsize            # bias re-read per batch
        + weight_bytes)                                             # weights read once

    def build_and_call(single_buffer_weights):
        def wspec(shape):
            ndim = len(shape)
            idx = lambda b, qi, _n=ndim: (0,) * _n
            if single_buffer_weights:
                # Constant block index -> one resident buffer (no double-buffer).
                return pl.BlockSpec(shape, idx, pipeline_mode=pl.Buffered(1))
            return pl.BlockSpec(shape, idx)

        return pl.pallas_call(
            kernel,
            out_shape=jax.ShapeDtypeStruct((B, S, D), hidden_states.dtype),
            grid=(B, n_qt),
            in_specs=[
                pl.BlockSpec((1, S, D), lambda b, qi: (b, 0, 0)),        # hidden (full seq, 1 DMA/batch)
                pl.BlockSpec((1, 1, 1, S), lambda b, qi: (b, 0, 0, 0)),  # additive mask
                pl.BlockSpec((1, H, TQ, S), lambda b, qi: (0, 0, qi, 0)),# position bias (bf16 q-slice)
                wspec(ln1.shape), wspec(wq.shape), wspec(wk.shape),
                wspec(wv.shape), wspec(wo.shape), wspec(ln2.shape),
                wspec(wi.shape), wspec(wff.shape),
            ],
            out_specs=pl.BlockSpec((1, TQ, D), lambda b, qi: (b, qi, 0)),
            scratch_shapes=[
                pltpu.VMEM((S, hdkv), bf16),    # Q cache (per batch row)
                pltpu.VMEM((S, hdkv), bf16),    # K cache
                pltpu.VMEM((S, hdkv), bf16),    # V cache
                pltpu.VMEM((TQ, hdkv), bf16),   # attention context (per q-tile)
            ],
            compiler_params=pltpu.CompilerParams(
                dimension_semantics=("parallel", "arbitrary"),
                vmem_limit_bytes=vmem_limit),
            cost_estimate=pl.CostEstimate(flops=flops,
                                          transcendentals=transcendentals,
                                          bytes_accessed=bytes_accessed),
        )(hidden_states, attention_mask, bias_bf16,
          ln1, wq, wk, wv, wo, ln2, wi, wff)

    try:
        new_hidden = build_and_call(True)
    except Exception:
        # pl.Buffered(1) not supported by this jax/libtpu combo -> fall back to
        # default double-buffered weight blocks (correctness unaffected).
        new_hidden = build_and_call(False)

    # T5 block returns a tuple (hidden_states, ..., position_bias); the wrapper
    # forwards the tuple unchanged.
    return (new_hidden, position_bias)


def ref_forward(hidden, mask, bias, p, num_heads, d_kv, compute_dtype=jnp.bfloat16):
    """Pure-JAX reference of the wrapped T5 block, mirroring the kernel's
    bf16-operand / f32-accumulation mixed precision."""
    eps = 1e-6
    f32 = jnp.float32

    def rms(x, w):
        return x * jax.lax.rsqrt(jnp.mean(x * x, -1, keepdims=True) + eps) * w

    def mm(a, b):
        return jnp.dot(a.astype(compute_dtype), b.astype(compute_dtype),
                       preferred_element_type=f32)

    B, S, D = hidden.shape
    h = hidden.astype(f32)
    normed = rms(h, p['ln1'][0])
    q = mm(normed, p['wq']).reshape(B, S, num_heads, d_kv)
    k = mm(normed, p['wk']).reshape(B, S, num_heads, d_kv)
    v = mm(normed, p['wv']).reshape(B, S, num_heads, d_kv)
    scores = jnp.einsum('bqhd,bkhd->bhqk',
                        q.astype(compute_dtype), k.astype(compute_dtype),
                        preferred_element_type=f32) + bias + mask
    attn = jax.nn.softmax(scores, axis=-1)
    ctx = jnp.einsum('bhqk,bkhd->bqhd',
                     attn.astype(compute_dtype), v.astype(compute_dtype),
                     preferred_element_type=f32)
    ctx = ctx.reshape(B, S, num_heads * d_kv)
    h = h + mm(ctx, p['wo'])
    n2 = rms(h, p['ln2'][0])
    ff = jnp.maximum(mm(n2, p['wi']), 0.0)
    h = h + mm(ff, p['wff'])
    return h


if __name__ == "__main__":
    B, S, D, H, DKV, DFF = 2, 8, 32, 4, 8, 64

    key = jax.random.PRNGKey(0)
    keys = jax.random.split(key, 9)

    hidden_states = jax.random.normal(keys[0], (B, S, D), jnp.float32)

    # additive attention mask: keep everything except last 2 keys of batch 1
    keep = jnp.ones((B, S), jnp.float32).at[1, -2:].set(0.0)
    attention_mask = (1.0 - keep)[:, None, None, :] * -1e9        # (B,1,1,S)

    position_bias = jax.random.normal(keys[1], (1, H, S, S), jnp.float32) * 0.1

    scale = 0.05
    params = {
        'ln1': jnp.ones((1, D), jnp.float32),
        'wq': jax.random.normal(keys[2], (D, H * DKV), jnp.float32) * scale,
        'wk': jax.random.normal(keys[3], (D, H * DKV), jnp.float32) * scale,
        'wv': jax.random.normal(keys[4], (D, H * DKV), jnp.float32) * scale,
        'wo': jax.random.normal(keys[5], (H * DKV, D), jnp.float32) * scale,
        'ln2': jnp.ones((1, D), jnp.float32),
        'wi': jax.random.normal(keys[6], (D, DFF), jnp.float32) * scale,
        'wff': jax.random.normal(keys[7], (DFF, D), jnp.float32) * scale,
    }

    out = checkpoint_wrapper_forward(hidden_states, attention_mask, position_bias,
                                     params, num_heads=H, d_kv=DKV)
    out = jax.block_until_ready(out)

    expected = ref_forward(hidden_states, attention_mask, position_bias,
                           params, H, DKV)
    np.testing.assert_allclose(np.asarray(out[0]), np.asarray(expected),
                               rtol=5e-3, atol=5e-3)
    assert out[1].shape == (1, H, S, S)

    print("KERNEL_OK")
</pallas_src>

<mosaic_0001>
module attributes {stable_mosaic.version = 11 : i64} {
  func.func @t5_block_kernel(%arg0: i32, %arg1: i32, %arg2: memref<1x8x32xf32, #tpu.memory_space<vmem>>, %arg3: memref<1x1x1x8xf32, #tpu.memory_space<vmem>>, %arg4: memref<1x4x8x8xbf16, #tpu.memory_space<vmem>>, %arg5: memref<1x32xf32, #tpu.memory_space<vmem>>, %arg6: memref<32x32xbf16, #tpu.memory_space<vmem>>, %arg7: memref<32x32xbf16, #tpu.memory_space<vmem>>, %arg8: memref<32x32xbf16, #tpu.memory_space<vmem>>, %arg9: memref<32x32xbf16, #tpu.memory_space<vmem>>, %arg10: memref<1x32xf32, #tpu.memory_space<vmem>>, %arg11: memref<32x64xbf16, #tpu.memory_space<vmem>>, %arg12: memref<64x32xbf16, #tpu.memory_space<vmem>>, %arg13: memref<1x8x32xf32, #tpu.memory_space<vmem>>, %arg14: memref<8x32xbf16, #tpu.memory_space<vmem>>, %arg15: memref<8x32xbf16, #tpu.memory_space<vmem>>, %arg16: memref<8x32xbf16, #tpu.memory_space<vmem>>, %arg17: memref<8x32xbf16, #tpu.memory_space<vmem>>) attributes {dimension_semantics = [#tpu.dimension_semantics<parallel>, #tpu.dimension_semantics<arbitrary>], iteration_bounds = array<i64: 2, 1>, scalar_prefetch = 0 : i64, scratch_operands = 4 : i64, tpu.core_type = #tpu.core_type<tc>, window_params = [{transform_indices = @transform_0, window_bounds = array<i64: 1, 8, 32>}, {transform_indices = @transform_1, window_bounds = array<i64: 1, 1, 1, 8>}, {transform_indices = @transform_2, window_bounds = array<i64: 1, 4, 8, 8>}, {pipeline_mode = #tpu.pipeline_mode<synchronous>, transform_indices = @transform_3, window_bounds = array<i64: 1, 32>}, {pipeline_mode = #tpu.pipeline_mode<synchronous>, transform_indices = @transform_4, window_bounds = array<i64: 32, 32>}, {pipeline_mode = #tpu.pipeline_mode<synchronous>, transform_indices = @transform_5, window_bounds = array<i64: 32, 32>}, {pipeline_mode = #tpu.pipeline_mode<synchronous>, transform_indices = @transform_6, window_bounds = array<i64: 32, 32>}, {pipeline_mode = #tpu.pipeline_mode<synchronous>, transform_indices = @transform_7, window_bounds = array<i64: 32, 32>}, {pipeline_mode = #tpu.pipeline_mode<synchronous>, transform_indices = @transform_8, window_bounds = array<i64: 1, 32>}, {pipeline_mode = #tpu.pipeline_mode<synchronous>, transform_indices = @transform_9, window_bounds = array<i64: 32, 64>}, {pipeline_mode = #tpu.pipeline_mode<synchronous>, transform_indices = @transform_10, window_bounds = array<i64: 64, 32>}, {transform_indices = @transform_11, window_bounds = array<i64: 1, 8, 32>}]} {
    %c0 = arith.constant 0 : index
    %c0_0 = arith.constant 0 : index
    %0 = vector.load %arg5[%c0, %c0_0] : memref<1x32xf32, #tpu.memory_space<vmem>>, vector<1x32xf32>
    %1 = vector.shape_cast %0 : vector<1x32xf32> to vector<32xf32>
    %c0_i32 = arith.constant 0 : i32
    %2 = arith.cmpi eq, %arg1, %c0_i32 : i32
    %3 = arith.extui %2 : i1 to i32
    %c0_i32_1 = arith.constant 0 : i32
    %4 = arith.cmpi ne, %3, %c0_i32_1 : i32
    scf.if %4 {
      %c0_54 = arith.constant 0 : index
      %c0_55 = arith.constant 0 : index
      %c0_56 = arith.constant 0 : index
      %105 = vector.load %arg2[%c0_54, %c0_55, %c0_56] : memref<1x8x32xf32, #tpu.memory_space<vmem>>, vector<1x8x32xf32>
      %106 = vector.shape_cast %105 : vector<1x8x32xf32> to vector<8x32xf32>
      %107 = arith.mulf %106, %106 : vector<8x32xf32>
      %cst_57 = arith.constant dense<0.000000e+00> : vector<8xf32>
      %108 = vector.multi_reduction <add>, %107, %cst_57 [1] : vector<8x32xf32> to vector<8xf32>
      %109 = vector.shape_cast %108 : vector<8xf32> to vector<8x1xf32>
      %cst_58 = arith.constant 3.200000e+01 : f32
      %110 = vector.broadcast %cst_58 : f32 to vector<8x1xf32>
      %111 = arith.divf %109, %110 : vector<8x1xf32>
      %cst_59 = arith.constant 9.99999997E-7 : f32
      %112 = vector.broadcast %cst_59 : f32 to vector<8x1xf32>
      %113 = arith.addf %111, %112 : vector<8x1xf32>
      %114 = math.rsqrt %113 : vector<8x1xf32>
      %115 = vector.broadcast %114 : vector<8x1xf32> to vector<8x32xf32>
      %116 = arith.mulf %106, %115 : vector<8x32xf32>
      %117 = vector.shape_cast %1 : vector<32xf32> to vector<1x32xf32>
      %118 = vector.broadcast %117 : vector<1x32xf32> to vector<8x32xf32>
      %119 = arith.mulf %116, %118 : vector<8x32xf32>
      %120 = arith.truncf %119 : vector<8x32xf32> to vector<8x32xbf16>
      %c0_60 = arith.constant 0 : index
      %c0_61 = arith.constant 0 : index
      %121 = vector.load %arg6[%c0_60, %c0_61] : memref<32x32xbf16, #tpu.memory_space<vmem>>, vector<32x32xbf16>
      %cst_62 = arith.constant dense<0.000000e+00> : vector<8x32xf32>
      %122 = tpu.matmul %120, %121, %cst_62 {dimension_numbers = #tpu.dot_dimension_numbers<[1], [0], [0], [1], [0, 0, 1, 1], [], []>} : vector<8x32xbf16>, vector<32x32xbf16>, vector<8x32xf32> -> vector<8x32xf32>
      %123 = arith.truncf %122 : vector<8x32xf32> to vector<8x32xbf16>
      %c0_63 = arith.constant 0 : index
      %c0_64 = arith.constant 0 : index
      %124 = vector.load %arg14[%c0_63, %c0_64] : memref<8x32xbf16, #tpu.memory_space<vmem>>, vector<8x32xbf16>
      tpu.vector_store %arg14[%c0_63, %c0_64], %123 {strides = array<i32>} : memref<8x32xbf16, #tpu.memory_space<vmem>>, vector<8x32xbf16>,
      %c0_65 = arith.constant 0 : index
      %c0_66 = arith.constant 0 : index
      %125 = vector.load %arg7[%c0_65, %c0_66] : memref<32x32xbf16, #tpu.memory_space<vmem>>, vector<32x32xbf16>
      %cst_67 = arith.constant dense<0.000000e+00> : vector<8x32xf32>
      %126 = tpu.matmul %120, %125, %cst_67 {dimension_numbers = #tpu.dot_dimension_numbers<[1], [0], [0], [1], [0, 0, 1, 1], [], []>} : vector<8x32xbf16>, vector<32x32xbf16>, vector<8x32xf32> -> vector<8x32xf32>
      %127 = arith.truncf %126 : vector<8x32xf32> to vector<8x32xbf16>
      %c0_68 = arith.constant 0 : index
      %c0_69 = arith.constant 0 : index
      %128 = vector.load %arg15[%c0_68, %c0_69] : memref<8x32xbf16, #tpu.memory_space<vmem>>, vector<8x32xbf16>
      tpu.vector_store %arg15[%c0_68, %c0_69], %127 {strides = array<i32>} : memref<8x32xbf16, #tpu.memory_space<vmem>>, vector<8x32xbf16>,
      %c0_70 = arith.constant 0 : index
      %c0_71 = arith.constant 0 : index
      %129 = vector.load %arg8[%c0_70, %c0_71] : memref<32x32xbf16, #tpu.memory_space<vmem>>, vector<32x32xbf16>
      %cst_72 = arith.constant dense<0.000000e+00> : vector<8x32xf32>
      %130 = tpu.matmul %120, %129, %cst_72 {dimension_numbers = #tpu.dot_dimension_numbers<[1], [0], [0], [1], [0, 0, 1, 1], [], []>} : vector<8x32xbf16>, vector<32x32xbf16>, vector<8x32xf32> -> vector<8x32xf32>
      %131 = arith.truncf %130 : vector<8x32xf32> to vector<8x32xbf16>
      %c0_73 = arith.constant 0 : index
      %c0_74 = arith.constant 0 : index
      %132 = vector.load %arg16[%c0_73, %c0_74] : memref<8x32xbf16, #tpu.memory_space<vmem>>, vector<8x32xbf16>
      tpu.vector_store %arg16[%c0_73, %c0_74], %131 {strides = array<i32>} : memref<8x32xbf16, #tpu.memory_space<vmem>>, vector<8x32xbf16>,
    } else {
    }
    %c8_i32 = arith.constant 8 : i32
    %5 = arith.muli %arg1, %c8_i32 : i32
    %6 = tpu.assume_multiple %5, 8 : i32
    %c0_2 = arith.constant 0 : index
    %7 = arith.index_cast %6 : i32 to index
    %c0_3 = arith.constant 0 : index
    %8 = vector.load %arg2[%c0_2, %7, %c0_3] : memref<1x8x32xf32, #tpu.memory_space<vmem>>, vector<1x8x32xf32>
    %9 = vector.shape_cast %8 : vector<1x8x32xf32> to vector<8x32xf32>
    %10 = arith.index_cast %6 : i32 to index
    %c0_4 = arith.constant 0 : index
    %11 = vector.load %arg14[%10, %c0_4] : memref<8x32xbf16, #tpu.memory_space<vmem>>, vector<8x32xbf16>
    %c0_5 = arith.constant 0 : index
    %c0_6 = arith.constant 0 : index
    %c0_7 = arith.constant 0 : index
    %c0_8 = arith.constant 0 : index
    %12 = vector.load %arg3[%c0_5, %c0_6, %c0_7, %c0_8] : memref<1x1x1x8xf32, #tpu.memory_space<vmem>>, vector<1x1x1x8xf32>
    %13 = vector.shape_cast %12 : vector<1x1x1x8xf32> to vector<1x8xf32>
    %14 = vector.extract_strided_slice %11 {offsets = [0, 0], sizes = [8, 16], strides = [1, 1]} : vector<8x32xbf16> to vector<8x16xbf16>
    %15 = vector.shape_cast %14 : vector<8x16xbf16> to vector<8x2x8xbf16>
    %c0_9 = arith.constant 0 : index
    %c0_10 = arith.constant 0 : index
    %16 = vector.load %arg15[%c0_9, %c0_10] : memref<8x32xbf16, #tpu.memory_space<vmem>>, vector<8x16xbf16>
    %17 = vector.shape_cast %16 : vector<8x16xbf16> to vector<8x2x8xbf16>
    %c0_11 = arith.constant 0 : index
    %c0_12 = arith.constant 0 : index
    %18 = vector.load %arg16[%c0_11, %c0_12] : memref<8x32xbf16, #tpu.memory_space<vmem>>, vector<8x16xbf16>
    %19 = vector.shape_cast %18 : vector<8x16xbf16> to vector<8x2x8xbf16>
    "tpu.trace_start"() <{level = 10 : i32, message = "qgd,kgd->gqk"}> : () -> ()
    %cst = arith.constant dense<0.000000e+00> : vector<2x8x8xf32>
    %20 = tpu.matmul %15, %17, %cst {dimension_numbers = #tpu.dot_dimension_numbers<[2], [2], [0], [0], [0, 1, 0, 0, 1, 0], [1], [1]>} : vector<8x2x8xbf16>, vector<8x2x8xbf16>, vector<2x8x8xf32> -> vector<2x8x8xf32>
    "tpu.trace_stop"() : () -> ()
    %c0_13 = arith.constant 0 : index
    %c0_14 = arith.constant 0 : index
    %c0_15 = arith.constant 0 : index
    %c0_16 = arith.constant 0 : index
    %21 = vector.load %arg4[%c0_13, %c0_14, %c0_15, %c0_16] : memref<1x4x8x8xbf16, #tpu.memory_space<vmem>>, vector<1x2x8x8xbf16>
    %22 = vector.shape_cast %21 : vector<1x2x8x8xbf16> to vector<2x8x8xbf16>
    %23 = arith.extf %22 : vector<2x8x8xbf16> to vector<2x8x8xf32>
    %24 = arith.addf %20, %23 : vector<2x8x8xf32>
    %25 = vector.shape_cast %13 : vector<1x8xf32> to vector<1x1x8xf32>
    %26 = vector.broadcast %25 : vector<1x1x8xf32> to vector<2x8x8xf32>
    %27 = arith.addf %24, %26 : vector<2x8x8xf32>
    %cst_17 = arith.constant dense<0xFF800000> : vector<2x8xf32>
    %28 = vector.multi_reduction <maximumf>, %27, %cst_17 [2] : vector<2x8x8xf32> to vector<2x8xf32>
    %29 = vector.shape_cast %28 : vector<2x8xf32> to vector<2x8x1xf32>
    %30 = vector.broadcast %29 : vector<2x8x1xf32> to vector<2x8x8xf32>
    %31 = arith.subf %27, %30 : vector<2x8x8xf32>
    %32 = math.exp %31 : vector<2x8x8xf32>
    %cst_18 = arith.constant dense<0.000000e+00> : vector<2x8xf32>
    %33 = vector.multi_reduction <add>, %32, %cst_18 [2] : vector<2x8x8xf32> to vector<2x8xf32>
    %34 = vector.shape_cast %33 : vector<2x8xf32> to vector<2x8x1xf32>
    %35 = tpu.reciprocal %34 {approx = true} : vector<2x8x1xf32> -> vector<2x8x1xf32>
    %36 = vector.broadcast %35 : vector<2x8x1xf32> to vector<2x8x8xf32>
    %37 = arith.mulf %32, %36 : vector<2x8x8xf32>
    %38 = arith.truncf %37 : vector<2x8x8xf32> to vector<2x8x8xbf16>
    "tpu.trace_start"() <{level = 10 : i32, message = "gqk,kgd->qgd"}> : () -> ()
    %cst_19 = arith.constant dense<0.000000e+00> : vector<2x8x8xf32>
    %39 = tpu.matmul %19, %38, %cst_19 {dimension_numbers = #tpu.dot_dimension_numbers<[0], [2], [2], [1], [0, 1, 0, 2, 1, 1], [1], [0]>} : vector<8x2x8xbf16>, vector<2x8x8xbf16>, vector<2x8x8xf32> -> vector<2x8x8xf32>
    %40 = tpu.transpose %39, [2, 0, 1] : vector<2x8x8xf32> -> vector<8x2x8xf32>
    "tpu.trace_stop"() : () -> ()
    %41 = vector.shape_cast %40 : vector<8x2x8xf32> to vector<8x16xf32>
    %42 = arith.truncf %41 : vector<8x16xf32> to vector<8x16xbf16>
    %c0_20 = arith.constant 0 : index
    %c0_21 = arith.constant 0 : index
    %43 = vector.load %arg17[%c0_20, %c0_21] : memref<8x32xbf16, #tpu.memory_space<vmem>>, vector<8x16xbf16>
    tpu.vector_store %arg17[%c0_20, %c0_21], %42 {strides = array<i32>} : memref<8x32xbf16, #tpu.memory_space<vmem>>, vector<8x16xbf16>,
    %44 = vector.extract_strided_slice %11 {offsets = [0, 16], sizes = [8, 16], strides = [1, 1]} : vector<8x32xbf16> to vector<8x16xbf16>
    %45 = vector.shape_cast %44 : vector<8x16xbf16> to vector<8x2x8xbf16>
    %c0_22 = arith.constant 0 : index
    %c16 = arith.constant 16 : index
    %46 = vector.load %arg15[%c0_22, %c16] : memref<8x32xbf16, #tpu.memory_space<vmem>>, vector<8x16xbf16>
    %47 = vector.shape_cast %46 : vector<8x16xbf16> to vector<8x2x8xbf16>
    %c0_23 = arith.constant 0 : index
    %c16_24 = arith.constant 16 : index
    %48 = vector.load %arg16[%c0_23, %c16_24] : memref<8x32xbf16, #tpu.memory_space<vmem>>, vector<8x16xbf16>
    %49 = vector.shape_cast %48 : vector<8x16xbf16> to vector<8x2x8xbf16>
    "tpu.trace_start"() <{level = 10 : i32, message = "qgd,kgd->gqk"}> : () -> ()
    %cst_25 = arith.constant dense<0.000000e+00> : vector<2x8x8xf32>
    %50 = tpu.matmul %45, %47, %cst_25 {dimension_numbers = #tpu.dot_dimension_numbers<[2], [2], [0], [0], [0, 1, 0, 0, 1, 0], [1], [1]>} : vector<8x2x8xbf16>, vector<8x2x8xbf16>, vector<2x8x8xf32> -> vector<2x8x8xf32>
    "tpu.trace_stop"() : () -> ()
    %c0_26 = arith.constant 0 : index
    %c2 = arith.constant 2 : index
    %c0_27 = arith.constant 0 : index
    %c0_28 = arith.constant 0 : index
    %51 = vector.load %arg4[%c0_26, %c2, %c0_27, %c0_28] : memref<1x4x8x8xbf16, #tpu.memory_space<vmem>>, vector<1x2x8x8xbf16>
    %52 = vector.shape_cast %51 : vector<1x2x8x8xbf16> to vector<2x8x8xbf16>
    %53 = arith.extf %52 : vector<2x8x8xbf16> to vector<2x8x8xf32>
    %54 = arith.addf %50, %53 : vector<2x8x8xf32>
    %55 = vector.shape_cast %13 : vector<1x8xf32> to vector<1x1x8xf32>
    %56 = vector.broadcast %55 : vector<1x1x8xf32> to vector<2x8x8xf32>
    %57 = arith.addf %54, %56 : vector<2x8x8xf32>
    %cst_29 = arith.constant dense<0xFF800000> : vector<2x8xf32>
    %58 = vector.multi_reduction <maximumf>, %57, %cst_29 [2] : vector<2x8x8xf32> to vector<2x8xf32>
    %59 = vector.shape_cast %58 : vector<2x8xf32> to vector<2x8x1xf32>
    %60 = vector.broadcast %59 : vector<2x8x1xf32> to vector<2x8x8xf32>
    %61 = arith.subf %57, %60 : vector<2x8x8xf32>
    %62 = math.exp %61 : vector<2x8x8xf32>
    %cst_30 = arith.constant dense<0.000000e+00> : vector<2x8xf32>
    %63 = vector.multi_reduction <add>, %62, %cst_30 [2] : vector<2x8x8xf32> to vector<2x8xf32>
    %64 = vector.shape_cast %63 : vector<2x8xf32> to vector<2x8x1xf32>
    %65 = tpu.reciprocal %64 {approx = true} : vector<2x8x1xf32> -> vector<2x8x1xf32>
    %66 = vector.broadcast %65 : vector<2x8x1xf32> to vector<2x8x8xf32>
    %67 = arith.mulf %62, %66 : vector<2x8x8xf32>
    %68 = arith.truncf %67 : vector<2x8x8xf32> to vector<2x8x8xbf16>
    "tpu.trace_start"() <{level = 10 : i32, message = "gqk,kgd->qgd"}> : () -> ()
    %cst_31 = arith.constant dense<0.000000e+00> : vector<2x8x8xf32>
    %69 = tpu.matmul %49, %68, %cst_31 {dimension_numbers = #tpu.dot_dimension_numbers<[0], [2], [2], [1], [0, 1, 0, 2, 1, 1], [1], [0]>} : vector<8x2x8xbf16>, vector<2x8x8xbf16>, vector<2x8x8xf32> -> vector<2x8x8xf32>
    %70 = tpu.transpose %69, [2, 0, 1] : vector<2x8x8xf32> -> vector<8x2x8xf32>
    "tpu.trace_stop"() : () -> ()
    %71 = vector.shape_cast %70 : vector<8x2x8xf32> to vector<8x16xf32>
    %72 = arith.truncf %71 : vector<8x16xf32> to vector<8x16xbf16>
    %c0_32 = arith.constant 0 : index
    %c16_33 = arith.constant 16 : index
    %73 = vector.load %arg17[%c0_32, %c16_33] : memref<8x32xbf16, #tpu.memory_space<vmem>>, vector<8x16xbf16>
    tpu.vector_store %arg17[%c0_32, %c16_33], %72 {strides = array<i32>} : memref<8x32xbf16, #tpu.memory_space<vmem>>, vector<8x16xbf16>,
    %c0_34 = arith.constant 0 : index
    %c0_35 = arith.constant 0 : index
    %74 = vector.load %arg17[%c0_34, %c0_35] : memref<8x32xbf16, #tpu.memory_space<vmem>>, vector<8x32xbf16>
    %c0_36 = arith.constant 0 : index
    %c0_37 = arith.constant 0 : index
    %75 = vector.load %arg9[%c0_36, %c0_37] : memref<32x32xbf16, #tpu.memory_space<vmem>>, vector<32x32xbf16>
    %cst_38 = arith.constant dense<0.000000e+00> : vector<8x32xf32>
    %76 = tpu.matmul %74, %75, %cst_38 {dimension_numbers = #tpu.dot_dimension_numbers<[1], [0], [0], [1], [0, 0, 1, 1], [], []>} : vector<8x32xbf16>, vector<32x32xbf16>, vector<8x32xf32> -> vector<8x32xf32>
    %77 = arith.addf %9, %76 : vector<8x32xf32>
    %c0_39 = arith.constant 0 : index
    %c0_40 = arith.constant 0 : index
    %78 = vector.load %arg10[%c0_39, %c0_40] : memref<1x32xf32, #tpu.memory_space<vmem>>, vector<1x32xf32>
    %79 = vector.shape_cast %78 : vector<1x32xf32> to vector<32xf32>
    %80 = arith.mulf %77, %77 : vector<8x32xf32>
    %cst_41 = arith.constant dense<0.000000e+00> : vector<8xf32>
    %81 = vector.multi_reduction <add>, %80, %cst_41 [1] : vector<8x32xf32> to vector<8xf32>
    %82 = vector.shape_cast %81 : vector<8xf32> to vector<8x1xf32>
    %cst_42 = arith.constant 3.200000e+01 : f32
    %83 = vector.broadcast %cst_42 : f32 to vector<8x1xf32>
    %84 = arith.divf %82, %83 : vector<8x1xf32>
    %cst_43 = arith.constant 9.99999997E-7 : f32
    %85 = vector.broadcast %cst_43 : f32 to vector<8x1xf32>
    %86 = arith.addf %84, %85 : vector<8x1xf32>
    %87 = math.rsqrt %86 : vector<8x1xf32>
    %88 = vector.broadcast %87 : vector<8x1xf32> to vector<8x32xf32>
    %89 = arith.mulf %77, %88 : vector<8x32xf32>
    %90 = vector.shape_cast %79 : vector<32xf32> to vector<1x32xf32>
    %91 = vector.broadcast %90 : vector<1x32xf32> to vector<8x32xf32>
    %92 = arith.mulf %89, %91 : vector<8x32xf32>
    %93 = arith.truncf %92 : vector<8x32xf32> to vector<8x32xbf16>
    %c0_44 = arith.constant 0 : index
    %c0_45 = arith.constant 0 : index
    %94 = vector.load %arg11[%c0_44, %c0_45] : memref<32x64xbf16, #tpu.memory_space<vmem>>, vector<32x64xbf16>
    %cst_46 = arith.constant dense<0.000000e+00> : vector<8x64xf32>
    %95 = tpu.matmul %93, %94, %cst_46 {dimension_numbers = #tpu.dot_dimension_numbers<[1], [0], [0], [1], [0, 0, 1, 1], [], []>} : vector<8x32xbf16>, vector<32x64xbf16>, vector<8x64xf32> -> vector<8x64xf32>
    %cst_47 = arith.constant 0.000000e+00 : f32
    %96 = vector.broadcast %cst_47 : f32 to vector<8x64xf32>
    %97 = arith.maximumf %95, %96 : vector<8x64xf32>
    %98 = arith.truncf %97 : vector<8x64xf32> to vector<8x64xbf16>
    %c0_48 = arith.constant 0 : index
    %c0_49 = arith.constant 0 : index
    %99 = vector.load %arg12[%c0_48, %c0_49] : memref<64x32xbf16, #tpu.memory_space<vmem>>, vector<64x32xbf16>
    %cst_50 = arith.constant dense<0.000000e+00> : vector<8x32xf32>
    %100 = tpu.matmul %98, %99, %cst_50 {dimension_numbers = #tpu.dot_dimension_numbers<[1], [0], [0], [1], [0, 0, 1, 1], [], []>} : vector<8x64xbf16>, vector<64x32xbf16>, vector<8x32xf32> -> vector<8x32xf32>
    %101 = arith.addf %77, %100 : vector<8x32xf32>
    %c0_51 = arith.constant 0 : index
    %c0_52 = arith.constant 0 : index
    %c0_53 = arith.constant 0 : index
    %102 = vector.load %arg13[%c0_51, %c0_52, %c0_53] : memref<1x8x32xf32, #tpu.memory_space<vmem>>, vector<1x8x32xf32>
    %103 = vector.shape_cast %102 : vector<1x8x32xf32> to vector<8x32xf32>
    %104 = vector.shape_cast %101 : vector<8x32xf32> to vector<1x8x32xf32>
    tpu.vector_store %arg13[%c0_51, %c0_52, %c0_53], %104 {strides = array<i32>} : memref<1x8x32xf32, #tpu.memory_space<vmem>>, vector<1x8x32xf32>,
    return
  }
  func.func @transform_0(%arg0: i32, %arg1: i32) -> (i32, i32, i32) {
    %c0_i32 = arith.constant 0 : i32
    %c0_i32_0 = arith.constant 0 : i32
    %c0_i32_1 = arith.constant 0 : i32
    return %arg0, %c0_i32, %c0_i32_0 : i32, i32, i32
  }
  func.func @transform_1(%arg0: i32, %arg1: i32) -> (i32, i32, i32, i32) {
    %c0_i32 = arith.constant 0 : i32
    %c0_i32_0 = arith.constant 0 : i32
    %c0_i32_1 = arith.constant 0 : i32
    %c0_i32_2 = arith.constant 0 : i32
    return %arg0, %c0_i32, %c0_i32_0, %c0_i32_1 : i32, i32, i32, i32
  }
  func.func @transform_2(%arg0: i32, %arg1: i32) -> (i32, i32, i32, i32) {
    %c0_i32 = arith.constant 0 : i32
    %c0_i32_0 = arith.constant 0 : i32
    %c0_i32_1 = arith.constant 0 : i32
    %c0_i32_2 = arith.constant 0 : i32
    return %c0_i32, %c0_i32_0, %arg1, %c0_i32_1 : i32, i32, i32, i32
  }
  func.func @transform_3(%arg0: i32, %arg1: i32) -> (i32, i32) {
    %c0_i32 = arith.constant 0 : i32
    %c0_i32_0 = arith.constant 0 : i32
    %c0_i32_1 = arith.constant 0 : i32
    return %c0_i32, %c0_i32_0 : i32, i32
  }
  func.func @transform_4(%arg0: i32, %arg1: i32) -> (i32, i32) {
    %c0_i32 = arith.constant 0 : i32
    %c0_i32_0 = arith.constant 0 : i32
    %c0_i32_1 = arith.constant 0 : i32
    return %c0_i32, %c0_i32_0 : i32, i32
  }
  func.func @transform_5(%arg0: i32, %arg1: i32) -> (i32, i32) {
    %c0_i32 = arith.constant 0 : i32
    %c0_i32_0 = arith.constant 0 : i32
    %c0_i32_1 = arith.constant 0 : i32
    return %c0_i32, %c0_i32_0 : i32, i32
  }
  func.func @transform_6(%arg0: i32, %arg1: i32) -> (i32, i32) {
    %c0_i32 = arith.constant 0 : i32
    %c0_i32_0 = arith.constant 0 : i32
    %c0_i32_1 = arith.constant 0 : i32
    return %c0_i32, %c0_i32_0 : i32, i32
  }
  func.func @transform_7(%arg0: i32, %arg1: i32) -> (i32, i32) {
    %c0_i32 = arith.constant 0 : i32
    %c0_i32_0 = arith.constant 0 : i32
    %c0_i32_1 = arith.constant 0 : i32
    return %c0_i32, %c0_i32_0 : i32, i32
  }
  func.func @transform_8(%arg0: i32, %arg1: i32) -> (i32, i32) {
    %c0_i32 = arith.constant 0 : i32
    %c0_i32_0 = arith.constant 0 : i32
    %c0_i32_1 = arith.constant 0 : i32
    return %c0_i32, %c0_i32_0 : i32, i32
  }
  func.func @transform_9(%arg0: i32, %arg1: i32) -> (i32, i32) {
    %c0_i32 = arith.constant 0 : i32
    %c0_i32_0 = arith.constant 0 : i32
    %c0_i32_1 = arith.constant 0 : i32
    return %c0_i32, %c0_i32_0 : i32, i32
  }
  func.func @transform_10(%arg0: i32, %arg1: i32) -> (i32, i32) {
    %c0_i32 = arith.constant 0 : i32
    %c0_i32_0 = arith.constant 0 : i32
    %c0_i32_1 = arith.constant 0 : i32
    return %c0_i32, %c0_i32_0 : i32, i32
  }
  func.func @transform_11(%arg0: i32, %arg1: i32) -> (i32, i32, i32) {
    %c0_i32 = arith.constant 0 : i32
    %c0_i32_0 = arith.constant 0 : i32
    return %arg0, %arg1, %c0_i32 : i32, i32, i32
  }
}

module attributes {stable_mosaic.version = 11 : i64} {
  func.func @t5_block_kernel(%arg0: i32, %arg1: i32, %arg2: memref<1x8x32xf32, #tpu.memory_space<vmem>>, %arg3: memref<1x1x1x8xf32, #tpu.memory_space<vmem>>, %arg4: memref<1x4x8x8xbf16, #tpu.memory_space<vmem>>, %arg5: memref<1x32xf32, #tpu.memory_space<vmem>>, %arg6: memref<32x32xbf16, #tpu.memory_space<vmem>>, %arg7: memref<32x32xbf16, #tpu.memory_space<vmem>>, %arg8: memref<32x32xbf16, #tpu.memory_space<vmem>>, %arg9: memref<32x32xbf16, #tpu.memory_space<vmem>>, %arg10: memref<1x32xf32, #tpu.memory_space<vmem>>, %arg11: memref<32x64xbf16, #tpu.memory_space<vmem>>, %arg12: memref<64x32xbf16, #tpu.memory_space<vmem>>, %arg13: memref<1x8x32xf32, #tpu.memory_space<vmem>>, %arg14: memref<8x32xbf16, #tpu.memory_space<vmem>>, %arg15: memref<8x32xbf16, #tpu.memory_space<vmem>>, %arg16: memref<8x32xbf16, #tpu.memory_space<vmem>>, %arg17: memref<8x32xbf16, #tpu.memory_space<vmem>>) attributes {dimension_semantics = [#tpu.dimension_semantics<parallel>, #tpu.dimension_semantics<arbitrary>], iteration_bounds = array<i64: 2, 1>, scalar_prefetch = 0 : i64, scratch_operands = 4 : i64, tpu.core_type = #tpu.core_type<tc>, window_params = [{transform_indices = @transform_0, window_bounds = array<i64: 1, 8, 32>}, {transform_indices = @transform_1, window_bounds = array<i64: 1, 1, 1, 8>}, {transform_indices = @transform_2, window_bounds = array<i64: 1, 4, 8, 8>}, {pipeline_mode = #tpu.pipeline_mode<synchronous>, transform_indices = @transform_3, window_bounds = array<i64: 1, 32>}, {pipeline_mode = #tpu.pipeline_mode<synchronous>, transform_indices = @transform_4, window_bounds = array<i64: 32, 32>}, {pipeline_mode = #tpu.pipeline_mode<synchronous>, transform_indices = @transform_5, window_bounds = array<i64: 32, 32>}, {pipeline_mode = #tpu.pipeline_mode<synchronous>, transform_indices = @transform_6, window_bounds = array<i64: 32, 32>}, {pipeline_mode = #tpu.pipeline_mode<synchronous>, transform_indices = @transform_7, window_bounds = array<i64: 32, 32>}, {pipeline_mode = #tpu.pipeline_mode<synchronous>, transform_indices = @transform_8, window_bounds = array<i64: 1, 32>}, {pipeline_mode = #tpu.pipeline_mode<synchronous>, transform_indices = @transform_9, window_bounds = array<i64: 32, 64>}, {pipeline_mode = #tpu.pipeline_mode<synchronous>, transform_indices = @transform_10, window_bounds = array<i64: 64, 32>}, {transform_indices = @transform_11, window_bounds = array<i64: 1, 8, 32>}]} {
    %c0 = arith.constant 0 : index
    %c0_0 = arith.constant 0 : index
    %0 = vector.load %arg5[%c0, %c0_0] : memref<1x32xf32, #tpu.memory_space<vmem>>, vector<1x32xf32>
    %1 = vector.shape_cast %0 : vector<1x32xf32> to vector<32xf32>
    %c0_i32 = arith.constant 0 : i32
    %2 = arith.cmpi eq, %arg1, %c0_i32 : i32
    %3 = arith.extui %2 : i1 to i32
    %c0_i32_1 = arith.constant 0 : i32
    %4 = arith.cmpi ne, %3, %c0_i32_1 : i32
    scf.if %4 {
      %c0_54 = arith.constant 0 : index
      %c0_55 = arith.constant 0 : index
      %c0_56 = arith.constant 0 : index
      %105 = vector.load %arg2[%c0_54, %c0_55, %c0_56] : memref<1x8x32xf32, #tpu.memory_space<vmem>>, vector<1x8x32xf32>
      %106 = vector.shape_cast %105 : vector<1x8x32xf32> to vector<8x32xf32>
      %107 = arith.mulf %106, %106 : vector<8x32xf32>
      %cst_57 = arith.constant dense<0.000000e+00> : vector<8xf32>
      %108 = vector.multi_reduction <add>, %107, %cst_57 [1] : vector<8x32xf32> to vector<8xf32>
      %109 = vector.shape_cast %108 : vector<8xf32> to vector<8x1xf32>
      %cst_58 = arith.constant 3.200000e+01 : f32
      %110 = vector.broadcast %cst_58 : f32 to vector<8x1xf32>
      %111 = arith.divf %109, %110 : vector<8x1xf32>
      %cst_59 = arith.constant 9.99999997E-7 : f32
      %112 = vector.broadcast %cst_59 : f32 to vector<8x1xf32>
      %113 = arith.addf %111, %112 : vector<8x1xf32>
      %114 = math.rsqrt %113 : vector<8x1xf32>
      %115 = vector.broadcast %114 : vector<8x1xf32> to vector<8x32xf32>
      %116 = arith.mulf %106, %115 : vector<8x32xf32>
      %117 = vector.shape_cast %1 : vector<32xf32> to vector<1x32xf32>
      %118 = vector.broadcast %117 : vector<1x32xf32> to vector<8x32xf32>
      %119 = arith.mulf %116, %118 : vector<8x32xf32>
      %120 = arith.truncf %119 : vector<8x32xf32> to vector<8x32xbf16>
      %c0_60 = arith.constant 0 : index
      %c0_61 = arith.constant 0 : index
      %121 = vector.load %arg6[%c0_60, %c0_61] : memref<32x32xbf16, #tpu.memory_space<vmem>>, vector<32x32xbf16>
      %cst_62 = arith.constant dense<0.000000e+00> : vector<8x32xf32>
      %122 = tpu.matmul %120, %121, %cst_62 {dimension_numbers = #tpu.dot_dimension_numbers<[1], [0], [0], [1], [0, 0, 1, 1], [], []>} : vector<8x32xbf16>, vector<32x32xbf16>, vector<8x32xf32> -> vector<8x32xf32>
      %123 = arith.truncf %122 : vector<8x32xf32> to vector<8x32xbf16>
      %c0_63 = arith.constant 0 : index
      %c0_64 = arith.constant 0 : index
      %124 = vector.load %arg14[%c0_63, %c0_64] : memref<8x32xbf16, #tpu.memory_space<vmem>>, vector<8x32xbf16>
      tpu.vector_store %arg14[%c0_63, %c0_64], %123 {strides = array<i32>} : memref<8x32xbf16, #tpu.memory_space<vmem>>, vector<8x32xbf16>,
      %c0_65 = arith.constant 0 : index
      %c0_66 = arith.constant 0 : index
      %125 = vector.load %arg7[%c0_65, %c0_66] : memref<32x32xbf16, #tpu.memory_space<vmem>>, vector<32x32xbf16>
      %cst_67 = arith.constant dense<0.000000e+00> : vector<8x32xf32>
      %126 = tpu.matmul %120, %125, %cst_67 {dimension_numbers = #tpu.dot_dimension_numbers<[1], [0], [0], [1], [0, 0, 1, 1], [], []>} : vector<8x32xbf16>, vector<32x32xbf16>, vector<8x32xf32> -> vector<8x32xf32>
      %127 = arith.truncf %126 : vector<8x32xf32> to vector<8x32xbf16>
      %c0_68 = arith.constant 0 : index
      %c0_69 = arith.constant 0 : index
      %128 = vector.load %arg15[%c0_68, %c0_69] : memref<8x32xbf16, #tpu.memory_space<vmem>>, vector<8x32xbf16>
      tpu.vector_store %arg15[%c0_68, %c0_69], %127 {strides = array<i32>} : memref<8x32xbf16, #tpu.memory_space<vmem>>, vector<8x32xbf16>,
      %c0_70 = arith.constant 0 : index
      %c0_71 = arith.constant 0 : index
      %129 = vector.load %arg8[%c0_70, %c0_71] : memref<32x32xbf16, #tpu.memory_space<vmem>>, vector<32x32xbf16>
      %cst_72 = arith.constant dense<0.000000e+00> : vector<8x32xf32>
      %130 = tpu.matmul %120, %129, %cst_72 {dimension_numbers = #tpu.dot_dimension_numbers<[1], [0], [0], [1], [0, 0, 1, 1], [], []>} : vector<8x32xbf16>, vector<32x32xbf16>, vector<8x32xf32> -> vector<8x32xf32>
      %131 = arith.truncf %130 : vector<8x32xf32> to vector<8x32xbf16>
      %c0_73 = arith.constant 0 : index
      %c0_74 = arith.constant 0 : index
      %132 = vector.load %arg16[%c0_73, %c0_74] : memref<8x32xbf16, #tpu.memory_space<vmem>>, vector<8x32xbf16>
      tpu.vector_store %arg16[%c0_73, %c0_74], %131 {strides = array<i32>} : memref<8x32xbf16, #tpu.memory_space<vmem>>, vector<8x32xbf16>,
    } else {
    }
    %c8_i32 = arith.constant 8 : i32
    %5 = arith.muli %arg1, %c8_i32 : i32
    %6 = tpu.assume_multiple %5, 8 : i32
    %c0_2 = arith.constant 0 : index
    %7 = arith.index_cast %6 : i32 to index
    %c0_3 = arith.constant 0 : index
    %8 = vector.load %arg2[%c0_2, %7, %c0_3] : memref<1x8x32xf32, #tpu.memory_space<vmem>>, vector<1x8x32xf32>
    %9 = vector.shape_cast %8 : vector<1x8x32xf32> to vector<8x32xf32>
    %10 = arith.index_cast %6 : i32 to index
    %c0_4 = arith.constant 0 : index
    %11 = vector.load %arg14[%10, %c0_4] : memref<8x32xbf16, #tpu.memory_space<vmem>>, vector<8x32xbf16>
    %c0_5 = arith.constant 0 : index
    %c0_6 = arith.constant 0 : index
    %c0_7 = arith.constant 0 : index
    %c0_8 = arith.constant 0 : index
    %12 = vector.load %arg3[%c0_5, %c0_6, %c0_7, %c0_8] : memref<1x1x1x8xf32, #tpu.memory_space<vmem>>, vector<1x1x1x8xf32>
    %13 = vector.shape_cast %12 : vector<1x1x1x8xf32> to vector<1x8xf32>
    %14 = vector.extract_strided_slice %11 {offsets = [0, 0], sizes = [8, 16], strides = [1, 1]} : vector<8x32xbf16> to vector<8x16xbf16>
    %15 = vector.shape_cast %14 : vector<8x16xbf16> to vector<8x2x8xbf16>
    %c0_9 = arith.constant 0 : index
    %c0_10 = arith.constant 0 : index
    %16 = vector.load %arg15[%c0_9, %c0_10] : memref<8x32xbf16, #tpu.memory_space<vmem>>, vector<8x16xbf16>
    %17 = vector.shape_cast %16 : vector<8x16xbf16> to vector<8x2x8xbf16>
    %c0_11 = arith.constant 0 : index
    %c0_12 = arith.constant 0 : index
    %18 = vector.load %arg16[%c0_11, %c0_12] : memref<8x32xbf16, #tpu.memory_space<vmem>>, vector<8x16xbf16>
    %19 = vector.shape_cast %18 : vector<8x16xbf16> to vector<8x2x8xbf16>
    "tpu.trace_start"() <{level = 10 : i32, message = "qgd,kgd->gqk"}> : () -> ()
    %cst = arith.constant dense<0.000000e+00> : vector<2x8x8xf32>
    %20 = tpu.matmul %15, %17, %cst {dimension_numbers = #tpu.dot_dimension_numbers<[2], [2], [0], [0], [0, 1, 0, 0, 1, 0], [1], [1]>} : vector<8x2x8xbf16>, vector<8x2x8xbf16>, vector<2x8x8xf32> -> vector<2x8x8xf32>
    "tpu.trace_stop"() : () -> ()
    %c0_13 = arith.constant 0 : index
    %c0_14 = arith.constant 0 : index
    %c0_15 = arith.constant 0 : index
    %c0_16 = arith.constant 0 : index
    %21 = vector.load %arg4[%c0_13, %c0_14, %c0_15, %c0_16] : memref<1x4x8x8xbf16, #tpu.memory_space<vmem>>, vector<1x2x8x8xbf16>
    %22 = vector.shape_cast %21 : vector<1x2x8x8xbf16> to vector<2x8x8xbf16>
    %23 = arith.extf %22 : vector<2x8x8xbf16> to vector<2x8x8xf32>
    %24 = arith.addf %20, %23 : vector<2x8x8xf32>
    %25 = vector.shape_cast %13 : vector<1x8xf32> to vector<1x1x8xf32>
    %26 = vector.broadcast %25 : vector<1x1x8xf32> to vector<2x8x8xf32>
    %27 = arith.addf %24, %26 : vector<2x8x8xf32>
    %cst_17 = arith.constant dense<0xFF800000> : vector<2x8xf32>
    %28 = vector.multi_reduction <maximumf>, %27, %cst_17 [2] : vector<2x8x8xf32> to vector<2x8xf32>
    %29 = vector.shape_cast %28 : vector<2x8xf32> to vector<2x8x1xf32>
    %30 = vector.broadcast %29 : vector<2x8x1xf32> to vector<2x8x8xf32>
    %31 = arith.subf %27, %30 : vector<2x8x8xf32>
    %32 = math.exp %31 : vector<2x8x8xf32>
    %cst_18 = arith.constant dense<0.000000e+00> : vector<2x8xf32>
    %33 = vector.multi_reduction <add>, %32, %cst_18 [2] : vector<2x8x8xf32> to vector<2x8xf32>
    %34 = vector.shape_cast %33 : vector<2x8xf32> to vector<2x8x1xf32>
    %35 = tpu.reciprocal %34 {approx = true} : vector<2x8x1xf32> -> vector<2x8x1xf32>
    %36 = vector.broadcast %35 : vector<2x8x1xf32> to vector<2x8x8xf32>
    %37 = arith.mulf %32, %36 : vector<2x8x8xf32>
    %38 = arith.truncf %37 : vector<2x8x8xf32> to vector<2x8x8xbf16>
    "tpu.trace_start"() <{level = 10 : i32, message = "gqk,kgd->qgd"}> : () -> ()
    %cst_19 = arith.constant dense<0.000000e+00> : vector<2x8x8xf32>
    %39 = tpu.matmul %19, %38, %cst_19 {dimension_numbers = #tpu.dot_dimension_numbers<[0], [2], [2], [1], [0, 1, 0, 2, 1, 1], [1], [0]>} : vector<8x2x8xbf16>, vector<2x8x8xbf16>, vector<2x8x8xf32> -> vector<2x8x8xf32>
    %40 = tpu.transpose %39, [2, 0, 1] : vector<2x8x8xf32> -> vector<8x2x8xf32>
    "tpu.trace_stop"() : () -> ()
    %41 = vector.shape_cast %40 : vector<8x2x8xf32> to vector<8x16xf32>
    %42 = arith.truncf %41 : vector<8x16xf32> to vector<8x16xbf16>
    %c0_20 = arith.constant 0 : index
    %c0_21 = arith.constant 0 : index
    %43 = vector.load %arg17[%c0_20, %c0_21] : memref<8x32xbf16, #tpu.memory_space<vmem>>, vector<8x16xbf16>
    tpu.vector_store %arg17[%c0_20, %c0_21], %42 {strides = array<i32>} : memref<8x32xbf16, #tpu.memory_space<vmem>>, vector<8x16xbf16>,
    %44 = vector.extract_strided_slice %11 {offsets = [0, 16], sizes = [8, 16], strides = [1, 1]} : vector<8x32xbf16> to vector<8x16xbf16>
    %45 = vector.shape_cast %44 : vector<8x16xbf16> to vector<8x2x8xbf16>
    %c0_22 = arith.constant 0 : index
    %c16 = arith.constant 16 : index
    %46 = vector.load %arg15[%c0_22, %c16] : memref<8x32xbf16, #tpu.memory_space<vmem>>, vector<8x16xbf16>
    %47 = vector.shape_cast %46 : vector<8x16xbf16> to vector<8x2x8xbf16>
    %c0_23 = arith.constant 0 : index
    %c16_24 = arith.constant 16 : index
    %48 = vector.load %arg16[%c0_23, %c16_24] : memref<8x32xbf16, #tpu.memory_space<vmem>>, vector<8x16xbf16>
    %49 = vector.shape_cast %48 : vector<8x16xbf16> to vector<8x2x8xbf16>
    "tpu.trace_start"() <{level = 10 : i32, message = "qgd,kgd->gqk"}> : () -> ()
    %cst_25 = arith.constant dense<0.000000e+00> : vector<2x8x8xf32>
    %50 = tpu.matmul %45, %47, %cst_25 {dimension_numbers = #tpu.dot_dimension_numbers<[2], [2], [0], [0], [0, 1, 0, 0, 1, 0], [1], [1]>} : vector<8x2x8xbf16>, vector<8x2x8xbf16>, vector<2x8x8xf32> -> vector<2x8x8xf32>
    "tpu.trace_stop"() : () -> ()
    %c0_26 = arith.constant 0 : index
    %c2 = arith.constant 2 : index
    %c0_27 = arith.constant 0 : index
    %c0_28 = arith.constant 0 : index
    %51 = vector.load %arg4[%c0_26, %c2, %c0_27, %c0_28] : memref<1x4x8x8xbf16, #tpu.memory_space<vmem>>, vector<1x2x8x8xbf16>
    %52 = vector.shape_cast %51 : vector<1x2x8x8xbf16> to vector<2x8x8xbf16>
    %53 = arith.extf %52 : vector<2x8x8xbf16> to vector<2x8x8xf32>
    %54 = arith.addf %50, %53 : vector<2x8x8xf32>
    %55 = vector.shape_cast %13 : vector<1x8xf32> to vector<1x1x8xf32>
    %56 = vector.broadcast %55 : vector<1x1x8xf32> to vector<2x8x8xf32>
    %57 = arith.addf %54, %56 : vector<2x8x8xf32>
    %cst_29 = arith.constant dense<0xFF800000> : vector<2x8xf32>
    %58 = vector.multi_reduction <maximumf>, %57, %cst_29 [2] : vector<2x8x8xf32> to vector<2x8xf32>
    %59 = vector.shape_cast %58 : vector<2x8xf32> to vector<2x8x1xf32>
    %60 = vector.broadcast %59 : vector<2x8x1xf32> to vector<2x8x8xf32>
    %61 = arith.subf %57, %60 : vector<2x8x8xf32>
    %62 = math.exp %61 : vector<2x8x8xf32>
    %cst_30 = arith.constant dense<0.000000e+00> : vector<2x8xf32>
    %63 = vector.multi_reduction <add>, %62, %cst_30 [2] : vector<2x8x8xf32> to vector<2x8xf32>
    %64 = vector.shape_cast %63 : vector<2x8xf32> to vector<2x8x1xf32>
    %65 = tpu.reciprocal %64 {approx = true} : vector<2x8x1xf32> -> vector<2x8x1xf32>
    %66 = vector.broadcast %65 : vector<2x8x1xf32> to vector<2x8x8xf32>
    %67 = arith.mulf %62, %66 : vector<2x8x8xf32>
    %68 = arith.truncf %67 : vector<2x8x8xf32> to vector<2x8x8xbf16>
    "tpu.trace_start"() <{level = 10 : i32, message = "gqk,kgd->qgd"}> : () -> ()
    %cst_31 = arith.constant dense<0.000000e+00> : vector<2x8x8xf32>
    %69 = tpu.matmul %49, %68, %cst_31 {dimension_numbers = #tpu.dot_dimension_numbers<[0], [2], [2], [1], [0, 1, 0, 2, 1, 1], [1], [0]>} : vector<8x2x8xbf16>, vector<2x8x8xbf16>, vector<2x8x8xf32> -> vector<2x8x8xf32>
    %70 = tpu.transpose %69, [2, 0, 1] : vector<2x8x8xf32> -> vector<8x2x8xf32>
    "tpu.trace_stop"() : () -> ()
    %71 = vector.shape_cast %70 : vector<8x2x8xf32> to vector<8x16xf32>
    %72 = arith.truncf %71 : vector<8x16xf32> to vector<8x16xbf16>
    %c0_32 = arith.constant 0 : index
    %c16_33 = arith.constant 16 : index
    %73 = vector.load %arg17[%c0_32, %c16_33] : memref<8x32xbf16, #tpu.memory_space<vmem>>, vector<8x16xbf16>
    tpu.vector_store %arg17[%c0_32, %c16_33], %72 {strides = array<i32>} : memref<8x32xbf16, #tpu.memory_space<vmem>>, vector<8x16xbf16>,
    %c0_34 = arith.constant 0 : index
    %c0_35 = arith.constant 0 : index
    %74 = vector.load %arg17[%c0_34, %c0_35] : memref<8x32xbf16, #tpu.memory_space<vmem>>, vector<8x32xbf16>
    %c0_36 = arith.constant 0 : index
    %c0_37 = arith.constant 0 : index
    %75 = vector.load %arg9[%c0_36, %c0_37] : memref<32x32xbf16, #tpu.memory_space<vmem>>, vector<32x32xbf16>
    %cst_38 = arith.constant dense<0.000000e+00> : vector<8x32xf32>
    %76 = tpu.matmul %74, %75, %cst_38 {dimension_numbers = #tpu.dot_dimension_numbers<[1], [0], [0], [1], [0, 0, 1, 1], [], []>} : vector<8x32xbf16>, vector<32x32xbf16>, vector<8x32xf32> -> vector<8x32xf32>
    %77 = arith.addf %9, %76 : vector<8x32xf32>
    %c0_39 = arith.constant 0 : index
    %c0_40 = arith.constant 0 : index
    %78 = vector.load %arg10[%c0_39, %c0_40] : memref<1x32xf32, #tpu.memory_space<vmem>>, vector<1x32xf32>
    %79 = vector.shape_cast %78 : vector<1x32xf32> to vector<32xf32>
    %80 = arith.mulf %77, %77 : vector<8x32xf32>
    %cst_41 = arith.constant dense<0.000000e+00> : vector<8xf32>
    %81 = vector.multi_reduction <add>, %80, %cst_41 [1] : vector<8x32xf32> to vector<8xf32>
    %82 = vector.shape_cast %81 : vector<8xf32> to vector<8x1xf32>
    %cst_42 = arith.constant 3.200000e+01 : f32
    %83 = vector.broadcast %cst_42 : f32 to vector<8x1xf32>
    %84 = arith.divf %82, %83 : vector<8x1xf32>
    %cst_43 = arith.constant 9.99999997E-7 : f32
    %85 = vector.broadcast %cst_43 : f32 to vector<8x1xf32>
    %86 = arith.addf %84, %85 : vector<8x1xf32>
    %87 = math.rsqrt %86 : vector<8x1xf32>
    %88 = vector.broadcast %87 : vector<8x1xf32> to vector<8x32xf32>
    %89 = arith.mulf %77, %88 : vector<8x32xf32>
    %90 = vector.shape_cast %79 : vector<32xf32> to vector<1x32xf32>
    %91 = vector.broadcast %90 : vector<1x32xf32> to vector<8x32xf32>
    %92 = arith.mulf %89, %91 : vector<8x32xf32>
    %93 = arith.truncf %92 : vector<8x32xf32> to vector<8x32xbf16>
    %c0_44 = arith.constant 0 : index
    %c0_45 = arith.constant 0 : index
    %94 = vector.load %arg11[%c0_44, %c0_45] : memref<32x64xbf16, #tpu.memory_space<vmem>>, vector<32x64xbf16>
    %cst_46 = arith.constant dense<0.000000e+00> : vector<8x64xf32>
    %95 = tpu.matmul %93, %94, %cst_46 {dimension_numbers = #tpu.dot_dimension_numbers<[1], [0], [0], [1], [0, 0, 1, 1], [], []>} : vector<8x32xbf16>, vector<32x64xbf16>, vector<8x64xf32> -> vector<8x64xf32>
    %cst_47 = arith.constant 0.000000e+00 : f32
    %96 = vector.broadcast %cst_47 : f32 to vector<8x64xf32>
    %97 = arith.maximumf %95, %96 : vector<8x64xf32>
    %98 = arith.truncf %97 : vector<8x64xf32> to vector<8x64xbf16>
    %c0_48 = arith.constant 0 : index
    %c0_49 = arith.constant 0 : index
    %99 = vector.load %arg12[%c0_48, %c0_49] : memref<64x32xbf16, #tpu.memory_space<vmem>>, vector<64x32xbf16>
    %cst_50 = arith.constant dense<0.000000e+00> : vector<8x32xf32>
    %100 = tpu.matmul %98, %99, %cst_50 {dimension_numbers = #tpu.dot_dimension_numbers<[1], [0], [0], [1], [0, 0, 1, 1], [], []>} : vector<8x64xbf16>, vector<64x32xbf16>, vector<8x32xf32> -> vector<8x32xf32>
    %101 = arith.addf %77, %100 : vector<8x32xf32>
    %c0_51 = arith.constant 0 : index
    %c0_52 = arith.constant 0 : index
    %c0_53 = arith.constant 0 : index
    %102 = vector.load %arg13[%c0_51, %c0_52, %c0_53] : memref<1x8x32xf32, #tpu.memory_space<vmem>>, vector<1x8x32xf32>
    %103 = vector.shape_cast %102 : vector<1x8x32xf32> to vector<8x32xf32>
    %104 = vector.shape_cast %101 : vector<8x32xf32> to vector<1x8x32xf32>
    tpu.vector_store %arg13[%c0_51, %c0_52, %c0_53], %104 {strides = array<i32>} : memref<1x8x32xf32, #tpu.memory_space<vmem>>, vector<1x8x32xf32>,
    return
  }
  func.func @transform_0(%arg0: i32, %arg1: i32) -> (i32, i32, i32) {
    %c0_i32 = arith.constant 0 : i32
    %c0_i32_0 = arith.constant 0 : i32
    %c0_i32_1 = arith.constant 0 : i32
    return %arg0, %c0_i32, %c0_i32_0 : i32, i32, i32
  }
  func.func @transform_1(%arg0: i32, %arg1: i32) -> (i32, i32, i32, i32) {
    %c0_i32 = arith.constant 0 : i32
    %c0_i32_0 = arith.constant 0 : i32
    %c0_i32_1 = arith.constant 0 : i32
    %c0_i32_2 = arith.constant 0 : i32
    return %arg0, %c0_i32, %c0_i32_0, %c0_i32_1 : i32, i32, i32, i32
  }
  func.func @transform_2(%arg0: i32, %arg1: i32) -> (i32, i32, i32, i32) {
    %c0_i32 = arith.constant 0 : i32
    %c0_i32_0 = arith.constant 0 : i32
    %c0_i32_1 = arith.constant 0 : i32
    %c0_i32_2 = arith.constant 0 : i32
    return %c0_i32, %c0_i32_0, %arg1, %c0_i32_1 : i32, i32, i32, i32
  }
  func.func @transform_3(%arg0: i32, %arg1: i32) -> (i32, i32) {
    %c0_i32 = arith.constant 0 : i32
    %c0_i32_0 = arith.constant 0 : i32
    %c0_i32_1 = arith.constant 0 : i32
    return %c0_i32, %c0_i32_0 : i32, i32
  }
  func.func @transform_4(%arg0: i32, %arg1: i32) -> (i32, i32) {
    %c0_i32 = arith.constant 0 : i32
    %c0_i32_0 = arith.constant 0 : i32
    %c0_i32_1 = arith.constant 0 : i32
    return %c0_i32, %c0_i32_0 : i32, i32
  }
  func.func @transform_5(%arg0: i32, %arg1: i32) -> (i32, i32) {
    %c0_i32 = arith.constant 0 : i32
    %c0_i32_0 = arith.constant 0 : i32
    %c0_i32_1 = arith.constant 0 : i32
    return %c0_i32, %c0_i32_0 : i32, i32
  }
  func.func @transform_6(%arg0: i32, %arg1: i32) -> (i32, i32) {
    %c0_i32 = arith.constant 0 : i32
    %c0_i32_0 = arith.constant 0 : i32
    %c0_i32_1 = arith.constant 0 : i32
    return %c0_i32, %c0_i32_0 : i32, i32
  }
  func.func @transform_7(%arg0: i32, %arg1: i32) -> (i32, i32) {
    %c0_i32 = arith.constant 0 : i32
    %c0_i32_0 = arith.constant 0 : i32
    %c0_i32_1 = arith.constant 0 : i32
    return %c0_i32, %c0_i32_0 : i32, i32
  }
  func.func @transform_8(%arg0: i32, %arg1: i32) -> (i32, i32) {
    %c0_i32 = arith.constant 0 : i32
    %c0_i32_0 = arith.constant 0 : i32
    %c0_i32_1 = arith.constant 0 : i32
    return %c0_i32, %c0_i32_0 : i32, i32
  }
  func.func @transform_9(%arg0: i32, %arg1: i32) -> (i32, i32) {
    %c0_i32 = arith.constant 0 : i32
    %c0_i32_0 = arith.constant 0 : i32
    %c0_i32_1 = arith.constant 0 : i32
    return %c0_i32, %c0_i32_0 : i32, i32
  }
  func.func @transform_10(%arg0: i32, %arg1: i32) -> (i32, i32) {
    %c0_i32 = arith.constant 0 : i32
    %c0_i32_0 = arith.constant 0 : i32
    %c0_i32_1 = arith.constant 0 : i32
    return %c0_i32, %c0_i32_0 : i32, i32
  }
  func.func @transform_11(%arg0: i32, %arg1: i32) -> (i32, i32, i32) {
    %c0_i32 = arith.constant 0 : i32
    %c0_i32_0 = arith.constant 0 : i32
    return %arg0, %arg1, %c0_i32 : i32, i32, i32
  }
}

</mosaic_0001>

<llo_original>
// kernel: tpu_custom_call.1
$region0: #{tpu_custom_call.1}
  #allocation0 [shape = 'u32[]', space=smem, size = 0x4, offset = 0x4, fixed_abs, tag = 'smem constant byte address 0x4 - core index']
  #allocation1 [shape = 'u32[72,128]{1,0:T(1,128)}', space=vmem, size = 0x9000, scoped, tag = 'internal scratch']
  #allocation2 [shape = 'bf16[8,32]{1,0:T(8,128)(2,1)}', space=vmem, size = 0x800, scoped, tag = 'scratch operand']
  #allocation3 [shape = 'bf16[8,32]{1,0:T(8,128)(2,1)}', space=vmem, size = 0x800, scoped, tag = 'scratch operand']
  #allocation4 [shape = 'bf16[8,32]{1,0:T(8,128)(2,1)}', space=vmem, size = 0x800, scoped, tag = 'scratch operand']
  #allocation5 [shape = 'bf16[8,32]{1,0:T(8,128)(2,1)}', space=vmem, size = 0x800, scoped, tag = 'scratch operand']
  %s0 = inlined_call_operand.vmem [shape: f32[2,8,32], index: 0, kind: input, shape index: {}]
  %s1 = inlined_call_operand.hbm [shape: f32[2,1,1,8], index: 1, kind: input, shape index: {}]
  %s2 = inlined_call_operand.vmem [shape: bf16[1,4,8,8], index: 2, kind: input, shape index: {}]
  %s3 = inlined_call_operand.vmem [shape: f32[1,32], index: 3, kind: input, shape index: {}]
  %s4 = inlined_call_operand.vmem [shape: bf16[32,32], index: 4, kind: input, shape index: {}]
  %s5 = inlined_call_operand.hbm [shape: bf16[32,32], index: 5, kind: input, shape index: {}]
  %s6 = inlined_call_operand.hbm [shape: bf16[32,32], index: 6, kind: input, shape index: {}]
  %s7 = inlined_call_operand.hbm [shape: bf16[32,32], index: 7, kind: input, shape index: {}]
  %s8 = inlined_call_operand.vmem [shape: f32[1,32], index: 8, kind: input, shape index: {}]
  %s9 = inlined_call_operand.hbm [shape: bf16[32,64], index: 9, kind: input, shape index: {}]
  %s10 = inlined_call_operand.vmem [shape: bf16[64,32], index: 10, kind: input, shape index: {}]
  %s11 = inlined_call_operand.hbm [shape: f32[2,8,32], index: 11, kind: output, shape index: {}]
  %s12 = sld [smem:[#allocation0]]
  $region101: #{tpu_custom_call.1} parent=0
    _
  %s14 = ssub.s32 1, %s12
  %s15 = scalar_select 0, %s14, %s12
  $region1: #{tpu_custom_call.1} parent=0
    #allocation6 [shape = 'u8[1024]{0}', space=vmem, size = 0x400, scoped, tag = 'input window, operand 1']
    #allocation7 [shape = 's32[2]{0}', space=sflag, size = 0x8, scoped, tag = 'scoped memory for tpu_custom_call.1']
    #allocation8 [shape = 's32[2]{0}', space=sflag, size = 0x8, scoped, tag = 'scoped memory for tpu_custom_call.1']
    #allocation9 [shape = 'u8[8192]{0}', space=vmem, size = 0x2000, scoped, tag = 'input window, operand 5, single buffered']
    #allocation10 [shape = 's32[1]{0}', space=sflag, size = 0x4, scoped, tag = 'scoped memory for tpu_custom_call.1']
    #allocation11 [shape = 'u8[8192]{0}', space=vmem, size = 0x2000, scoped, tag = 'input window, operand 6, single buffered']
    #allocation12 [shape = 'u8[8192]{0}', space=vmem, size = 0x2000, scoped, tag = 'input window, operand 7, single buffered']
    #allocation13 [shape = 's32[1]{0}', space=sflag, size = 0x4, scoped, tag = 'scoped memory for tpu_custom_call.1']
    #allocation14 [shape = 'u8[8192]{0}', space=vmem, size = 0x2000, scoped, tag = 'input window, operand 9, single buffered']
    #allocation15 [shape = 'u8[8192]{0}', space=vmem, size = 0x2000, scoped, tag = 'output window, operand 0']
    %16 = vsyncpa [#allocation7], 0
    %s17 = scalar_lea.sflag [#allocation7], 1
    %18 = vsyncpa %s17, 0
    %19 = vsyncpa [#allocation10], 0
    %20 = vsyncpa [#allocation13], 0
    %21 = vsyncpa [#allocation8], 0
    %s22 = scalar_lea.sflag [#allocation8], 1
    %23 = vsyncpa %s22, 0
    loop: start=0, step=1, limit=4
    $region2: #{tpu_custom_call.1} parent=1 // loop_pre_header
      _
    $region3: #{tpu_custom_call.1} parent=1 // loop_header
      %s25 = sphi 0, %s29
      %p26 = scmp.ge.s32.totalorder %s25, 4
      %s32 = sphi 0, %s44
      %s33 = sphi 0, %s40
      %s34 = sphi 0, %s32
      %s35 = sphi 0, %s33
      %s36 = sphi 0, %s34
      %s37 = sphi 0, %s35
      %s47 = sphi 0, %s49
      %s50 = sphi 0, %s47
      %s51 = sphi 0, %s50
      %s67 = sphi 0, %s51
      %s73 = sphi 0, %s75
      %s76 = sphi 0, %s73
      %s77 = sphi 0, %s76
      %s93 = sphi 0, %s77
      %s99 = sphi 0, %s101
      %s102 = sphi 0, %s99
      %s103 = sphi 0, %s102
      %s119 = sphi 0, %s103
      %s123 = sphi 0, %s123
      %s125 = sphi 0, %s123
      %s126 = sphi 0, %s125
      %s140 = sphi 0, %s126
      %s144 = sphi 0, %s144
      %s146 = sphi 0, %s144
      %s147 = sphi 0, %s146
      %s161 = sphi 0, %s147
      %s165 = sphi 0, %s165
      %s167 = sphi 0, %s165
      %s168 = sphi 0, %s167
      %s182 = sphi 0, %s168
      %s186 = sphi 0, %s186
      %s188 = sphi 0, %s186
      %s189 = sphi 0, %s188
      %s203 = sphi 0, %s189
      %s207 = sphi 0, %s207
      %s209 = sphi 0, %s207
      %s210 = sphi 0, %s209
      %s224 = sphi 0, %s210
      %s228 = sphi 0, %s228
      %s230 = sphi 0, %s228
      %s231 = sphi 0, %s230
      %s245 = sphi 0, %s231
      %s249 = sphi 0, %s249
      %s251 = sphi 0, %s249
      %s252 = sphi 0, %s251
      %s266 = sphi 0, %s252
      %s270 = sphi 0, %s270
      %s272 = sphi 0, %s270
      %s273 = sphi 0, %s272
      %s287 = sphi 0, %s273
      %s295 = sphi 0, %s297
      %s298 = sphi 0, %s295
      %s299 = sphi 0, %s298
      %s315 = sphi 0, %s299
    $region4: #{tpu_custom_call.1} parent=1 // loop_header_branch
      %28 = sbr.rel (%p26) target = $region8
    $region5: #{tpu_custom_call.1} parent=1 // loop_body
      %s30 = ssub.s32 %s25, 1
      %s31 = ssub.s32 %s25, 2
      %s38 = sadd.s32 1, %s33
      %p39 = scmp.ge.s32.totalorder %s38, 1
      %s40 = scalar_select %p39, 0, %s38
      %s41 = sadd.s32 1, %s32
      %s42 = scalar_select %p39, %s41, %s32
      %p43 = scmp.ge.s32.totalorder %s42, 2
      %s44 = scalar_select %p43, 0, %s42
      %s45 = ssub.s32 %s32, %s44
      %p46 = scmp.eq.s32.totalorder %s45, 0
      %s48 = sadd.s32 %s47, 1
      %s49 = scalar_select %p46, %s47, %s48
      %p52 = pneg %p46
      %p53 = scmp.eq.s32.totalorder %s25, 1
      %p54 = por %p52, %p53
      %p55 = scmp.ne.s32.totalorder %s47, %s50
      %p56 = scmp.eq.s32.totalorder %s25, 0
      %p57 = por %p55, %p56
      %p58 = scmp.ne.s32.totalorder %s47, %s50
      %p59 = scmp.eq.s32.totalorder %s30, 1
      %p60 = por %p58, %p59
      %p61 = scmp.ne.s32.totalorder %s50, %s51
      %p62 = scmp.eq.s32.totalorder %s30, 0
      %p63 = por %p61, %p62
      %p64 = scmp.ne.s32.totalorder %s50, %s51
      %p65 = scmp.eq.s32.totalorder %s31, 1
      %p66 = por %p64, %p65
      %p68 = scmp.ne.s32.totalorder %s51, %s67
      %p69 = scmp.eq.s32.totalorder %s31, 0
      %p70 = por %p68, %p69
      %s71 = ssub.s32 %s32, %s44
      %p72 = scmp.eq.s32.totalorder %s71, 0
      %s74 = sadd.s32 %s73, 1
      %s75 = scalar_select %p72, %s73, %s74
      %p78 = pneg %p72
      %p79 = scmp.eq.s32.totalorder %s25, 1
      %p80 = por %p78, %p79
      %p81 = scmp.ne.s32.totalorder %s73, %s76
      %p82 = scmp.eq.s32.totalorder %s25, 0
      %p83 = por %p81, %p82
      %p84 = scmp.ne.s32.totalorder %s73, %s76
      %p85 = scmp.eq.s32.totalorder %s30, 1
      %p86 = por %p84, %p85
      %p87 = scmp.ne.s32.totalorder %s76, %s77
      %p88 = scmp.eq.s32.totalorder %s30, 0
      %p89 = por %p87, %p88
      %p90 = scmp.ne.s32.totalorder %s76, %s77
      %p91 = scmp.eq.s32.totalorder %s31, 1
      %p92 = por %p90, %p91
      %p94 = scmp.ne.s32.totalorder %s77, %s93
      %p95 = scmp.eq.s32.totalorder %s31, 0
      %p96 = por %p94, %p95
      %s97 = ssub.s32 %s33, %s40
      %p98 = scmp.eq.s32.totalorder %s97, 0
      %s100 = sadd.s32 %s99, 1
      %s101 = scalar_select %p98, %s99, %s100
      %p104 = pneg %p98
      %p105 = scmp.eq.s32.totalorder %s25, 1
      %p106 = por %p104, %p105
      %p107 = scmp.ne.s32.totalorder %s99, %s102
      %p108 = scmp.eq.s32.totalorder %s25, 0
      %p109 = por %p107, %p108
      %p110 = scmp.ne.s32.totalorder %s99, %s102
      %p111 = scmp.eq.s32.totalorder %s30, 1
      %p112 = por %p110, %p111
      %p113 = scmp.ne.s32.totalorder %s102, %s103
      %p114 = scmp.eq.s32.totalorder %s30, 0
      %p115 = por %p113, %p114
      %p116 = scmp.ne.s32.totalorder %s102, %s103
      %p117 = scmp.eq.s32.totalorder %s31, 1
      %p118 = por %p116, %p117
      %p120 = scmp.ne.s32.totalorder %s103, %s119
      %p121 = scmp.eq.s32.totalorder %s31, 0
      %p122 = por %p120, %p121
      %s124 = sadd.s32 %s123, 1
      %p127 = scmp.eq.s32.totalorder %s25, 1
      %p128 = scmp.ne.s32.totalorder %s123, %s125
      %p129 = scmp.eq.s32.totalorder %s25, 0
      %p130 = por %p128, %p129
      %p131 = scmp.ne.s32.totalorder %s123, %s125
      %p132 = scmp.eq.s32.totalorder %s30, 1
      %p133 = por %p131, %p132
      %p134 = scmp.ne.s32.totalorder %s125, %s126
      %p135 = scmp.eq.s32.totalorder %s30, 0
      %p136 = por %p134, %p135
      %p137 = scmp.ne.s32.totalorder %s125, %s126
      %p138 = scmp.eq.s32.totalorder %s31, 1
      %p139 = por %p137, %p138
      %p141 = scmp.ne.s32.totalorder %s126, %s140
      %p142 = scmp.eq.s32.totalorder %s31, 0
      %p143 = por %p141, %p142
      %s145 = sadd.s32 %s144, 1
      %p148 = scmp.eq.s32.totalorder %s25, 1
      %p149 = scmp.ne.s32.totalorder %s144, %s146
      %p150 = scmp.eq.s32.totalorder %s25, 0
      %p151 = por %p149, %p150
      %p152 = scmp.ne.s32.totalorder %s144, %s146
      %p153 = scmp.eq.s32.totalorder %s30, 1
      %p154 = por %p152, %p153
      %p155 = scmp.ne.s32.totalorder %s146, %s147
      %p156 = scmp.eq.s32.totalorder %s30, 0
      %p157 = por %p155, %p156
      %p158 = scmp.ne.s32.totalorder %s146, %s147
      %p159 = scmp.eq.s32.totalorder %s31, 1
      %p160 = por %p158, %p159
      %p162 = scmp.ne.s32.totalorder %s147, %s161
      %p163 = scmp.eq.s32.totalorder %s31, 0
      %p164 = por %p162, %p163
      %s166 = sadd.s32 %s165, 1
      %p169 = scmp.eq.s32.totalorder %s25, 1
      %p170 = scmp.ne.s32.totalorder %s165, %s167
      %p171 = scmp.eq.s32.totalorder %s25, 0
      %p172 = por %p170, %p171
      %p173 = scmp.ne.s32.totalorder %s165, %s167
      %p174 = scmp.eq.s32.totalorder %s30, 1
      %p175 = por %p173, %p174
      %p176 = scmp.ne.s32.totalorder %s167, %s168
      %p177 = scmp.eq.s32.totalorder %s30, 0
      %p178 = por %p176, %p177
      %p179 = scmp.ne.s32.totalorder %s167, %s168
      %p180 = scmp.eq.s32.totalorder %s31, 1
      %p181 = por %p179, %p180
      %p183 = scmp.ne.s32.totalorder %s168, %s182
      %p184 = scmp.eq.s32.totalorder %s31, 0
      %p185 = por %p183, %p184
      %s187 = sadd.s32 %s186, 1
      %p190 = scmp.eq.s32.totalorder %s25, 1
      %p191 = scmp.ne.s32.totalorder %s186, %s188
      %p192 = scmp.eq.s32.totalorder %s25, 0
      %p193 = por %p191, %p192
      %p194 = scmp.ne.s32.totalorder %s186, %s188
      %p195 = scmp.eq.s32.totalorder %s30, 1
      %p196 = por %p194, %p195
      %p197 = scmp.ne.s32.totalorder %s188, %s189
      %p198 = scmp.eq.s32.totalorder %s30, 0
      %p199 = por %p197, %p198
      %p200 = scmp.ne.s32.totalorder %s188, %s189
      %p201 = scmp.eq.s32.totalorder %s31, 1
      %p202 = por %p200, %p201
      %p204 = scmp.ne.s32.totalorder %s189, %s203
      %p205 = scmp.eq.s32.totalorder %s31, 0
      %p206 = por %p204, %p205
      %s208 = sadd.s32 %s207, 1
      %p211 = scmp.eq.s32.totalorder %s25, 1
      %p212 = scmp.ne.s32.totalorder %s207, %s209
      %p213 = scmp.eq.s32.totalorder %s25, 0
      %p214 = por %p212, %p213
      %p215 = scmp.ne.s32.totalorder %s207, %s209
      %p216 = scmp.eq.s32.totalorder %s30, 1
      %p217 = por %p215, %p216
      %p218 = scmp.ne.s32.totalorder %s209, %s210
      %p219 = scmp.eq.s32.totalorder %s30, 0
      %p220 = por %p218, %p219
      %p221 = scmp.ne.s32.totalorder %s209, %s210
      %p222 = scmp.eq.s32.totalorder %s31, 1
      %p223 = por %p221, %p222
      %p225 = scmp.ne.s32.totalorder %s210, %s224
      %p226 = scmp.eq.s32.totalorder %s31, 0
      %p227 = por %p225, %p226
      %s229 = sadd.s32 %s228, 1
      %p232 = scmp.eq.s32.totalorder %s25, 1
      %p233 = scmp.ne.s32.totalorder %s228, %s230
      %p234 = scmp.eq.s32.totalorder %s25, 0
      %p235 = por %p233, %p234
      %p236 = scmp.ne.s32.totalorder %s228, %s230
      %p237 = scmp.eq.s32.totalorder %s30, 1
      %p238 = por %p236, %p237
      %p239 = scmp.ne.s32.totalorder %s230, %s231
      %p240 = scmp.eq.s32.totalorder %s30, 0
      %p241 = por %p239, %p240
      %p242 = scmp.ne.s32.totalorder %s230, %s231
      %p243 = scmp.eq.s32.totalorder %s31, 1
      %p244 = por %p242, %p243
      %p246 = scmp.ne.s32.totalorder %s231, %s245
      %p247 = scmp.eq.s32.totalorder %s31, 0
      %p248 = por %p246, %p247
      %s250 = sadd.s32 %s249, 1
      %p253 = scmp.eq.s32.totalorder %s25, 1
      %p254 = scmp.ne.s32.totalorder %s249, %s251
      %p255 = scmp.eq.s32.totalorder %s25, 0
      %p256 = por %p254, %p255
      %p257 = scmp.ne.s32.totalorder %s249, %s251
      %p258 = scmp.eq.s32.totalorder %s30, 1
      %p259 = por %p257, %p258
      %p260 = scmp.ne.s32.totalorder %s251, %s252
      %p261 = scmp.eq.s32.totalorder %s30, 0
      %p262 = por %p260, %p261
      %p263 = scmp.ne.s32.totalorder %s251, %s252
      %p264 = scmp.eq.s32.totalorder %s31, 1
      %p265 = por %p263, %p264
      %p267 = scmp.ne.s32.totalorder %s252, %s266
      %p268 = scmp.eq.s32.totalorder %s31, 0
      %p269 = por %p267, %p268
      %s271 = sadd.s32 %s270, 1
      %p274 = scmp.eq.s32.totalorder %s25, 1
      %p275 = scmp.ne.s32.totalorder %s270, %s272
      %p276 = scmp.eq.s32.totalorder %s25, 0
      %p277 = por %p275, %p276
      %p278 = scmp.ne.s32.totalorder %s270, %s272
      %p279 = scmp.eq.s32.totalorder %s30, 1
      %p280 = por %p278, %p279
      %p281 = scmp.ne.s32.totalorder %s272, %s273
      %p282 = scmp.eq.s32.totalorder %s30, 0
      %p283 = por %p281, %p282
      %p284 = scmp.ne.s32.totalorder %s272, %s273
      %p285 = scmp.eq.s32.totalorder %s31, 1
      %p286 = por %p284, %p285
      %p288 = scmp.ne.s32.totalorder %s273, %s287
      %p289 = scmp.eq.s32.totalorder %s31, 0
      %p290 = por %p288, %p289
      %s291 = ssub.s32 %s32, %s44
      %s292 = ssub.s32 %s33, %s40
      %s293 = sor.u32 %s291, %s292
      %p294 = scmp.eq.s32.totalorder %s293, 0
      %s296 = sadd.s32 %s295, 1
      %s297 = scalar_select %p294, %s295, %s296
      %p300 = pneg %p294
      %p301 = scmp.eq.s32.totalorder %s25, 1
      %p302 = por %p300, %p301
      %p303 = scmp.ne.s32.totalorder %s295, %s298
      %p304 = scmp.eq.s32.totalorder %s25, 0
      %p305 = por %p303, %p304
      %p306 = scmp.ne.s32.totalorder %s295, %s298
      %p307 = scmp.eq.s32.totalorder %s30, 1
      %p308 = por %p306, %p307
      %p309 = scmp.ne.s32.totalorder %s298, %s299
      %p310 = scmp.eq.s32.totalorder %s30, 0
      %p311 = por %p309, %p310
      %p312 = scmp.ne.s32.totalorder %s298, %s299
      %p313 = scmp.eq.s32.totalorder %s31, 1
      %p314 = por %p312, %p313
      %p316 = scmp.ne.s32.totalorder %s299, %s315
      %p317 = scmp.eq.s32.totalorder %s31, 0
      %p318 = por %p316, %p317
      %p319 = scmp.le.s32.totalorder 1, %s25
      %p320 = scmp.lt.s32.totalorder %s25, 3
      %p321 = pnand %p319, %p320
      %p322 = pneg %p321
      // Predicated region
      $region9: #{tpu_custom_call.1} parent=5 // pred_check
        _
      $region10: #{tpu_custom_call.1} parent=5 // pred_check_branch
        %324 = sbr.rel (%p321) target = $region12
      $region11: #{tpu_custom_call.1} parent=5 // pred_region
        %s325 = ssub.s32 %s25, 1
        // Predicated region
        $region13: #{tpu_custom_call.1} parent=11 // pred_check
          %p326 = pneg %p115
        $region14: #{tpu_custom_call.1} parent=11 // pred_check_branch
          %328 = sbr.rel (%p326) target = $region16
        $region15: #{tpu_custom_call.1} parent=11 // pred_region
          %p329 = scmp.lt.s32.totalorder %s35, 0
          %s330 = scalar_select %p329, %s35, 0
          %s331 = smul.addr %s330, 4
          %s332 = scalar_lea.vmem %s2, %s331
        $region16: #{tpu_custom_call.1} parent=11 // pred_fallthru
          _
        // Predicated region
        $region17: #{tpu_custom_call.1} parent=11 // pred_check
          %p333 = pneg %p136
        $region18: #{tpu_custom_call.1} parent=11 // pred_check_branch
          %335 = sbr.rel (%p333) target = $region20
        $region19: #{tpu_custom_call.1} parent=11 // pred_region
          _
        $region20: #{tpu_custom_call.1} parent=11 // pred_fallthru
          _
        // Predicated region
        $region21: #{tpu_custom_call.1} parent=11 // pred_check
          %p336 = pneg %p157
        $region22: #{tpu_custom_call.1} parent=11 // pred_check_branch
          %338 = sbr.rel (%p336) target = $region24
        $region23: #{tpu_custom_call.1} parent=11 // pred_region
          _
        $region24: #{tpu_custom_call.1} parent=11 // pred_fallthru
          _
        // Predicated region
        $region25: #{tpu_custom_call.1} parent=11 // pred_check
          %p339 = pneg %p178
        $region26: #{tpu_custom_call.1} parent=11 // pred_check_branch
          %341 = sbr.rel (%p339) target = $region28
        $region27: #{tpu_custom_call.1} parent=11 // pred_region
          %343 = vsyncadd [#allocation10], 0
          %s344 = sshll.u32 %s5, 4
          %s345 = int_to_ptr.hbm [resolvable:$true] %s344
          %s346 = sshll.u32 [#allocation9], 4
          %s347 = int_to_ptr.vmem [resolvable:$true] %s346
          %352 = dma.hbm_to_vmem [thread:$0]  %s345, 256, %s347, [#allocation10], 64, 64, 4
        $region28: #{tpu_custom_call.1} parent=11 // pred_fallthru
          _
        // Predicated region
        $region29: #{tpu_custom_call.1} parent=11 // pred_check
          %p353 = pneg %p199
        $region30: #{tpu_custom_call.1} parent=11 // pred_check_branch
          %355 = sbr.rel (%p353) target = $region32
        $region31: #{tpu_custom_call.1} parent=11 // pred_region
          %357 = vsyncadd [#allocation10], 0
          %s358 = sshll.u32 %s6, 4
          %s359 = int_to_ptr.hbm [resolvable:$true] %s358
          %s360 = sshll.u32 [#allocation11], 4
          %s361 = int_to_ptr.vmem [resolvable:$true] %s360
          %366 = dma.hbm_to_vmem [thread:$0]  %s359, 256, %s361, [#allocation10], 64, 64, 4
        $region32: #{tpu_custom_call.1} parent=11 // pred_fallthru
          _
        // Predicated region
        $region33: #{tpu_custom_call.1} parent=11 // pred_check
          %p367 = pneg %p220
        $region34: #{tpu_custom_call.1} parent=11 // pred_check_branch
          %369 = sbr.rel (%p367) target = $region36
        $region35: #{tpu_custom_call.1} parent=11 // pred_region
          %371 = vsyncadd [#allocation13], 0
          %s372 = sshll.u32 %s7, 4
          %s373 = int_to_ptr.hbm [resolvable:$true] %s372
          %s374 = sshll.u32 [#allocation12], 4
          %s375 = int_to_ptr.vmem [resolvable:$true] %s374
          %380 = dma.hbm_to_vmem [thread:$0]  %s373, 256, %s375, [#allocation13], 64, 64, 4
        $region36: #{tpu_custom_call.1} parent=11 // pred_fallthru
          _
        // Predicated region
        $region37: #{tpu_custom_call.1} parent=11 // pred_check
          %p381 = pneg %p241
        $region38: #{tpu_custom_call.1} parent=11 // pred_check_branch
          %383 = sbr.rel (%p381) target = $region40
        $region39: #{tpu_custom_call.1} parent=11 // pred_region
          _
        $region40: #{tpu_custom_call.1} parent=11 // pred_fallthru
          _
        // Predicated region
        $region41: #{tpu_custom_call.1} parent=11 // pred_check
          %p384 = pneg %p262
        $region42: #{tpu_custom_call.1} parent=11 // pred_check_branch
          %386 = sbr.rel (%p384) target = $region44
        $region43: #{tpu_custom_call.1} parent=11 // pred_region
          %388 = vsyncadd [#allocation13], 0
          %s389 = sshll.u32 %s9, 4
          %s390 = int_to_ptr.hbm [resolvable:$true] %s389
          %s391 = sshll.u32 [#allocation14], 4
          %s392 = int_to_ptr.vmem [resolvable:$true] %s391
          %397 = dma.hbm_to_vmem [thread:$0]  %s390, 256, %s392, [#allocation13], 64, 64, 4
        $region44: #{tpu_custom_call.1} parent=11 // pred_fallthru
          _
        // Predicated region
        $region45: #{tpu_custom_call.1} parent=11 // pred_check
          %p398 = pneg %p283
        $region46: #{tpu_custom_call.1} parent=11 // pred_check_branch
          %400 = sbr.rel (%p398) target = $region48
        $region47: #{tpu_custom_call.1} parent=11 // pred_region
          _
        $region48: #{tpu_custom_call.1} parent=11 // pred_fallthru
          _
      $region12: #{tpu_custom_call.1} parent=5 // pred_fallthru
        _
      %p401 = scmp.lt.s32.totalorder %s25, 2
      // Predicated region
      $region49: #{tpu_custom_call.1} parent=5 // pred_check
        %p402 = pneg %p401
      $region50: #{tpu_custom_call.1} parent=5 // pred_check_branch
        %404 = sbr.rel (%p402) target = $region52
      $region51: #{tpu_custom_call.1} parent=5 // pred_region
        // Predicated region
        $region53: #{tpu_custom_call.1} parent=51 // pred_check
          %p405 = pneg %p57
        $region54: #{tpu_custom_call.1} parent=51 // pred_check_branch
          %407 = sbr.rel (%p405) target = $region56
        $region55: #{tpu_custom_call.1} parent=51 // pred_region
          %p408 = scmp.lt.s32.totalorder %s32, 1
          %s409 = scalar_select %p408, %s32, 1
          %s410 = smul.addr %s409, 8
          %s411 = scalar_lea.vmem %s0, %s410
        $region56: #{tpu_custom_call.1} parent=51 // pred_fallthru
          _
        // Predicated region
        $region57: #{tpu_custom_call.1} parent=51 // pred_check
          %p412 = pneg %p83
        $region58: #{tpu_custom_call.1} parent=51 // pred_check_branch
          %414 = sbr.rel (%p412) target = $region60
        $region59: #{tpu_custom_call.1} parent=51 // pred_region
          %s415 = sand.u32 %s73, 1
          %s416 = scalar_lea.sflag [#allocation7], %s415
          %s417 = sand.u32 %s73, 1
          %s418 = scalar_lea.vmem [#allocation6], %s417
          %420 = vsyncadd %s416, 0
          %s421 = scalar_lea.hbm %s1, %s32
          %s423 = sshll.u32 %s421, 4
          %s424 = int_to_ptr.hbm [resolvable:$true] %s423
          %s425 = sshll.u32 %s418, 4
          %s426 = int_to_ptr.vmem [resolvable:$true] %s425
          %428 = dma.hbm_to_vmem [thread:$0]  %s424, 16, %s426, %s416
        $region60: #{tpu_custom_call.1} parent=51 // pred_fallthru
          _
      $region52: #{tpu_custom_call.1} parent=5 // pred_fallthru
        _
      %p429 = scmp.le.s32.totalorder 1, %s25
      %p430 = scmp.lt.s32.totalorder %s25, 3
      %p431 = pnand %p429, %p430
      %p432 = pneg %p431
      // Predicated region
      $region61: #{tpu_custom_call.1} parent=5 // pred_check
        _
      $region62: #{tpu_custom_call.1} parent=5 // pred_check_branch
        %434 = sbr.rel (%p431) target = $region64
      $region63: #{tpu_custom_call.1} parent=5 // pred_region
        %s435 = ssub.s32 %s25, 1
        %s436 = sand.u32 %s76, 1
        %s437 = scalar_lea.sflag [#allocation7], %s436
        %s438 = sand.u32 %s76, 1
        %s439 = scalar_lea.vmem [#allocation6], %s438
        // Predicated region
        $region65: #{tpu_custom_call.1} parent=63 // pred_check
          %p440 = pneg %p89
        $region66: #{tpu_custom_call.1} parent=63 // pred_check_branch
          %442 = sbr.rel (%p440) target = $region68
        $region67: #{tpu_custom_call.1} parent=63 // pred_region
          %444 = dma.done %s437, 16
        $region68: #{tpu_custom_call.1} parent=63 // pred_fallthru
          _
        // Predicated region
        $region69: #{tpu_custom_call.1} parent=63 // pred_check
          %p445 = pneg %p178
        $region70: #{tpu_custom_call.1} parent=63 // pred_check_branch
          %447 = sbr.rel (%p445) target = $region72
        $region71: #{tpu_custom_call.1} parent=63 // pred_region
          %449 = dma.done [#allocation10], 256
        $region72: #{tpu_custom_call.1} parent=63 // pred_fallthru
          _
        // Predicated region
        $region73: #{tpu_custom_call.1} parent=63 // pred_check
          %p450 = pneg %p199
        $region74: #{tpu_custom_call.1} parent=63 // pred_check_branch
          %452 = sbr.rel (%p450) target = $region76
        $region75: #{tpu_custom_call.1} parent=63 // pred_region
          %454 = dma.done [#allocation10], 256
        $region76: #{tpu_custom_call.1} parent=63 // pred_fallthru
          _
        // Predicated region
        $region77: #{tpu_custom_call.1} parent=63 // pred_check
          %p455 = pneg %p220
        $region78: #{tpu_custom_call.1} parent=63 // pred_check_branch
          %457 = sbr.rel (%p455) target = $region80
        $region79: #{tpu_custom_call.1} parent=63 // pred_region
          %459 = dma.done [#allocation13], 256
        $region80: #{tpu_custom_call.1} parent=63 // pred_fallthru
          _
        // Predicated region
        $region81: #{tpu_custom_call.1} parent=63 // pred_check
          %p460 = pneg %p262
        $region82: #{tpu_custom_call.1} parent=63 // pred_check_branch
          %462 = sbr.rel (%p460) target = $region84
        $region83: #{tpu_custom_call.1} parent=63 // pred_region
          %464 = dma.done [#allocation13], 256
        $region84: #{tpu_custom_call.1} parent=63 // pred_fallthru
          _
        %p465 = scmp.lt.s32.totalorder %s34, 1
        %s466 = scalar_select %p465, %s34, 1
        %s467 = smul.addr %s466, 8
        %s468 = scalar_lea.vmem %s0, %s467
        %p469 = pneg %p63
        %p470 = pneg %p60
        %s471 = sand.u32 %s76, 1
        %s472 = scalar_lea.sflag [#allocation7], %s471
        %s473 = sand.u32 %s76, 1
        %s474 = scalar_lea.vmem [#allocation6], %s473
        %p475 = pneg %p89
        %p476 = pneg %p86
        %p477 = scmp.lt.s32.totalorder %s35, 0
        %s478 = scalar_select %p477, %s35, 0
        %s479 = smul.addr %s478, 4
        %s480 = scalar_lea.vmem %s2, %s479
        %p481 = pneg %p115
        %p482 = pneg %p112
        %p483 = pneg %p136
        %p484 = pneg %p133
        %p485 = pneg %p157
        %p486 = pneg %p154
        %p487 = pneg %p178
        %p488 = pneg %p175
        %p489 = pneg %p199
        %p490 = pneg %p196
        %p491 = pneg %p220
        %p492 = pneg %p217
        %p493 = pneg %p241
        %p494 = pneg %p238
        %p495 = pneg %p262
        %p496 = pneg %p259
        %p497 = pneg %p283
        %p498 = pneg %p280
        %p499 = pneg %p311
        %p500 = pneg %p308
        %s501 = sand.u32 %s298, 1
        %s502 = scalar_lea.sflag [#allocation8], %s501
        %s503 = sand.u32 %s298, 1
        %s504 = smul.addr %s503, 8
        %s505 = scalar_lea.vmem [#allocation15], %s504
        %p506 = scmp.lt.s32.totalorder %s34, 1
        %s507 = scalar_select %p506, %s34, 1
        %s508 = smul.addr %s507, 8
        %s509 = scalar_lea.vmem %s0, %s508
        %p510 = scmp.lt.s32.totalorder %s35, 0
        %s511 = scalar_select %p510, %s35, 0
        %s512 = smul.addr %s511, 4
        %s513 = scalar_lea.vmem %s2, %s512
        %v515 = vld [vmem:[%s3] sm:$0x1]
        %p516 = scmp.eq.s32.totalorder %s35, 0
        // Predicated region
        $region85: #{tpu_custom_call.1} parent=63 // pred_check
          %p517 = pneg %p516
        $region86: #{tpu_custom_call.1} parent=63 // pred_check_branch
          %519 = sbr.rel (%p517) target = $region88
        $region87: #{tpu_custom_call.1} parent=63 // pred_region
          %v520 = vld [vmem:[%s509] sm:$0xff]
          %v521 = vmul.f32 %v520, %v520
          %vm522 = vcmask 261120
          %v523 = vsel %vm522, %v521, 0.0
          %524 = vadd.xlane.f32.xlu0 %v523
          %v525 = vpop.xlane.xlu0 %524
          %v526 = vrcp.pop 32.0
          %v527 = vmul.f32 32.0, %v526
          %v528 = vsub.f32 1.0, %v527
          %v529 = vmul.f32 %v526, %v528
          %v530 = vadd.f32 %v526, %v529
          %vm531 = vweird.f32 %v526
          %v532 = vsel %vm531, %v526, %v530
          %v533 = vmul.f32 %v525, %v532
          %v534 = vadd.f32 %v533, 1e-06
          %v535 = vrsqrt.pop %v534
          %v536 = vmul.f32 %v535, %v534
          %v537 = vmul.f32 %v536, %v535
          %v538 = vmul.f32 0.5, %v537
          %v539 = vsub.f32 1.5, %v538
          %v540 = vmul.f32 %v535, %v539
          %vm541 = vweird.f32 %v534
          %vm542 = vweird.f32 %v535
          %vm543 = vmor %vm541, %vm542
          %v544 = vsel %vm543, %v535, %v540
          %v545 = vmul.f32 %v520, %v544
          %v547 = vperm.slane %v515, 0
          %v549 = vmul.f32 %v545, %v547
          %v550 = vpack.c.bf16 %v549, %v549
          %v551 = vld [vmem:[%s4] sm:$0xf]
          %v552 = vld [vmem:[%s4 + $0x4] sm:$0xf]
          %v553 = vld [vmem:[%s4 + $0x8] sm:$0xf]
          %v554 = vld [vmem:[%s4 + $0xc] sm:$0xf]
          %v559 = vunpack.c.l.b16 %v551
          %v560 = vunpack.c.l.b16 %v552
          %v561 = vunpack.c.l.b16 %v553
          %v562 = vunpack.c.l.b16 %v554
          %v563 = vpack.c.b16 %v560, %v559
          %v564 = vpack.c.b16 %v562, %v561
          %v568 = vsel %vm522, %v550, 0
          %570 = vmatpush.bf16.msra.mxu0 0
          %571 = vmatpush.bf16.msra.mxu0 0
          %572 = vmatpush.bf16.msra.mxu0 0
          %573 = vmatpush.bf16.msra.mxu0 0
          %574 = vmatpush.bf16.msra.mxu0 0
          %575 = vmatpush.bf16.msra.mxu0 0
          %576 = vmatpush.bf16.msra.mxu0 %v564
          %577 = vmatpush.bf16.msra.mxu0 %v563
          %578 = vmatmul.bf16.gmra.mxu0 %v568
          %v579 = vpop.f32.mrf.mxu0
          %v580 = vadd.f32 0.0, %v579
          %v581 = vpop.f32.mrf.mxu0
          %582 = vdwg.mxu0
          %v583 = vpack.c.bf16 %v580, %v580
          %vm584 = vcmask 257024
          %585 = vst.msk [vmem:[#allocation2] sm:$0xf] %vm584, %v583
          %v586 = vld [vmem:[#allocation9] sm:$0xf]
          %v587 = vld [vmem:[#allocation9 + $0x4] sm:$0xf]
          %v588 = vld [vmem:[#allocation9 + $0x8] sm:$0xf]
          %v589 = vld [vmem:[#allocation9 + $0xc] sm:$0xf]
          %v594 = vunpack.c.l.b16 %v586
          %v595 = vunpack.c.l.b16 %v587
          %v596 = vunpack.c.l.b16 %v588
          %v597 = vunpack.c.l.b16 %v589
          %v598 = vpack.c.b16 %v595, %v594
          %v599 = vpack.c.b16 %v597, %v596
          %602 = vmatpush.bf16.msra.mxu0 0
          %603 = vmatpush.bf16.msra.mxu0 0
          %604 = vmatpush.bf16.msra.mxu0 0
          %605 = vmatpush.bf16.msra.mxu0 0
          %606 = vmatpush.bf16.msra.mxu0 0
          %607 = vmatpush.bf16.msra.mxu0 0
          %608 = vmatpush.bf16.msra.mxu0 %v599
          %609 = vmatpush.bf16.msra.mxu0 %v598
          %610 = vmatmul.bf16.gmra.mxu0 %v568
          %v611 = vpop.f32.mrf.mxu0
          %v612 = vadd.f32 0.0, %v611
          %v613 = vpop.f32.mrf.mxu0
          %614 = vdwg.mxu0
          %v615 = vpack.c.bf16 %v612, %v612
          %616 = vst.msk [vmem:[#allocation3] sm:$0xf] %vm584, %v615
          %v617 = vld [vmem:[#allocation11] sm:$0xf]
          %v618 = vld [vmem:[#allocation11 + $0x4] sm:$0xf]
          %v619 = vld [vmem:[#allocation11 + $0x8] sm:$0xf]
          %v620 = vld [vmem:[#allocation11 + $0xc] sm:$0xf]
          %v625 = vunpack.c.l.b16 %v617
          %v626 = vunpack.c.l.b16 %v618
          %v627 = vunpack.c.l.b16 %v619
          %v628 = vunpack.c.l.b16 %v620
          %v629 = vpack.c.b16 %v626, %v625
          %v630 = vpack.c.b16 %v628, %v627
          %633 = vmatpush.bf16.msra.mxu0 0
          %634 = vmatpush.bf16.msra.mxu0 0
          %635 = vmatpush.bf16.msra.mxu0 0
          %636 = vmatpush.bf16.msra.mxu0 0
          %637 = vmatpush.bf16.msra.mxu0 0
          %638 = vmatpush.bf16.msra.mxu0 0
          %639 = vmatpush.bf16.msra.mxu0 %v630
          %640 = vmatpush.bf16.msra.mxu0 %v629
          %641 = vmatmul.bf16.gmra.mxu0 %v568
          %v642 = vpop.f32.mrf.mxu0
          %v643 = vadd.f32 0.0, %v642
          %v644 = vpop.f32.mrf.mxu0
          %645 = vdwg.mxu0
          %v646 = vpack.c.bf16 %v643, %v643
          %647 = vst.msk [vmem:[#allocation4] sm:$0xf] %vm584, %v646
        $region88: #{tpu_custom_call.1} parent=63 // pred_fallthru
          _
        %s648 = smul.u32 %s35, 8
        %s649 = scalar_lea.vmem %s509, %s648
        %v650 = vld [vmem:[%s649] sm:$0xff]
        %s651 = sshra.s32 %s648, 3
        %s652 = sand.u32 %s648, 7
        %s653 = smul.addr %s651, 4
        %s654 = scalar_lea.vmem [#allocation2], %s653
        %v655 = vld [vmem:[%s654] sm:$0xf]
        %v656 = vld [vmem:[%s439] sm:$0x1]
        %658 = vrot.lane.b32.xlu0 %v655, 120
        %v659 = vpop.permute.xlu0 %658
        %v660 = vld [vmem:[#allocation3] sm:$0xf]
        %662 = vrot.lane.b32.xlu0 %v660, 120
        %v663 = vpop.permute.xlu0 %662
        %v665 = vld [vmem:[#allocation4] sm:$0xf]
        %667 = vrot.lane.b32.xlu0 %v665, 120
        %v668 = vpop.permute.xlu0 %667
        %v670 = vld [vmem:[%s513] sm:$0xf]
        %v671 = vld [vmem:[%s513 + $0x4] sm:$0xf]
        %v672 = vunpack.c.l.bf16 %v670
        %v673 = vunpack.c.l.bf16 %v671
        %674 = vxpose.xlu0.c.b16.start [1/8] %v660, 128
        %675 = vxpose.xlu0.c.b16.cont [2/8] 0, 128
        %676 = vxpose.xlu0.c.b16.cont [3/8] 0, 128
        %677 = vxpose.xlu0.c.b16.cont [4/8] 0, 128
        %678 = vxpose.xlu0.c.b16.cont [5/8] 0, 128
        %679 = vxpose.xlu0.c.b16.cont [6/8] 0, 128
        %680 = vxpose.xlu0.c.b16.cont [7/8] 0, 128
        %681 = vxpose.xlu0.c.b16.end [8/8] 0, 128
        %v682 = vpop.trf.xlu0
        %v683 = vpop.trf.xlu0
        %v684 = vpop.trf.xlu0
        %v685 = vpop.trf.xlu0
        %v686 = vpop.trf.xlu0
        %v687 = vpop.trf.xlu0
        %v688 = vpop.trf.xlu0
        %v689 = vpop.trf.xlu0
        %690 = vxpose.xlu0.c.b16.start [1/8] %v663, 128
        %691 = vxpose.xlu0.c.b16.cont [2/8] 0, 128
        %692 = vxpose.xlu0.c.b16.cont [3/8] 0, 128
        %693 = vxpose.xlu0.c.b16.cont [4/8] 0, 128
        %694 = vxpose.xlu0.c.b16.cont [5/8] 0, 128
        %695 = vxpose.xlu0.c.b16.cont [6/8] 0, 128
        %696 = vxpose.xlu0.c.b16.cont [7/8] 0, 128
        %697 = vxpose.xlu0.c.b16.end [8/8] 0, 128
        %v698 = vpop.trf.xlu0
        %v699 = vpop.trf.xlu0
        %v700 = vpop.trf.xlu0
        %v701 = vpop.trf.xlu0
        %v702 = vpop.trf.xlu0
        %v703 = vpop.trf.xlu0
        %v704 = vpop.trf.xlu0
        %v705 = vpop.trf.xlu0
        %vm706 = vcmask 64512
        %v708 = vsel %vm706, %v655, 0
        %vm710 = vcmask 1043456
        %v712 = vsel %vm710, %v682, 0
        %714 = vmatpush.bf16.msra.mxu0 0
        %715 = vmatpush.bf16.msra.mxu0 0
        %716 = vmatpush.bf16.msra.mxu0 0
        %717 = vmatpush.bf16.msra.mxu0 0
        %718 = vmatpush.bf16.msra.mxu0 0
        %719 = vmatpush.bf16.msra.mxu0 0
        %720 = vmatpush.bf16.msra.mxu0 0
        %721 = vmatpush.bf16.msra.mxu0 %v712
        %722 = vmatmul.bf16.gmra.mxu0 %v708
        %v723 = vpop.f32.mrf.mxu0
        %v724 = vadd.f32 %v672, %v723
        %v725 = vpop.f32.mrf.mxu0
        %726 = vdwg.mxu0
        %v728 = vsel %vm706, %v659, 0
        %v731 = vsel %vm710, %v698, 0
        %733 = vmatpush.bf16.msra.mxu0 0
        %734 = vmatpush.bf16.msra.mxu0 0
        %735 = vmatpush.bf16.msra.mxu0 0
        %736 = vmatpush.bf16.msra.mxu0 0
        %737 = vmatpush.bf16.msra.mxu0 0
        %738 = vmatpush.bf16.msra.mxu0 0
        %739 = vmatpush.bf16.msra.mxu0 0
        %740 = vmatpush.bf16.msra.mxu0 %v731
        %741 = vmatmul.bf16.gmra.mxu0 %v728
        %v742 = vpop.f32.mrf.mxu0
        %v743 = vadd.f32 %v673, %v742
        %v744 = vpop.f32.mrf.mxu0
        %745 = vdwg.mxu0
        %v747 = vperm.slane %v656, 0
        %v749 = vadd.f32 %v724, %v747
        %v750 = vadd.f32 %v743, %v747
        %v751 = vsel %vm706, %v749, -inf
        %752 = vmax.xlane.f32.xlu0 %v751
        %v753 = vpop.xlane.xlu0 %752
        %v754 = vsel %vm706, %v750, -inf
        %755 = vmax.xlane.f32.xlu0 %v754
        %v756 = vpop.xlane.xlu0 %755
        %v757 = vsub.f32 %v749, %v753
        %v758 = vsub.f32 %v750, %v756
        %v759 = vmul.f32 %v757, 1.442695
        %v760 = vpow.pop %v759
        %v761 = vmul.f32 %v758, 1.442695
        %v762 = vpow.pop %v761
        %v763 = vsel %vm706, %v760, 0.0
        %764 = vadd.xlane.f32.xlu0 %v763
        %v765 = vpop.xlane.xlu0 %764
        %v766 = vsel %vm706, %v762, 0.0
        %767 = vadd.xlane.f32.xlu0 %v766
        %v768 = vpop.xlane.xlu0 %767
        %v769 = vrcp.pop %v765
        %v770 = vrcp.pop %v768
        %v771 = vmul.f32 %v760, %v769
        %v772 = vmul.f32 %v762, %v770
        %v773 = vpack.c.bf16 %v771, %v771
        %v774 = vpack.c.bf16 %v772, %v772
        %775 = vxpose.xlu0.c.b16.start [1/8] %v665, 128
        %776 = vxpose.xlu0.c.b16.cont [2/8] 0, 128
        %777 = vxpose.xlu0.c.b16.cont [3/8] 0, 128
        %778 = vxpose.xlu0.c.b16.cont [4/8] 0, 128
        %779 = vxpose.xlu0.c.b16.cont [5/8] 0, 128
        %780 = vxpose.xlu0.c.b16.cont [6/8] 0, 128
        %781 = vxpose.xlu0.c.b16.cont [7/8] 0, 128
        %782 = vxpose.xlu0.c.b16.end [8/8] 0, 128
        %v783 = vpop.trf.xlu0
        %v784 = vpop.trf.xlu0
        %v785 = vpop.trf.xlu0
        %v786 = vpop.trf.xlu0
        %v787 = vpop.trf.xlu0
        %v788 = vpop.trf.xlu0
        %v789 = vpop.trf.xlu0
        %v790 = vpop.trf.xlu0
        %791 = vxpose.xlu0.c.b16.start [1/8] %v668, 128
        %792 = vxpose.xlu0.c.b16.cont [2/8] 0, 128
        %793 = vxpose.xlu0.c.b16.cont [3/8] 0, 128
        %794 = vxpose.xlu0.c.b16.cont [4/8] 0, 128
        %795 = vxpose.xlu0.c.b16.cont [5/8] 0, 128
        %796 = vxpose.xlu0.c.b16.cont [6/8] 0, 128
        %797 = vxpose.xlu0.c.b16.cont [7/8] 0, 128
        %798 = vxpose.xlu0.c.b16.end [8/8] 0, 128
        %v799 = vpop.trf.xlu0
        %v800 = vpop.trf.xlu0
        %v801 = vpop.trf.xlu0
        %v802 = vpop.trf.xlu0
        %v803 = vpop.trf.xlu0
        %v804 = vpop.trf.xlu0
        %v805 = vpop.trf.xlu0
        %v806 = vpop.trf.xlu0
        %v808 = vsel %vm706, %v783, 0
        %v811 = vsel %vm706, %v773, 0
        %813 = vmatpush.bf16.xpose.msra.mxu0 0
        %814 = vmatpush.bf16.xpose.msra.mxu0 0
        %815 = vmatpush.bf16.xpose.msra.mxu0 0
        %816 = vmatpush.bf16.xpose.msra.mxu0 0
        %817 = vmatpush.bf16.xpose.msra.mxu0 0
        %818 = vmatpush.bf16.xpose.msra.mxu0 0
        %819 = vmatpush.bf16.xpose.msra.mxu0 0
        %820 = vmatpush.bf16.xpose.msra.mxu0 %v811
        %821 = vmatmul.bf16.gmra.mxu0 %v808
        %v822 = vpop.f32.mrf.mxu0
        %v823 = vadd.f32 0.0, %v822
        %v824 = vpop.f32.mrf.mxu0
        %825 = vdwg.mxu0
        %v827 = vsel %vm706, %v799, 0
        %v830 = vsel %vm706, %v774, 0
        %832 = vmatpush.bf16.xpose.msra.mxu0 0
        %833 = vmatpush.bf16.xpose.msra.mxu0 0
        %834 = vmatpush.bf16.xpose.msra.mxu0 0
        %835 = vmatpush.bf16.xpose.msra.mxu0 0
        %836 = vmatpush.bf16.xpose.msra.mxu0 0
        %837 = vmatpush.bf16.xpose.msra.mxu0 0
        %838 = vmatpush.bf16.xpose.msra.mxu0 0
        %839 = vmatpush.bf16.xpose.msra.mxu0 %v830
        %840 = vmatmul.bf16.gmra.mxu0 %v827
        %v841 = vpop.f32.mrf.mxu0
        %v842 = vadd.f32 0.0, %v841
        %v843 = vpop.f32.mrf.mxu0
        %844 = vdwg.mxu0
        %845 = vxpose.xlu0.b32.start [1/16] %v823, 128
        %846 = vxpose.xlu0.b32.cont [2/16] 0.0, 128
        %847 = vxpose.xlu0.b32.cont [3/16] 0.0, 128
        %848 = vxpose.xlu0.b32.cont [4/16] 0.0, 128
        %849 = vxpose.xlu0.b32.cont [5/16] 0.0, 128
        %850 = vxpose.xlu0.b32.cont [6/16] 0.0, 128
        %851 = vxpose.xlu0.b32.cont [7/16] 0.0, 128
        %852 = vxpose.xlu0.b32.cont [8/16] 0.0, 128
        %853 = vxpose.xlu0.b32.cont [9/16] 0.0, 128
        %854 = vxpose.xlu0.b32.cont [10/16] 0.0, 128
        %855 = vxpose.xlu0.b32.cont [11/16] 0.0, 128
        %856 = vxpose.xlu0.b32.cont [12/16] 0.0, 128
        %857 = vxpose.xlu0.b32.cont [13/16] 0.0, 128
        %858 = vxpose.xlu0.b32.cont [14/16] 0.0, 128
        %859 = vxpose.xlu0.b32.cont [15/16] 0.0, 128
        %860 = vxpose.xlu0.b32.end [16/16] 0.0, 128
        %v861 = vpop.trf.xlu0
        %v862 = vpop.trf.xlu0
        %v863 = vpop.trf.xlu0
        %v864 = vpop.trf.xlu0
        %v865 = vpop.trf.xlu0
        %v866 = vpop.trf.xlu0
        %v867 = vpop.trf.xlu0
        %v868 = vpop.trf.xlu0
        %v869 = vpop.trf.xlu0
        %v870 = vpop.trf.xlu0
        %v871 = vpop.trf.xlu0
        %v872 = vpop.trf.xlu0
        %v873 = vpop.trf.xlu0
        %v874 = vpop.trf.xlu0
        %v875 = vpop.trf.xlu0
        %v876 = vpop.trf.xlu0
        %877 = vxpose.xlu0.b32.start [1/16] %v842, 128
        %878 = vxpose.xlu0.b32.cont [2/16] 0.0, 128
        %879 = vxpose.xlu0.b32.cont [3/16] 0.0, 128
        %880 = vxpose.xlu0.b32.cont [4/16] 0.0, 128
        %881 = vxpose.xlu0.b32.cont [5/16] 0.0, 128
        %882 = vxpose.xlu0.b32.cont [6/16] 0.0, 128
        %883 = vxpose.xlu0.b32.cont [7/16] 0.0, 128
        %884 = vxpose.xlu0.b32.cont [8/16] 0.0, 128
        %885 = vxpose.xlu0.b32.cont [9/16] 0.0, 128
        %886 = vxpose.xlu0.b32.cont [10/16] 0.0, 128
        %887 = vxpose.xlu0.b32.cont [11/16] 0.0, 128
        %888 = vxpose.xlu0.b32.cont [12/16] 0.0, 128
        %889 = vxpose.xlu0.b32.cont [13/16] 0.0, 128
        %890 = vxpose.xlu0.b32.cont [14/16] 0.0, 128
        %891 = vxpose.xlu0.b32.cont [15/16] 0.0, 128
        %892 = vxpose.xlu0.b32.end [16/16] 0.0, 128
        %v893 = vpop.trf.xlu0
        %v894 = vpop.trf.xlu0
        %v895 = vpop.trf.xlu0
        %v896 = vpop.trf.xlu0
        %v897 = vpop.trf.xlu0
        %v898 = vpop.trf.xlu0
        %v899 = vpop.trf.xlu0
        %v900 = vpop.trf.xlu0
        %v901 = vpop.trf.xlu0
        %v902 = vpop.trf.xlu0
        %v903 = vpop.trf.xlu0
        %v904 = vpop.trf.xlu0
        %v905 = vpop.trf.xlu0
        %v906 = vpop.trf.xlu0
        %v907 = vpop.trf.xlu0
        %v908 = vpop.trf.xlu0
        %v909 = vrot.slane %v861, 4
        %vm910 = vcmask 1047556
        %v911 = vsel %vm910, 0.0, %v909
        %v913 = vunpack.c.l.s4 1983009808
        %v914 = vunpack.c.0.s8 %v913
        %v915 = vperm.slane %v861, %v914
        %v917 = vunpack.c.l.s4 1983009808
        %v918 = vunpack.c.0.s8 %v917
        %v919 = vperm.slane %v911, %v918
        %v920 = vrot.slane %v893, 4
        %v921 = vsel %vm910, 0.0, %v920
        %v923 = vunpack.c.l.s4 1983009808
        %v924 = vunpack.c.0.s8 %v923
        %v925 = vperm.slane %v893, %v924
        %v927 = vunpack.c.l.s4 1983009808
        %v928 = vunpack.c.0.s8 %v927
        %v929 = vperm.slane %v921, %v928
        %v930 = vrot.slane %v925, 4
        %v931 = vsel %vm910, %v930, %v915
        %v932 = vrot.slane %v915, 4
        %v933 = vsel %vm910, %v925, %v932
        %v935 = vunpack.c.l.s4 1934713408
        %v936 = vunpack.c.0.s8 %v935
        %v937 = vperm.slane %v931, %v936
        %v939 = vunpack.c.l.s4 1934713408
        %v940 = vunpack.c.0.s8 %v939
        %v941 = vperm.slane %v933, %v940
        %v942 = vrot.slane %v929, 4
        %v943 = vsel %vm910, %v942, %v919
        %v944 = vrot.slane %v919, 4
        %v945 = vsel %vm910, %v929, %v944
        %v947 = vunpack.c.l.s4 1934713408
        %v948 = vunpack.c.0.s8 %v947
        %v949 = vperm.slane %v943, %v948
        %v951 = vunpack.c.l.s4 1934713408
        %v952 = vunpack.c.0.s8 %v951
        %v953 = vperm.slane %v945, %v952
        %v954 = vrot.slane %v937, 4
        %v955 = vsel %vm910, 0.0, %v954
        %v956 = vrot.slane %v941, 4
        %v957 = vsel %vm910, 0.0, %v956
        %v958 = vrot.slane %v949, 4
        %v959 = vsel %vm910, 0.0, %v958
        %v960 = vrot.slane %v953, 4
        %v961 = vsel %vm910, 0.0, %v960
        %v962 = vsel %vm910, %v956, %v937
        %v964 = vunpack.c.l.s4 1983009808
        %v965 = vunpack.c.0.s8 %v964
        %v966 = vperm.slane %v962, %v965
        %v967 = vrot.slane %v957, 4
        %v968 = vsel %vm910, %v967, %v955
        %v970 = vunpack.c.l.s4 1983009808
        %v971 = vunpack.c.0.s8 %v970
        %v972 = vperm.slane %v968, %v971
        %v973 = vsel %vm910, %v960, %v949
        %v975 = vunpack.c.l.s4 1983009808
        %v976 = vunpack.c.0.s8 %v975
        %v977 = vperm.slane %v973, %v976
        %v978 = vrot.slane %v961, 4
        %v979 = vsel %vm910, %v978, %v959
        %v981 = vunpack.c.l.s4 1983009808
        %v982 = vunpack.c.0.s8 %v981
        %v983 = vperm.slane %v979, %v982
        %v984 = vrot.slane %v972, 4
        %v985 = vsel %vm910, %v984, %v966
        %v987 = vunpack.c.l.s4 1934713408
        %v988 = vunpack.c.0.s8 %v987
        %v989 = vperm.slane %v985, %v988
        %v990 = vrot.slane %v983, 4
        %v991 = vsel %vm910, %v990, %v977
        %v993 = vunpack.c.l.s4 1934713408
        %v994 = vunpack.c.0.s8 %v993
        %v995 = vperm.slane %v991, %v994
        %v996 = vrot.slane %v995, 4
        %v997 = vsel %vm910, %v996, %v989
        %v998 = vrot.slane %v989, 4
        %v999 = vsel %vm910, %v995, %v998
        %1001 = vrot.lane.b32.xlu0 %v999, 8
        %v1002 = vpop.permute.xlu0 %1001
        %v1004 = vsel %vm706, %v997, %v1002
        %v1005 = vpack.c.bf16 %v1004, %v1004
        %vm1006 = vcmask 125952
        %1007 = vst.msk [vmem:[#allocation5] sm:$0xf] %vm1006, %v1005
        %v1008 = vld [vmem:[#allocation3] sm:$0xf]
        %1010 = vrot.lane.b32.xlu0 %v1008, 120
        %v1011 = vpop.permute.xlu0 %1010
        %v1012 = vld [vmem:[#allocation4] sm:$0xf]
        %1014 = vrot.lane.b32.xlu0 %v1012, 120
        %v1015 = vpop.permute.xlu0 %1014
        %s1016 = scalar_lea.vmem %s513, 8
        %v1017 = vld [vmem:[%s1016] sm:$0xf]
        %v1018 = vld [vmem:[%s1016 + $0x4] sm:$0xf]
        %v1019 = vunpack.c.l.bf16 %v1017
        %v1020 = vunpack.c.l.bf16 %v1018
        %v1021 = vunpack.c.l.b16 %v1008
        %v1022 = vunpack.c.l.b16 %v1011
        %v1023 = vpack.c.b16 %v1021, %v1021
        %v1024 = vpack.c.b16 %v1022, %v1022
        %1025 = vrot.lane.b32.xlu0 %v1023, 112
        %v1026 = vpop.permute.xlu0 %1025
        %1027 = vrot.lane.b32.xlu0 %v1024, 112
        %v1028 = vpop.permute.xlu0 %1027
        %1031 = vxpose.xlu0.c.b16.start [1/8] %v1026, 128
        %1032 = vxpose.xlu0.c.b16.cont [2/8] 0, 128
        %1033 = vxpose.xlu0.c.b16.cont [3/8] 0, 128
        %1034 = vxpose.xlu0.c.b16.cont [4/8] 0, 128
        %1035 = vxpose.xlu0.c.b16.cont [5/8] 0, 128
        %1036 = vxpose.xlu0.c.b16.cont [6/8] 0, 128
        %1037 = vxpose.xlu0.c.b16.cont [7/8] 0, 128
        %1038 = vxpose.xlu0.c.b16.end [8/8] 0, 128
        %v1039 = vpop.trf.xlu0
        %v1040 = vpop.trf.xlu0
        %v1041 = vpop.trf.xlu0
        %v1042 = vpop.trf.xlu0
        %v1043 = vpop.trf.xlu0
        %v1044 = vpop.trf.xlu0
        %v1045 = vpop.trf.xlu0
        %v1046 = vpop.trf.xlu0
        %1047 = vxpose.xlu0.c.b16.start [1/8] %v1028, 128
        %1048 = vxpose.xlu0.c.b16.cont [2/8] 0, 128
        %1049 = vxpose.xlu0.c.b16.cont [3/8] 0, 128
        %1050 = vxpose.xlu0.c.b16.cont [4/8] 0, 128
        %1051 = vxpose.xlu0.c.b16.cont [5/8] 0, 128
        %1052 = vxpose.xlu0.c.b16.cont [6/8] 0, 128
        %1053 = vxpose.xlu0.c.b16.cont [7/8] 0, 128
        %1054 = vxpose.xlu0.c.b16.end [8/8] 0, 128
        %v1055 = vpop.trf.xlu0
        %v1056 = vpop.trf.xlu0
        %v1057 = vpop.trf.xlu0
        %v1058 = vpop.trf.xlu0
        %v1059 = vpop.trf.xlu0
        %v1060 = vpop.trf.xlu0
        %v1061 = vpop.trf.xlu0
        %v1062 = vpop.trf.xlu0
        %v1063 = vunpack.c.l.b16 %v655
        %v1064 = vpack.c.b16 %v1063, %v1063
        %1065 = vrot.lane.b32.xlu0 %v1064, 112
        %v1066 = vpop.permute.xlu0 %1065
        %v1068 = vsel %vm706, %v1066, 0
        %v1071 = vsel %vm710, %v1039, 0
        %1073 = vmatpush.bf16.msra.mxu0 0
        %1074 = vmatpush.bf16.msra.mxu0 0
        %1075 = vmatpush.bf16.msra.mxu0 0
        %1076 = vmatpush.bf16.msra.mxu0 0
        %1077 = vmatpush.bf16.msra.mxu0 0
        %1078 = vmatpush.bf16.msra.mxu0 0
        %1079 = vmatpush.bf16.msra.mxu0 0
        %1080 = vmatpush.bf16.msra.mxu0 %v1071
        %1081 = vmatmul.bf16.gmra.mxu0 %v1068
        %v1082 = vpop.f32.mrf.mxu0
        %v1083 = vadd.f32 %v1019, %v1082
        %v1084 = vpop.f32.mrf.mxu0
        %1085 = vdwg.mxu0
        %v1086 = vunpack.c.l.b16 %v659
        %v1087 = vpack.c.b16 %v1086, %v1086
        %1088 = vrot.lane.b32.xlu0 %v1087, 112
        %v1089 = vpop.permute.xlu0 %1088
        %v1091 = vsel %vm706, %v1089, 0
        %v1094 = vsel %vm710, %v1055, 0
        %1096 = vmatpush.bf16.msra.mxu0 0
        %1097 = vmatpush.bf16.msra.mxu0 0
        %1098 = vmatpush.bf16.msra.mxu0 0
        %1099 = vmatpush.bf16.msra.mxu0 0
        %1100 = vmatpush.bf16.msra.mxu0 0
        %1101 = vmatpush.bf16.msra.mxu0 0
        %1102 = vmatpush.bf16.msra.mxu0 0
        %1103 = vmatpush.bf16.msra.mxu0 %v1094
        %1104 = vmatmul.bf16.gmra.mxu0 %v1091
        %v1105 = vpop.f32.mrf.mxu0
        %v1106 = vadd.f32 %v1020, %v1105
        %v1107 = vpop.f32.mrf.mxu0
        %1108 = vdwg.mxu0
        %v1109 = vadd.f32 %v1083, %v747
        %v1110 = vadd.f32 %v1106, %v747
        %v1111 = vsel %vm706, %v1109, -inf
        %1112 = vmax.xlane.f32.xlu0 %v1111
        %v1113 = vpop.xlane.xlu0 %1112
        %v1114 = vsel %vm706, %v1110, -inf
        %1115 = vmax.xlane.f32.xlu0 %v1114
        %v1116 = vpop.xlane.xlu0 %1115
        %v1117 = vsub.f32 %v1109, %v1113
        %v1118 = vsub.f32 %v1110, %v1116
        %v1119 = vmul.f32 %v1117, 1.442695
        %v1120 = vpow.pop %v1119
        %v1121 = vmul.f32 %v1118, 1.442695
        %v1122 = vpow.pop %v1121
        %v1123 = vsel %vm706, %v1120, 0.0
        %1124 = vadd.xlane.f32.xlu0 %v1123
        %v1125 = vpop.xlane.xlu0 %1124
        %v1126 = vsel %vm706, %v1122, 0.0
        %1127 = vadd.xlane.f32.xlu0 %v1126
        %v1128 = vpop.xlane.xlu0 %1127
        %v1129 = vrcp.pop %v1125
        %v1130 = vrcp.pop %v1128
        %v1131 = vmul.f32 %v1120, %v1129
        %v1132 = vmul.f32 %v1122, %v1130
        %v1133 = vpack.c.bf16 %v1131, %v1131
        %v1134 = vpack.c.bf16 %v1132, %v1132
        %v1135 = vunpack.c.l.b16 %v1012
        %v1136 = vunpack.c.l.b16 %v1015
        %v1137 = vpack.c.b16 %v1135, %v1135
        %v1138 = vpack.c.b16 %v1136, %v1136
        %1139 = vrot.lane.b32.xlu0 %v1137, 112
        %v1140 = vpop.permute.xlu0 %1139
        %1141 = vrot.lane.b32.xlu0 %v1138, 112
        %v1142 = vpop.permute.xlu0 %1141
        %1145 = vxpose.xlu0.c.b16.start [1/8] %v1140, 128
        %1146 = vxpose.xlu0.c.b16.cont [2/8] 0, 128
        %1147 = vxpose.xlu0.c.b16.cont [3/8] 0, 128
        %1148 = vxpose.xlu0.c.b16.cont [4/8] 0, 128
        %1149 = vxpose.xlu0.c.b16.cont [5/8] 0, 128
        %1150 = vxpose.xlu0.c.b16.cont [6/8] 0, 128
        %1151 = vxpose.xlu0.c.b16.cont [7/8] 0, 128
        %1152 = vxpose.xlu0.c.b16.end [8/8] 0, 128
        %v1153 = vpop.trf.xlu0
        %v1154 = vpop.trf.xlu0
        %v1155 = vpop.trf.xlu0
        %v1156 = vpop.trf.xlu0
        %v1157 = vpop.trf.xlu0
        %v1158 = vpop.trf.xlu0
        %v1159 = vpop.trf.xlu0
        %v1160 = vpop.trf.xlu0
        %1161 = vxpose.xlu0.c.b16.start [1/8] %v1142, 128
        %1162 = vxpose.xlu0.c.b16.cont [2/8] 0, 128
        %1163 = vxpose.xlu0.c.b16.cont [3/8] 0, 128
        %1164 = vxpose.xlu0.c.b16.cont [4/8] 0, 128
        %1165 = vxpose.xlu0.c.b16.cont [5/8] 0, 128
        %1166 = vxpose.xlu0.c.b16.cont [6/8] 0, 128
        %1167 = vxpose.xlu0.c.b16.cont [7/8] 0, 128
        %1168 = vxpose.xlu0.c.b16.end [8/8] 0, 128
        %v1169 = vpop.trf.xlu0
        %v1170 = vpop.trf.xlu0
        %v1171 = vpop.trf.xlu0
        %v1172 = vpop.trf.xlu0
        %v1173 = vpop.trf.xlu0
        %v1174 = vpop.trf.xlu0
        %v1175 = vpop.trf.xlu0
        %v1176 = vpop.trf.xlu0
        %v1178 = vsel %vm706, %v1153, 0
        %v1181 = vsel %vm706, %v1133, 0
        %1183 = vmatpush.bf16.xpose.msra.mxu0 0
        %1184 = vmatpush.bf16.xpose.msra.mxu0 0
        %1185 = vmatpush.bf16.xpose.msra.mxu0 0
        %1186 = vmatpush.bf16.xpose.msra.mxu0 0
        %1187 = vmatpush.bf16.xpose.msra.mxu0 0
        %1188 = vmatpush.bf16.xpose.msra.mxu0 0
        %1189 = vmatpush.bf16.xpose.msra.mxu0 0
        %1190 = vmatpush.bf16.xpose.msra.mxu0 %v1181
        %1191 = vmatmul.bf16.gmra.mxu0 %v1178
        %v1192 = vpop.f32.mrf.mxu0
        %v1193 = vadd.f32 0.0, %v1192
        %v1194 = vpop.f32.mrf.mxu0
        %1195 = vdwg.mxu0
        %v1197 = vsel %vm706, %v1169, 0
        %v1200 = vsel %vm706, %v1134, 0
        %1202 = vmatpush.bf16.xpose.msra.mxu0 0
        %1203 = vmatpush.bf16.xpose.msra.mxu0 0
        %1204 = vmatpush.bf16.xpose.msra.mxu0 0
        %1205 = vmatpush.bf16.xpose.msra.mxu0 0
        %1206 = vmatpush.bf16.xpose.msra.mxu0 0
        %1207 = vmatpush.bf16.xpose.msra.mxu0 0
        %1208 = vmatpush.bf16.xpose.msra.mxu0 0
        %1209 = vmatpush.bf16.xpose.msra.mxu0 %v1200
        %1210 = vmatmul.bf16.gmra.mxu0 %v1197
        %v1211 = vpop.f32.mrf.mxu0
        %v1212 = vadd.f32 0.0, %v1211
        %v1213 = vpop.f32.mrf.mxu0
        %1214 = vdwg.mxu0
        %1215 = vxpose.xlu0.b32.start [1/16] %v1193, 128
        %1216 = vxpose.xlu0.b32.cont [2/16] 0.0, 128
        %1217 = vxpose.xlu0.b32.cont [3/16] 0.0, 128
        %1218 = vxpose.xlu0.b32.cont [4/16] 0.0, 128
        %1219 = vxpose.xlu0.b32.cont [5/16] 0.0, 128
        %1220 = vxpose.xlu0.b32.cont [6/16] 0.0, 128
        %1221 = vxpose.xlu0.b32.cont [7/16] 0.0, 128
        %1222 = vxpose.xlu0.b32.cont [8/16] 0.0, 128
        %1223 = vxpose.xlu0.b32.cont [9/16] 0.0, 128
        %1224 = vxpose.xlu0.b32.cont [10/16] 0.0, 128
        %1225 = vxpose.xlu0.b32.cont [11/16] 0.0, 128
        %1226 = vxpose.xlu0.b32.cont [12/16] 0.0, 128
        %1227 = vxpose.xlu0.b32.cont [13/16] 0.0, 128
        %1228 = vxpose.xlu0.b32.cont [14/16] 0.0, 128
        %1229 = vxpose.xlu0.b32.cont [15/16] 0.0, 128
        %1230 = vxpose.xlu0.b32.end [16/16] 0.0, 128
        %v1231 = vpop.trf.xlu0
        %v1232 = vpop.trf.xlu0
        %v1233 = vpop.trf.xlu0
        %v1234 = vpop.trf.xlu0
        %v1235 = vpop.trf.xlu0
        %v1236 = vpop.trf.xlu0
        %v1237 = vpop.trf.xlu0
        %v1238 = vpop.trf.xlu0
        %v1239 = vpop.trf.xlu0
        %v1240 = vpop.trf.xlu0
        %v1241 = vpop.trf.xlu0
        %v1242 = vpop.trf.xlu0
        %v1243 = vpop.trf.xlu0
        %v1244 = vpop.trf.xlu0
        %v1245 = vpop.trf.xlu0
        %v1246 = vpop.trf.xlu0
        %1247 = vxpose.xlu0.b32.start [1/16] %v1212, 128
        %1248 = vxpose.xlu0.b32.cont [2/16] 0.0, 128
        %1249 = vxpose.xlu0.b32.cont [3/16] 0.0, 128
        %1250 = vxpose.xlu0.b32.cont [4/16] 0.0, 128
        %1251 = vxpose.xlu0.b32.cont [5/16] 0.0, 128
        %1252 = vxpose.xlu0.b32.cont [6/16] 0.0, 128
        %1253 = vxpose.xlu0.b32.cont [7/16] 0.0, 128
        %1254 = vxpose.xlu0.b32.cont [8/16] 0.0, 128
        %1255 = vxpose.xlu0.b32.cont [9/16] 0.0, 128
        %1256 = vxpose.xlu0.b32.cont [10/16] 0.0, 128
        %1257 = vxpose.xlu0.b32.cont [11/16] 0.0, 128
        %1258 = vxpose.xlu0.b32.cont [12/16] 0.0, 128
        %1259 = vxpose.xlu0.b32.cont [13/16] 0.0, 128
        %1260 = vxpose.xlu0.b32.cont [14/16] 0.0, 128
        %1261 = vxpose.xlu0.b32.cont [15/16] 0.0, 128
        %1262 = vxpose.xlu0.b32.end [16/16] 0.0, 128
        %v1263 = vpop.trf.xlu0
        %v1264 = vpop.trf.xlu0
        %v1265 = vpop.trf.xlu0
        %v1266 = vpop.trf.xlu0
        %v1267 = vpop.trf.xlu0
        %v1268 = vpop.trf.xlu0
        %v1269 = vpop.trf.xlu0
        %v1270 = vpop.trf.xlu0
        %v1271 = vpop.trf.xlu0
        %v1272 = vpop.trf.xlu0
        %v1273 = vpop.trf.xlu0
        %v1274 = vpop.trf.xlu0
        %v1275 = vpop.trf.xlu0
        %v1276 = vpop.trf.xlu0
        %v1277 = vpop.trf.xlu0
        %v1278 = vpop.trf.xlu0
        %v1279 = vrot.slane %v1231, 4
        %v1280 = vsel %vm910, 0.0, %v1279
        %v1282 = vunpack.c.l.s4 1983009808
        %v1283 = vunpack.c.0.s8 %v1282
        %v1284 = vperm.slane %v1231, %v1283
        %v1286 = vunpack.c.l.s4 1983009808
        %v1287 = vunpack.c.0.s8 %v1286
        %v1288 = vperm.slane %v1280, %v1287
        %v1289 = vrot.slane %v1263, 4
        %v1290 = vsel %vm910, 0.0, %v1289
        %v1292 = vunpack.c.l.s4 1983009808
        %v1293 = vunpack.c.0.s8 %v1292
        %v1294 = vperm.slane %v1263, %v1293
        %v1296 = vunpack.c.l.s4 1983009808
        %v1297 = vunpack.c.0.s8 %v1296
        %v1298 = vperm.slane %v1290, %v1297
        %v1299 = vrot.slane %v1294, 4
        %v1300 = vsel %vm910, %v1299, %v1284
        %v1301 = vrot.slane %v1284, 4
        %v1302 = vsel %vm910, %v1294, %v1301
        %v1304 = vunpack.c.l.s4 1934713408
        %v1305 = vunpack.c.0.s8 %v1304
        %v1306 = vperm.slane %v1300, %v1305
        %v1308 = vunpack.c.l.s4 1934713408
        %v1309 = vunpack.c.0.s8 %v1308
        %v1310 = vperm.slane %v1302, %v1309
        %v1311 = vrot.slane %v1298, 4
        %v1312 = vsel %vm910, %v1311, %v1288
        %v1313 = vrot.slane %v1288, 4
        %v1314 = vsel %vm910, %v1298, %v1313
        %v1316 = vunpack.c.l.s4 1934713408
        %v1317 = vunpack.c.0.s8 %v1316
        %v1318 = vperm.slane %v1312, %v1317
        %v1320 = vunpack.c.l.s4 1934713408
        %v1321 = vunpack.c.0.s8 %v1320
        %v1322 = vperm.slane %v1314, %v1321
        %v1323 = vrot.slane %v1306, 4
        %v1324 = vsel %vm910, 0.0, %v1323
        %v1325 = vrot.slane %v1310, 4
        %v1326 = vsel %vm910, 0.0, %v1325
        %v1327 = vrot.slane %v1318, 4
        %v1328 = vsel %vm910, 0.0, %v1327
        %v1329 = vrot.slane %v1322, 4
        %v1330 = vsel %vm910, 0.0, %v1329
        %v1331 = vsel %vm910, %v1325, %v1306
        %v1333 = vunpack.c.l.s4 1983009808
        %v1334 = vunpack.c.0.s8 %v1333
        %v1335 = vperm.slane %v1331, %v1334
        %v1336 = vrot.slane %v1326, 4
        %v1337 = vsel %vm910, %v1336, %v1324
        %v1339 = vunpack.c.l.s4 1983009808
        %v1340 = vunpack.c.0.s8 %v1339
        %v1341 = vperm.slane %v1337, %v1340
        %v1342 = vsel %vm910, %v1329, %v1318
        %v1344 = vunpack.c.l.s4 1983009808
        %v1345 = vunpack.c.0.s8 %v1344
        %v1346 = vperm.slane %v1342, %v1345
        %v1347 = vrot.slane %v1330, 4
        %v1348 = vsel %vm910, %v1347, %v1328
        %v1350 = vunpack.c.l.s4 1983009808
        %v1351 = vunpack.c.0.s8 %v1350
        %v1352 = vperm.slane %v1348, %v1351
        %v1353 = vrot.slane %v1341, 4
        %v1354 = vsel %vm910, %v1353, %v1335
        %v1356 = vunpack.c.l.s4 1934713408
        %v1357 = vunpack.c.0.s8 %v1356
        %v1358 = vperm.slane %v1354, %v1357
        %v1359 = vrot.slane %v1352, 4
        %v1360 = vsel %vm910, %v1359, %v1346
        %v1362 = vunpack.c.l.s4 1934713408
        %v1363 = vunpack.c.0.s8 %v1362
        %v1364 = vperm.slane %v1360, %v1363
        %v1365 = vrot.slane %v1364, 4
        %v1366 = vsel %vm910, %v1365, %v1358
        %v1367 = vrot.slane %v1358, 4
        %v1368 = vsel %vm910, %v1364, %v1367
        %1370 = vrot.lane.b32.xlu0 %v1368, 8
        %v1371 = vpop.permute.xlu0 %1370
        %v1373 = vsel %vm706, %v1366, %v1371
        %v1374 = vpack.c.bf16 %v1373, %v1373
        %1376 = vrot.lane.b32.xlu0 %v1374, 16
        %v1377 = vpop.permute.xlu0 %1376
        %vm1379 = vcmask 257152
        %1380 = vst.msk [vmem:[#allocation5] sm:$0xf] %vm1379, %v1377
        %v1381 = vld [vmem:[#allocation5] sm:$0xf]
        %v1382 = vld [vmem:[#allocation12] sm:$0xf]
        %v1383 = vld [vmem:[#allocation12 + $0x4] sm:$0xf]
        %v1384 = vld [vmem:[#allocation12 + $0x8] sm:$0xf]
        %v1385 = vld [vmem:[#allocation12 + $0xc] sm:$0xf]
        %v1390 = vunpack.c.l.b16 %v1382
        %v1391 = vunpack.c.l.b16 %v1383
        %v1392 = vunpack.c.l.b16 %v1384
        %v1393 = vunpack.c.l.b16 %v1385
        %v1394 = vpack.c.b16 %v1391, %v1390
        %v1395 = vpack.c.b16 %v1393, %v1392
        %vm1398 = vcmask 261120
        %v1400 = vsel %vm1398, %v1381, 0
        %1402 = vmatpush.bf16.msra.mxu0 0
        %1403 = vmatpush.bf16.msra.mxu0 0
        %1404 = vmatpush.bf16.msra.mxu0 0
        %1405 = vmatpush.bf16.msra.mxu0 0
        %1406 = vmatpush.bf16.msra.mxu0 0
        %1407 = vmatpush.bf16.msra.mxu0 0
        %1408 = vmatpush.bf16.msra.mxu0 %v1395
        %1409 = vmatpush.bf16.msra.mxu0 %v1394
        %1410 = vmatmul.bf16.gmra.mxu0 %v1400
        %v1411 = vpop.f32.mrf.mxu0
        %v1412 = vadd.f32 0.0, %v1411
        %v1413 = vpop.f32.mrf.mxu0
        %1414 = vdwg.mxu0
        %v1415 = vadd.f32 %v650, %v1412
        %v1416 = vld [vmem:[%s8] sm:$0x1]
        %v1417 = vmul.f32 %v1415, %v1415
        %v1418 = vsel %vm1398, %v1417, 0.0
        %1419 = vadd.xlane.f32.xlu0 %v1418
        %v1420 = vpop.xlane.xlu0 %1419
        %v1421 = vrcp.pop 32.0
        %v1422 = vmul.f32 32.0, %v1421
        %v1423 = vsub.f32 1.0, %v1422
        %v1424 = vmul.f32 %v1421, %v1423
        %v1425 = vadd.f32 %v1421, %v1424
        %vm1426 = vweird.f32 %v1421
        %v1427 = vsel %vm1426, %v1421, %v1425
        %v1428 = vmul.f32 %v1420, %v1427
        %v1429 = vadd.f32 %v1428, 1e-06
        %v1430 = vrsqrt.pop %v1429
        %v1431 = vmul.f32 %v1430, %v1429
        %v1432 = vmul.f32 %v1431, %v1430
        %v1433 = vmul.f32 0.5, %v1432
        %v1434 = vsub.f32 1.5, %v1433
        %v1435 = vmul.f32 %v1430, %v1434
        %vm1436 = vweird.f32 %v1429
        %vm1437 = vweird.f32 %v1430
        %vm1438 = vmor %vm1436, %vm1437
        %v1439 = vsel %vm1438, %v1430, %v1435
        %v1440 = vmul.f32 %v1415, %v1439
        %v1442 = vperm.slane %v1416, 0
        %v1444 = vmul.f32 %v1440, %v1442
        %v1445 = vpack.c.bf16 %v1444, %v1444
        %v1446 = vld [vmem:[#allocation14] sm:$0xf]
        %v1447 = vld [vmem:[#allocation14 + $0x4] sm:$0xf]
        %v1448 = vld [vmem:[#allocation14 + $0x8] sm:$0xf]
        %v1449 = vld [vmem:[#allocation14 + $0xc] sm:$0xf]
        %v1454 = vunpack.c.l.b16 %v1446
        %v1455 = vunpack.c.l.b16 %v1447
        %v1456 = vunpack.c.l.b16 %v1448
        %v1457 = vunpack.c.l.b16 %v1449
        %v1458 = vpack.c.b16 %v1455, %v1454
        %v1459 = vpack.c.b16 %v1457, %v1456
        %v1463 = vsel %vm1398, %v1445, 0
        %1465 = vmatpush.bf16.msra.mxu0 0
        %1466 = vmatpush.bf16.msra.mxu0 0
        %1467 = vmatpush.bf16.msra.mxu0 0
        %1468 = vmatpush.bf16.msra.mxu0 0
        %1469 = vmatpush.bf16.msra.mxu0 0
        %1470 = vmatpush.bf16.msra.mxu0 0
        %1471 = vmatpush.bf16.msra.mxu0 %v1459
        %1472 = vmatpush.bf16.msra.mxu0 %v1458
        %1473 = vmatmul.bf16.gmra.mxu0 %v1463
        %v1474 = vpop.f32.mrf.mxu0
        %v1475 = vadd.f32 0.0, %v1474
        %v1476 = vpop.f32.mrf.mxu0
        %1477 = vdwg.mxu0
        %v1478 = vmax.f32 %v1475, 0.0
        %v1479 = vpack.c.bf16 %v1478, %v1478
        %v1480 = vld [vmem:[%s10] sm:$0xf]
        %v1481 = vld [vmem:[%s10 + $0x4] sm:$0xf]
        %v1482 = vld [vmem:[%s10 + $0x8] sm:$0xf]
        %v1483 = vld [vmem:[%s10 + $0xc] sm:$0xf]
        %v1484 = vld [vmem:[%s10 + $0x10] sm:$0xf]
        %v1485 = vld [vmem:[%s10 + $0x14] sm:$0xf]
        %v1486 = vld [vmem:[%s10 + $0x18] sm:$0xf]
        %v1487 = vld [vmem:[%s10 + $0x1c] sm:$0xf]
        %v1496 = vunpack.c.l.b16 %v1480
        %v1497 = vunpack.c.l.b16 %v1481
        %v1498 = vunpack.c.l.b16 %v1482
        %v1499 = vunpack.c.l.b16 %v1483
        %v1500 = vunpack.c.l.b16 %v1484
        %v1501 = vunpack.c.l.b16 %v1485
        %v1502 = vunpack.c.l.b16 %v1486
        %v1503 = vunpack.c.l.b16 %v1487
        %v1504 = vpack.c.b16 %v1497, %v1496
        %v1505 = vpack.c.b16 %v1499, %v1498
        %v1506 = vpack.c.b16 %v1501, %v1500
        %v1507 = vpack.c.b16 %v1503, %v1502
        %vm1512 = vcmask 523264
        %v1514 = vsel %vm1512, %v1479, 0
        %1516 = vmatpush.bf16.msra.mxu0 0
        %1517 = vmatpush.bf16.msra.mxu0 0
        %1518 = vmatpush.bf16.msra.mxu0 0
        %1519 = vmatpush.bf16.msra.mxu0 0
        %1520 = vmatpush.bf16.msra.mxu0 %v1507
        %1521 = vmatpush.bf16.msra.mxu0 %v1506
        %1522 = vmatpush.bf16.msra.mxu0 %v1505
        %1523 = vmatpush.bf16.msra.mxu0 %v1504
        %1524 = vmatmul.bf16.gmra.mxu0 %v1514
        %v1525 = vpop.f32.mrf.mxu0
        %v1526 = vadd.f32 0.0, %v1525
        %v1527 = vpop.f32.mrf.mxu0
        %1528 = vdwg.mxu0
        %v1529 = vadd.f32 %v1415, %v1526
        %1530 = vst.msk [vmem:[%s505] sm:$0xff] %vm1398, %v1529
        %s1531 = sand.u32 %s298, 1
        %s1532 = scalar_lea.sflag [#allocation8], %s1531
        %s1533 = sand.u32 %s298, 1
        %s1534 = smul.addr %s1533, 8
        %s1535 = scalar_lea.vmem [#allocation15], %s1534
        // Predicated region
        $region89: #{tpu_custom_call.1} parent=63 // pred_check
          %p1536 = pneg %p308
        $region90: #{tpu_custom_call.1} parent=63 // pred_check_branch
          %1538 = sbr.rel (%p1536) target = $region92
        $region91: #{tpu_custom_call.1} parent=63 // pred_region
          %1540 = vsyncadd %s1532, 0
          %s1541 = sadd.s32 %s35, %s34
          %s1542 = smul.addr %s1541, 8
          %s1543 = scalar_lea.hbm %s11, %s1542
          %s1545 = sshll.u32 %s1535, 4
          %s1546 = int_to_ptr.vmem [resolvable:$true] %s1545
          %s1547 = sshll.u32 %s1543, 4
          %s1548 = int_to_ptr.hbm [resolvable:$true] %s1547
          %1550 = dma.vmem_to_hbm [thread:$0]  %s1546, 128, %s1548, %s1532
        $region92: #{tpu_custom_call.1} parent=63 // pred_fallthru
          _
      $region64: #{tpu_custom_call.1} parent=5 // pred_fallthru
        _
      %p1551 = scmp.le.s32.totalorder 2, %s25
      // Predicated region
      $region93: #{tpu_custom_call.1} parent=5 // pred_check
        %p1552 = pneg %p1551
      $region94: #{tpu_custom_call.1} parent=5 // pred_check_branch
        %1554 = sbr.rel (%p1552) target = $region96
      $region95: #{tpu_custom_call.1} parent=5 // pred_region
        %s1555 = ssub.s32 %s25, 2
        // Predicated region
        $region97: #{tpu_custom_call.1} parent=95 // pred_check
          %p1556 = pneg %p314
        $region98: #{tpu_custom_call.1} parent=95 // pred_check_branch
          %1558 = sbr.rel (%p1556) target = $region100
        $region99: #{tpu_custom_call.1} parent=95 // pred_region
          %s1559 = sand.u32 %s299, 1
          %s1560 = scalar_lea.sflag [#allocation8], %s1559
          %s1561 = sand.u32 %s299, 1
          %s1562 = smul.addr %s1561, 8
          %s1563 = scalar_lea.vmem [#allocation15], %s1562
          %1565 = dma.done %s1560, 128
        $region100: #{tpu_custom_call.1} parent=95 // pred_fallthru
          _
      $region96: #{tpu_custom_call.1} parent=5 // pred_fallthru
        _
    $region6: #{tpu_custom_call.1} parent=1 // loop_footer
      %s29 = sadd.s32 1, %s25
    $region7: #{tpu_custom_call.1} parent=1 // loop_footer_branch
      %24 = sbr.rel target = $region3
    $region8: #{tpu_custom_call.1} parent=1 // loop_exit
      _
    %1566 = vsyncpa [#allocation7], 1
    %s1567 = scalar_lea.sflag [#allocation7], 1
    %1568 = vsyncpa %s1567, 1
    %1569 = vsyncpa [#allocation10], 1
    %1570 = vsyncpa [#allocation13], 1
    %1571 = vsyncpa [#allocation8], 1
    %s1572 = scalar_lea.sflag [#allocation8], 1
    %1573 = vsyncpa %s1572, 1

// kernel: tpu_custom_call.1
$region0: #{tpu_custom_call.1}
  #allocation0 [shape = 'u32[]', space=smem, size = 0x4, offset = 0x4, fixed_abs, tag = 'smem constant byte address 0x4 - core index']
  #allocation1 [shape = 'u32[72,128]{1,0:T(1,128)}', space=vmem, size = 0x9000, scoped, tag = 'internal scratch']
  #allocation2 [shape = 'bf16[8,32]{1,0:T(8,128)(2,1)}', space=vmem, size = 0x800, scoped, tag = 'scratch operand']
  #allocation3 [shape = 'bf16[8,32]{1,0:T(8,128)(2,1)}', space=vmem, size = 0x800, scoped, tag = 'scratch operand']
  #allocation4 [shape = 'bf16[8,32]{1,0:T(8,128)(2,1)}', space=vmem, size = 0x800, scoped, tag = 'scratch operand']
  #allocation5 [shape = 'bf16[8,32]{1,0:T(8,128)(2,1)}', space=vmem, size = 0x800, scoped, tag = 'scratch operand']
  %s0 = inlined_call_operand.vmem [shape: f32[2,8,32], index: 0, kind: input, shape index: {}]
  %s1 = inlined_call_operand.hbm [shape: f32[2,1,1,8], index: 1, kind: input, shape index: {}]
  %s2 = inlined_call_operand.vmem [shape: bf16[1,4,8,8], index: 2, kind: input, shape index: {}]
  %s3 = inlined_call_operand.vmem [shape: f32[1,32], index: 3, kind: input, shape index: {}]
  %s4 = inlined_call_operand.vmem [shape: bf16[32,32], index: 4, kind: input, shape index: {}]
  %s5 = inlined_call_operand.hbm [shape: bf16[32,32], index: 5, kind: input, shape index: {}]
  %s6 = inlined_call_operand.hbm [shape: bf16[32,32], index: 6, kind: input, shape index: {}]
  %s7 = inlined_call_operand.hbm [shape: bf16[32,32], index: 7, kind: input, shape index: {}]
  %s8 = inlined_call_operand.vmem [shape: f32[1,32], index: 8, kind: input, shape index: {}]
  %s9 = inlined_call_operand.hbm [shape: bf16[32,64], index: 9, kind: input, shape index: {}]
  %s10 = inlined_call_operand.vmem [shape: bf16[64,32], index: 10, kind: input, shape index: {}]
  %s11 = inlined_call_operand.hbm [shape: f32[2,8,32], index: 11, kind: output, shape index: {}]
  %s12 = sld [smem:[#allocation0]]
  $region101: #{tpu_custom_call.1} parent=0
    _
  %s14 = ssub.s32 1, %s12
  %s15 = scalar_select 0, %s14, %s12
  $region1: #{tpu_custom_call.1} parent=0
    #allocation6 [shape = 'u8[1024]{0}', space=vmem, size = 0x400, scoped, tag = 'input window, operand 1']
    #allocation7 [shape = 's32[2]{0}', space=sflag, size = 0x8, scoped, tag = 'scoped memory for tpu_custom_call.1']
    #allocation8 [shape = 's32[2]{0}', space=sflag, size = 0x8, scoped, tag = 'scoped memory for tpu_custom_call.1']
    #allocation9 [shape = 'u8[8192]{0}', space=vmem, size = 0x2000, scoped, tag = 'input window, operand 5, single buffered']
    #allocation10 [shape = 's32[1]{0}', space=sflag, size = 0x4, scoped, tag = 'scoped memory for tpu_custom_call.1']
    #allocation11 [shape = 'u8[8192]{0}', space=vmem, size = 0x2000, scoped, tag = 'input window, operand 6, single buffered']
    #allocation12 [shape = 'u8[8192]{0}', space=vmem, size = 0x2000, scoped, tag = 'input window, operand 7, single buffered']
    #allocation13 [shape = 's32[1]{0}', space=sflag, size = 0x4, scoped, tag = 'scoped memory for tpu_custom_call.1']
    #allocation14 [shape = 'u8[8192]{0}', space=vmem, size = 0x2000, scoped, tag = 'input window, operand 9, single buffered']
    #allocation15 [shape = 'u8[8192]{0}', space=vmem, size = 0x2000, scoped, tag = 'output window, operand 0']
    %16 = vsyncpa [#allocation7], 0
    %s17 = scalar_lea.sflag [#allocation7], 1
    %18 = vsyncpa %s17, 0
    %19 = vsyncpa [#allocation10], 0
    %20 = vsyncpa [#allocation13], 0
    %21 = vsyncpa [#allocation8], 0
    %s22 = scalar_lea.sflag [#allocation8], 1
    %23 = vsyncpa %s22, 0
    loop: start=0, step=1, limit=4
    $region2: #{tpu_custom_call.1} parent=1 // loop_pre_header
      _
    $region3: #{tpu_custom_call.1} parent=1 // loop_header
      %s25 = sphi 0, %s29
      %p26 = scmp.ge.s32.totalorder %s25, 4
      %s32 = sphi 0, %s44
      %s33 = sphi 0, %s40
      %s34 = sphi 0, %s32
      %s35 = sphi 0, %s33
      %s36 = sphi 0, %s34
      %s37 = sphi 0, %s35
      %s47 = sphi 0, %s49
      %s50 = sphi 0, %s47
      %s51 = sphi 0, %s50
      %s67 = sphi 0, %s51
      %s73 = sphi 0, %s75
      %s76 = sphi 0, %s73
      %s77 = sphi 0, %s76
      %s93 = sphi 0, %s77
      %s99 = sphi 0, %s101
      %s102 = sphi 0, %s99
      %s103 = sphi 0, %s102
      %s119 = sphi 0, %s103
      %s123 = sphi 0, %s123
      %s125 = sphi 0, %s123
      %s126 = sphi 0, %s125
      %s140 = sphi 0, %s126
      %s144 = sphi 0, %s144
      %s146 = sphi 0, %s144
      %s147 = sphi 0, %s146
      %s161 = sphi 0, %s147
      %s165 = sphi 0, %s165
      %s167 = sphi 0, %s165
      %s168 = sphi 0, %s167
      %s182 = sphi 0, %s168
      %s186 = sphi 0, %s186
      %s188 = sphi 0, %s186
      %s189 = sphi 0, %s188
      %s203 = sphi 0, %s189
      %s207 = sphi 0, %s207
      %s209 = sphi 0, %s207
      %s210 = sphi 0, %s209
      %s224 = sphi 0, %s210
      %s228 = sphi 0, %s228
      %s230 = sphi 0, %s228
      %s231 = sphi 0, %s230
      %s245 = sphi 0, %s231
      %s249 = sphi 0, %s249
      %s251 = sphi 0, %s249
      %s252 = sphi 0, %s251
      %s266 = sphi 0, %s252
      %s270 = sphi 0, %s270
      %s272 = sphi 0, %s270
      %s273 = sphi 0, %s272
      %s287 = sphi 0, %s273
      %s295 = sphi 0, %s297
      %s298 = sphi 0, %s295
      %s299 = sphi 0, %s298
      %s315 = sphi 0, %s299
    $region4: #{tpu_custom_call.1} parent=1 // loop_header_branch
      %28 = sbr.rel (%p26) target = $region8
    $region5: #{tpu_custom_call.1} parent=1 // loop_body
      %s30 = ssub.s32 %s25, 1
      %s31 = ssub.s32 %s25, 2
      %s38 = sadd.s32 1, %s33
      %p39 = scmp.ge.s32.totalorder %s38, 1
      %s40 = scalar_select %p39, 0, %s38
      %s41 = sadd.s32 1, %s32
      %s42 = scalar_select %p39, %s41, %s32
      %p43 = scmp.ge.s32.totalorder %s42, 2
      %s44 = scalar_select %p43, 0, %s42
      %s45 = ssub.s32 %s32, %s44
      %p46 = scmp.eq.s32.totalorder %s45, 0
      %s48 = sadd.s32 %s47, 1
      %s49 = scalar_select %p46, %s47, %s48
      %p52 = pneg %p46
      %p53 = scmp.eq.s32.totalorder %s25, 1
      %p54 = por %p52, %p53
      %p55 = scmp.ne.s32.totalorder %s47, %s50
      %p56 = scmp.eq.s32.totalorder %s25, 0
      %p57 = por %p55, %p56
      %p58 = scmp.ne.s32.totalorder %s47, %s50
      %p59 = scmp.eq.s32.totalorder %s30, 1
      %p60 = por %p58, %p59
      %p61 = scmp.ne.s32.totalorder %s50, %s51
      %p62 = scmp.eq.s32.totalorder %s30, 0
      %p63 = por %p61, %p62
      %p64 = scmp.ne.s32.totalorder %s50, %s51
      %p65 = scmp.eq.s32.totalorder %s31, 1
      %p66 = por %p64, %p65
      %p68 = scmp.ne.s32.totalorder %s51, %s67
      %p69 = scmp.eq.s32.totalorder %s31, 0
      %p70 = por %p68, %p69
      %s71 = ssub.s32 %s32, %s44
      %p72 = scmp.eq.s32.totalorder %s71, 0
      %s74 = sadd.s32 %s73, 1
      %s75 = scalar_select %p72, %s73, %s74
      %p78 = pneg %p72
      %p79 = scmp.eq.s32.totalorder %s25, 1
      %p80 = por %p78, %p79
      %p81 = scmp.ne.s32.totalorder %s73, %s76
      %p82 = scmp.eq.s32.totalorder %s25, 0
      %p83 = por %p81, %p82
      %p84 = scmp.ne.s32.totalorder %s73, %s76
      %p85 = scmp.eq.s32.totalorder %s30, 1
      %p86 = por %p84, %p85
      %p87 = scmp.ne.s32.totalorder %s76, %s77
      %p88 = scmp.eq.s32.totalorder %s30, 0
      %p89 = por %p87, %p88
      %p90 = scmp.ne.s32.totalorder %s76, %s77
      %p91 = scmp.eq.s32.totalorder %s31, 1
      %p92 = por %p90, %p91
      %p94 = scmp.ne.s32.totalorder %s77, %s93
      %p95 = scmp.eq.s32.totalorder %s31, 0
      %p96 = por %p94, %p95
      %s97 = ssub.s32 %s33, %s40
      %p98 = scmp.eq.s32.totalorder %s97, 0
      %s100 = sadd.s32 %s99, 1
      %s101 = scalar_select %p98, %s99, %s100
      %p104 = pneg %p98
      %p105 = scmp.eq.s32.totalorder %s25, 1
      %p106 = por %p104, %p105
      %p107 = scmp.ne.s32.totalorder %s99, %s102
      %p108 = scmp.eq.s32.totalorder %s25, 0
      %p109 = por %p107, %p108
      %p110 = scmp.ne.s32.totalorder %s99, %s102
      %p111 = scmp.eq.s32.totalorder %s30, 1
      %p112 = por %p110, %p111
      %p113 = scmp.ne.s32.totalorder %s102, %s103
      %p114 = scmp.eq.s32.totalorder %s30, 0
      %p115 = por %p113, %p114
      %p116 = scmp.ne.s32.totalorder %s102, %s103
      %p117 = scmp.eq.s32.totalorder %s31, 1
      %p118 = por %p116, %p117
      %p120 = scmp.ne.s32.totalorder %s103, %s119
      %p121 = scmp.eq.s32.totalorder %s31, 0
      %p122 = por %p120, %p121
      %s124 = sadd.s32 %s123, 1
      %p127 = scmp.eq.s32.totalorder %s25, 1
      %p128 = scmp.ne.s32.totalorder %s123, %s125
      %p129 = scmp.eq.s32.totalorder %s25, 0
      %p130 = por %p128, %p129
      %p131 = scmp.ne.s32.totalorder %s123, %s125
      %p132 = scmp.eq.s32.totalorder %s30, 1
      %p133 = por %p131, %p132
      %p134 = scmp.ne.s32.totalorder %s125, %s126
      %p135 = scmp.eq.s32.totalorder %s30, 0
      %p136 = por %p134, %p135
      %p137 = scmp.ne.s32.totalorder %s125, %s126
      %p138 = scmp.eq.s32.totalorder %s31, 1
      %p139 = por %p137, %p138
      %p141 = scmp.ne.s32.totalorder %s126, %s140
      %p142 = scmp.eq.s32.totalorder %s31, 0
      %p143 = por %p141, %p142
      %s145 = sadd.s32 %s144, 1
      %p148 = scmp.eq.s32.totalorder %s25, 1
      %p149 = scmp.ne.s32.totalorder %s144, %s146
      %p150 = scmp.eq.s32.totalorder %s25, 0
      %p151 = por %p149, %p150
      %p152 = scmp.ne.s32.totalorder %s144, %s146
      %p153 = scmp.eq.s32.totalorder %s30, 1
      %p154 = por %p152, %p153
      %p155 = scmp.ne.s32.totalorder %s146, %s147
      %p156 = scmp.eq.s32.totalorder %s30, 0
      %p157 = por %p155, %p156
      %p158 = scmp.ne.s32.totalorder %s146, %s147
      %p159 = scmp.eq.s32.totalorder %s31, 1
      %p160 = por %p158, %p159
      %p162 = scmp.ne.s32.totalorder %s147, %s161
      %p163 = scmp.eq.s32.totalorder %s31, 0
      %p164 = por %p162, %p163
      %s166 = sadd.s32 %s165, 1
      %p169 = scmp.eq.s32.totalorder %s25, 1
      %p170 = scmp.ne.s32.totalorder %s165, %s167
      %p171 = scmp.eq.s32.totalorder %s25, 0
      %p172 = por %p170, %p171
      %p173 = scmp.ne.s32.totalorder %s165, %s167
      %p174 = scmp.eq.s32.totalorder %s30, 1
      %p175 = por %p173, %p174
      %p176 = scmp.ne.s32.totalorder %s167, %s168
      %p177 = scmp.eq.s32.totalorder %s30, 0
      %p178 = por %p176, %p177
      %p179 = scmp.ne.s32.totalorder %s167, %s168
      %p180 = scmp.eq.s32.totalorder %s31, 1
      %p181 = por %p179, %p180
      %p183 = scmp.ne.s32.totalorder %s168, %s182
      %p184 = scmp.eq.s32.totalorder %s31, 0
      %p185 = por %p183, %p184
      %s187 = sadd.s32 %s186, 1
      %p190 = scmp.eq.s32.totalorder %s25, 1
      %p191 = scmp.ne.s32.totalorder %s186, %s188
      %p192 = scmp.eq.s32.totalorder %s25, 0
      %p193 = por %p191, %p192
      %p194 = scmp.ne.s32.totalorder %s186, %s188
      %p195 = scmp.eq.s32.totalorder %s30, 1
      %p196 = por %p194, %p195
      %p197 = scmp.ne.s32.totalorder %s188, %s189
      %p198 = scmp.eq.s32.totalorder %s30, 0
      %p199 = por %p197, %p198
      %p200 = scmp.ne.s32.totalorder %s188, %s189
      %p201 = scmp.eq.s32.totalorder %s31, 1
      %p202 = por %p200, %p201
      %p204 = scmp.ne.s32.totalorder %s189, %s203
      %p205 = scmp.eq.s32.totalorder %s31, 0
      %p206 = por %p204, %p205
      %s208 = sadd.s32 %s207, 1
      %p211 = scmp.eq.s32.totalorder %s25, 1
      %p212 = scmp.ne.s32.totalorder %s207, %s209
      %p213 = scmp.eq.s32.totalorder %s25, 0
      %p214 = por %p212, %p213
      %p215 = scmp.ne.s32.totalorder %s207, %s209
      %p216 = scmp.eq.s32.totalorder %s30, 1
      %p217 = por %p215, %p216
      %p218 = scmp.ne.s32.totalorder %s209, %s210
      %p219 = scmp.eq.s32.totalorder %s30, 0
      %p220 = por %p218, %p219
      %p221 = scmp.ne.s32.totalorder %s209, %s210
      %p222 = scmp.eq.s32.totalorder %s31, 1
      %p223 = por %p221, %p222
      %p225 = scmp.ne.s32.totalorder %s210, %s224
      %p226 = scmp.eq.s32.totalorder %s31, 0
      %p227 = por %p225, %p226
      %s229 = sadd.s32 %s228, 1
      %p232 = scmp.eq.s32.totalorder %s25, 1
      %p233 = scmp.ne.s32.totalorder %s228, %s230
      %p234 = scmp.eq.s32.totalorder %s25, 0
      %p235 = por %p233, %p234
      %p236 = scmp.ne.s32.totalorder %s228, %s230
      %p237 = scmp.eq.s32.totalorder %s30, 1
      %p238 = por %p236, %p237
      %p239 = scmp.ne.s32.totalorder %s230, %s231
      %p240 = scmp.eq.s32.totalorder %s30, 0
      %p241 = por %p239, %p240
      %p242 = scmp.ne.s32.totalorder %s230, %s231
      %p243 = scmp.eq.s32.totalorder %s31, 1
      %p244 = por %p242, %p243
      %p246 = scmp.ne.s32.totalorder %s231, %s245
      %p247 = scmp.eq.s32.totalorder %s31, 0
      %p248 = por %p246, %p247
      %s250 = sadd.s32 %s249, 1
      %p253 = scmp.eq.s32.totalorder %s25, 1
      %p254 = scmp.ne.s32.totalorder %s249, %s251
      %p255 = scmp.eq.s32.totalorder %s25, 0
      %p256 = por %p254, %p255
      %p257 = scmp.ne.s32.totalorder %s249, %s251
      %p258 = scmp.eq.s32.totalorder %s30, 1
      %p259 = por %p257, %p258
      %p260 = scmp.ne.s32.totalorder %s251, %s252
      %p261 = scmp.eq.s32.totalorder %s30, 0
      %p262 = por %p260, %p261
      %p263 = scmp.ne.s32.totalorder %s251, %s252
      %p264 = scmp.eq.s32.totalorder %s31, 1
      %p265 = por %p263, %p264
      %p267 = scmp.ne.s32.totalorder %s252, %s266
      %p268 = scmp.eq.s32.totalorder %s31, 0
      %p269 = por %p267, %p268
      %s271 = sadd.s32 %s270, 1
      %p274 = scmp.eq.s32.totalorder %s25, 1
      %p275 = scmp.ne.s32.totalorder %s270, %s272
      %p276 = scmp.eq.s32.totalorder %s25, 0
      %p277 = por %p275, %p276
      %p278 = scmp.ne.s32.totalorder %s270, %s272
      %p279 = scmp.eq.s32.totalorder %s30, 1
      %p280 = por %p278, %p279
      %p281 = scmp.ne.s32.totalorder %s272, %s273
      %p282 = scmp.eq.s32.totalorder %s30, 0
      %p283 = por %p281, %p282
      %p284 = scmp.ne.s32.totalorder %s272, %s273
      %p285 = scmp.eq.s32.totalorder %s31, 1
      %p286 = por %p284, %p285
      %p288 = scmp.ne.s32.totalorder %s273, %s287
      %p289 = scmp.eq.s32.totalorder %s31, 0
      %p290 = por %p288, %p289
      %s291 = ssub.s32 %s32, %s44
      %s292 = ssub.s32 %s33, %s40
      %s293 = sor.u32 %s291, %s292
      %p294 = scmp.eq.s32.totalorder %s293, 0
      %s296 = sadd.s32 %s295, 1
      %s297 = scalar_select %p294, %s295, %s296
      %p300 = pneg %p294
      %p301 = scmp.eq.s32.totalorder %s25, 1
      %p302 = por %p300, %p301
      %p303 = scmp.ne.s32.totalorder %s295, %s298
      %p304 = scmp.eq.s32.totalorder %s25, 0
      %p305 = por %p303, %p304
      %p306 = scmp.ne.s32.totalorder %s295, %s298
      %p307 = scmp.eq.s32.totalorder %s30, 1
      %p308 = por %p306, %p307
      %p309 = scmp.ne.s32.totalorder %s298, %s299
      %p310 = scmp.eq.s32.totalorder %s30, 0
      %p311 = por %p309, %p310
      %p312 = scmp.ne.s32.totalorder %s298, %s299
      %p313 = scmp.eq.s32.totalorder %s31, 1
      %p314 = por %p312, %p313
      %p316 = scmp.ne.s32.totalorder %s299, %s315
      %p317 = scmp.eq.s32.totalorder %s31, 0
      %p318 = por %p316, %p317
      %p319 = scmp.le.s32.totalorder 1, %s25
      %p320 = scmp.lt.s32.totalorder %s25, 3
      %p321 = pnand %p319, %p320
      %p322 = pneg %p321
      // Predicated region
      $region9: #{tpu_custom_call.1} parent=5 // pred_check
        _
      $region10: #{tpu_custom_call.1} parent=5 // pred_check_branch
        %324 = sbr.rel (%p321) target = $region12
      $region11: #{tpu_custom_call.1} parent=5 // pred_region
        %s325 = ssub.s32 %s25, 1
        // Predicated region
        $region13: #{tpu_custom_call.1} parent=11 // pred_check
          %p326 = pneg %p115
        $region14: #{tpu_custom_call.1} parent=11 // pred_check_branch
          %328 = sbr.rel (%p326) target = $region16
        $region15: #{tpu_custom_call.1} parent=11 // pred_region
          %p329 = scmp.lt.s32.totalorder %s35, 0
          %s330 = scalar_select %p329, %s35, 0
          %s331 = smul.addr %s330, 4
          %s332 = scalar_lea.vmem %s2, %s331
        $region16: #{tpu_custom_call.1} parent=11 // pred_fallthru
          _
        // Predicated region
        $region17: #{tpu_custom_call.1} parent=11 // pred_check
          %p333 = pneg %p136
        $region18: #{tpu_custom_call.1} parent=11 // pred_check_branch
          %335 = sbr.rel (%p333) target = $region20
        $region19: #{tpu_custom_call.1} parent=11 // pred_region
          _
        $region20: #{tpu_custom_call.1} parent=11 // pred_fallthru
          _
        // Predicated region
        $region21: #{tpu_custom_call.1} parent=11 // pred_check
          %p336 = pneg %p157
        $region22: #{tpu_custom_call.1} parent=11 // pred_check_branch
          %338 = sbr.rel (%p336) target = $region24
        $region23: #{tpu_custom_call.1} parent=11 // pred_region
          _
        $region24: #{tpu_custom_call.1} parent=11 // pred_fallthru
          _
        // Predicated region
        $region25: #{tpu_custom_call.1} parent=11 // pred_check
          %p339 = pneg %p178
        $region26: #{tpu_custom_call.1} parent=11 // pred_check_branch
          %341 = sbr.rel (%p339) target = $region28
        $region27: #{tpu_custom_call.1} parent=11 // pred_region
          %343 = vsyncadd [#allocation10], 0
          %s344 = sshll.u32 %s5, 4
          %s345 = int_to_ptr.hbm [resolvable:$true] %s344
          %s346 = sshll.u32 [#allocation9], 4
          %s347 = int_to_ptr.vmem [resolvable:$true] %s346
          %352 = dma.hbm_to_vmem [thread:$0]  %s345, 256, %s347, [#allocation10], 64, 64, 4
        $region28: #{tpu_custom_call.1} parent=11 // pred_fallthru
          _
        // Predicated region
        $region29: #{tpu_custom_call.1} parent=11 // pred_check
          %p353 = pneg %p199
        $region30: #{tpu_custom_call.1} parent=11 // pred_check_branch
          %355 = sbr.rel (%p353) target = $region32
        $region31: #{tpu_custom_call.1} parent=11 // pred_region
          %357 = vsyncadd [#allocation10], 0
          %s358 = sshll.u32 %s6, 4
          %s359 = int_to_ptr.hbm [resolvable:$true] %s358
          %s360 = sshll.u32 [#allocation11], 4
          %s361 = int_to_ptr.vmem [resolvable:$true] %s360
          %366 = dma.hbm_to_vmem [thread:$0]  %s359, 256, %s361, [#allocation10], 64, 64, 4
        $region32: #{tpu_custom_call.1} parent=11 // pred_fallthru
          _
        // Predicated region
        $region33: #{tpu_custom_call.1} parent=11 // pred_check
          %p367 = pneg %p220
        $region34: #{tpu_custom_call.1} parent=11 // pred_check_branch
          %369 = sbr.rel (%p367) target = $region36
        $region35: #{tpu_custom_call.1} parent=11 // pred_region
          %371 = vsyncadd [#allocation13], 0
          %s372 = sshll.u32 %s7, 4
          %s373 = int_to_ptr.hbm [resolvable:$true] %s372
          %s374 = sshll.u32 [#allocation12], 4
          %s375 = int_to_ptr.vmem [resolvable:$true] %s374
          %380 = dma.hbm_to_vmem [thread:$0]  %s373, 256, %s375, [#allocation13], 64, 64, 4
        $region36: #{tpu_custom_call.1} parent=11 // pred_fallthru
          _
        // Predicated region
        $region37: #{tpu_custom_call.1} parent=11 // pred_check
          %p381 = pneg %p241
        $region38: #{tpu_custom_call.1} parent=11 // pred_check_branch
          %383 = sbr.rel (%p381) target = $region40
        $region39: #{tpu_custom_call.1} parent=11 // pred_region
          _
        $region40: #{tpu_custom_call.1} parent=11 // pred_fallthru
          _
        // Predicated region
        $region41: #{tpu_custom_call.1} parent=11 // pred_check
          %p384 = pneg %p262
        $region42: #{tpu_custom_call.1} parent=11 // pred_check_branch
          %386 = sbr.rel (%p384) target = $region44
        $region43: #{tpu_custom_call.1} parent=11 // pred_region
          %388 = vsyncadd [#allocation13], 0
          %s389 = sshll.u32 %s9, 4
          %s390 = int_to_ptr.hbm [resolvable:$true] %s389
          %s391 = sshll.u32 [#allocation14], 4
          %s392 = int_to_ptr.vmem [resolvable:$true] %s391
          %397 = dma.hbm_to_vmem [thread:$0]  %s390, 256, %s392, [#allocation13], 64, 64, 4
        $region44: #{tpu_custom_call.1} parent=11 // pred_fallthru
          _
        // Predicated region
        $region45: #{tpu_custom_call.1} parent=11 // pred_check
          %p398 = pneg %p283
        $region46: #{tpu_custom_call.1} parent=11 // pred_check_branch
          %400 = sbr.rel (%p398) target = $region48
        $region47: #{tpu_custom_call.1} parent=11 // pred_region
          _
        $region48: #{tpu_custom_call.1} parent=11 // pred_fallthru
          _
      $region12: #{tpu_custom_call.1} parent=5 // pred_fallthru
        _
      %p401 = scmp.lt.s32.totalorder %s25, 2
      // Predicated region
      $region49: #{tpu_custom_call.1} parent=5 // pred_check
        %p402 = pneg %p401
      $region50: #{tpu_custom_call.1} parent=5 // pred_check_branch
        %404 = sbr.rel (%p402) target = $region52
      $region51: #{tpu_custom_call.1} parent=5 // pred_region
        // Predicated region
        $region53: #{tpu_custom_call.1} parent=51 // pred_check
          %p405 = pneg %p57
        $region54: #{tpu_custom_call.1} parent=51 // pred_check_branch
          %407 = sbr.rel (%p405) target = $region56
        $region55: #{tpu_custom_call.1} parent=51 // pred_region
          %p408 = scmp.lt.s32.totalorder %s32, 1
          %s409 = scalar_select %p408, %s32, 1
          %s410 = smul.addr %s409, 8
          %s411 = scalar_lea.vmem %s0, %s410
        $region56: #{tpu_custom_call.1} parent=51 // pred_fallthru
          _
        // Predicated region
        $region57: #{tpu_custom_call.1} parent=51 // pred_check
          %p412 = pneg %p83
        $region58: #{tpu_custom_call.1} parent=51 // pred_check_branch
          %414 = sbr.rel (%p412) target = $region60
        $region59: #{tpu_custom_call.1} parent=51 // pred_region
          %s415 = sand.u32 %s73, 1
          %s416 = scalar_lea.sflag [#allocation7], %s415
          %s417 = sand.u32 %s73, 1
          %s418 = scalar_lea.vmem [#allocation6], %s417
          %420 = vsyncadd %s416, 0
          %s421 = scalar_lea.hbm %s1, %s32
          %s423 = sshll.u32 %s421, 4
          %s424 = int_to_ptr.hbm [resolvable:$true] %s423
          %s425 = sshll.u32 %s418, 4
          %s426 = int_to_ptr.vmem [resolvable:$true] %s425
          %428 = dma.hbm_to_vmem [thread:$0]  %s424, 16, %s426, %s416
        $region60: #{tpu_custom_call.1} parent=51 // pred_fallthru
          _
      $region52: #{tpu_custom_call.1} parent=5 // pred_fallthru
        _
      %p429 = scmp.le.s32.totalorder 1, %s25
      %p430 = scmp.lt.s32.totalorder %s25, 3
      %p431 = pnand %p429, %p430
      %p432 = pneg %p431
      // Predicated region
      $region61: #{tpu_custom_call.1} parent=5 // pred_check
        _
      $region62: #{tpu_custom_call.1} parent=5 // pred_check_branch
        %434 = sbr.rel (%p431) target = $region64
      $region63: #{tpu_custom_call.1} parent=5 // pred_region
        %s435 = ssub.s32 %s25, 1
        %s436 = sand.u32 %s76, 1
        %s437 = scalar_lea.sflag [#allocation7], %s436
        %s438 = sand.u32 %s76, 1
        %s439 = scalar_lea.vmem [#allocation6], %s438
        // Predicated region
        $region65: #{tpu_custom_call.1} parent=63 // pred_check
          %p440 = pneg %p89
        $region66: #{tpu_custom_call.1} parent=63 // pred_check_branch
          %442 = sbr.rel (%p440) target = $region68
        $region67: #{tpu_custom_call.1} parent=63 // pred_region
          %444 = dma.done %s437, 16
        $region68: #{tpu_custom_call.1} parent=63 // pred_fallthru
          _
        // Predicated region
        $region69: #{tpu_custom_call.1} parent=63 // pred_check
          %p445 = pneg %p178
        $region70: #{tpu_custom_call.1} parent=63 // pred_check_branch
          %447 = sbr.rel (%p445) target = $region72
        $region71: #{tpu_custom_call.1} parent=63 // pred_region
          %449 = dma.done [#allocation10], 256
        $region72: #{tpu_custom_call.1} parent=63 // pred_fallthru
          _
        // Predicated region
        $region73: #{tpu_custom_call.1} parent=63 // pred_check
          %p450 = pneg %p199
        $region74: #{tpu_custom_call.1} parent=63 // pred_check_branch
          %452 = sbr.rel (%p450) target = $region76
        $region75: #{tpu_custom_call.1} parent=63 // pred_region
          %454 = dma.done [#allocation10], 256
        $region76: #{tpu_custom_call.1} parent=63 // pred_fallthru
          _
        // Predicated region
        $region77: #{tpu_custom_call.1} parent=63 // pred_check
          %p455 = pneg %p220
        $region78: #{tpu_custom_call.1} parent=63 // pred_check_branch
          %457 = sbr.rel (%p455) target = $region80
        $region79: #{tpu_custom_call.1} parent=63 // pred_region
          %459 = dma.done [#allocation13], 256
        $region80: #{tpu_custom_call.1} parent=63 // pred_fallthru
          _
        // Predicated region
        $region81: #{tpu_custom_call.1} parent=63 // pred_check
          %p460 = pneg %p262
        $region82: #{tpu_custom_call.1} parent=63 // pred_check_branch
          %462 = sbr.rel (%p460) target = $region84
        $region83: #{tpu_custom_call.1} parent=63 // pred_region
          %464 = dma.done [#allocation13], 256
        $region84: #{tpu_custom_call.1} parent=63 // pred_fallthru
          _
        %p465 = scmp.lt.s32.totalorder %s34, 1
        %s466 = scalar_select %p465, %s34, 1
        %s467 = smul.addr %s466, 8
        %s468 = scalar_lea.vmem %s0, %s467
        %p469 = pneg %p63
        %p470 = pneg %p60
        %s471 = sand.u32 %s76, 1
        %s472 = scalar_lea.sflag [#allocation7], %s471
        %s473 = sand.u32 %s76, 1
        %s474 = scalar_lea.vmem [#allocation6], %s473
        %p475 = pneg %p89
        %p476 = pneg %p86
        %p477 = scmp.lt.s32.totalorder %s35, 0
        %s478 = scalar_select %p477, %s35, 0
        %s479 = smul.addr %s478, 4
        %s480 = scalar_lea.vmem %s2, %s479
        %p481 = pneg %p115
        %p482 = pneg %p112
        %p483 = pneg %p136
        %p484 = pneg %p133
        %p485 = pneg %p157
        %p486 = pneg %p154
        %p487 = pneg %p178
        %p488 = pneg %p175
        %p489 = pneg %p199
        %p490 = pneg %p196
        %p491 = pneg %p220
        %p492 = pneg %p217
        %p493 = pneg %p241
        %p494 = pneg %p238
        %p495 = pneg %p262
        %p496 = pneg %p259
        %p497 = pneg %p283
        %p498 = pneg %p280
        %p499 = pneg %p311
        %p500 = pneg %p308
        %s501 = sand.u32 %s298, 1
        %s502 = scalar_lea.sflag [#allocation8], %s501
        %s503 = sand.u32 %s298, 1
        %s504 = smul.addr %s503, 8
        %s505 = scalar_lea.vmem [#allocation15], %s504
        %p506 = scmp.lt.s32.totalorder %s34, 1
        %s507 = scalar_select %p506, %s34, 1
        %s508 = smul.addr %s507, 8
        %s509 = scalar_lea.vmem %s0, %s508
        %p510 = scmp.lt.s32.totalorder %s35, 0
        %s511 = scalar_select %p510, %s35, 0
        %s512 = smul.addr %s511, 4
        %s513 = scalar_lea.vmem %s2, %s512
        %v515 = vld [vmem:[%s3] sm:$0x1]
        %p516 = scmp.eq.s32.totalorder %s35, 0
        // Predicated region
        $region85: #{tpu_custom_call.1} parent=63 // pred_check
          %p517 = pneg %p516
        $region86: #{tpu_custom_call.1} parent=63 // pred_check_branch
          %519 = sbr.rel (%p517) target = $region88
        $region87: #{tpu_custom_call.1} parent=63 // pred_region
          %v520 = vld [vmem:[%s509] sm:$0xff]
          %v521 = vmul.f32 %v520, %v520
          %vm522 = vcmask 261120
          %v523 = vsel %vm522, %v521, 0.0
          %524 = vadd.xlane.f32.xlu0 %v523
          %v525 = vpop.xlane.xlu0 %524
          %v526 = vrcp.pop 32.0
          %v527 = vmul.f32 32.0, %v526
          %v528 = vsub.f32 1.0, %v527
          %v529 = vmul.f32 %v526, %v528
          %v530 = vadd.f32 %v526, %v529
          %vm531 = vweird.f32 %v526
          %v532 = vsel %vm531, %v526, %v530
          %v533 = vmul.f32 %v525, %v532
          %v534 = vadd.f32 %v533, 1e-06
          %v535 = vrsqrt.pop %v534
          %v536 = vmul.f32 %v535, %v534
          %v537 = vmul.f32 %v536, %v535
          %v538 = vmul.f32 0.5, %v537
          %v539 = vsub.f32 1.5, %v538
          %v540 = vmul.f32 %v535, %v539
          %vm541 = vweird.f32 %v534
          %vm542 = vweird.f32 %v535
          %vm543 = vmor %vm541, %vm542
          %v544 = vsel %vm543, %v535, %v540
          %v545 = vmul.f32 %v520, %v544
          %v547 = vperm.slane %v515, 0
          %v549 = vmul.f32 %v545, %v547
          %v550 = vpack.c.bf16 %v549, %v549
          %v551 = vld [vmem:[%s4] sm:$0xf]
          %v552 = vld [vmem:[%s4 + $0x4] sm:$0xf]
          %v553 = vld [vmem:[%s4 + $0x8] sm:$0xf]
          %v554 = vld [vmem:[%s4 + $0xc] sm:$0xf]
          %v559 = vunpack.c.l.b16 %v551
          %v560 = vunpack.c.l.b16 %v552
          %v561 = vunpack.c.l.b16 %v553
          %v562 = vunpack.c.l.b16 %v554
          %v563 = vpack.c.b16 %v560, %v559
          %v564 = vpack.c.b16 %v562, %v561
          %v568 = vsel %vm522, %v550, 0
          %570 = vmatpush.bf16.msra.mxu0 0
          %571 = vmatpush.bf16.msra.mxu0 0
          %572 = vmatpush.bf16.msra.mxu0 0
          %573 = vmatpush.bf16.msra.mxu0 0
          %574 = vmatpush.bf16.msra.mxu0 0
          %575 = vmatpush.bf16.msra.mxu0 0
          %576 = vmatpush.bf16.msra.mxu0 %v564
          %577 = vmatpush.bf16.msra.mxu0 %v563
          %578 = vmatmul.bf16.gmra.mxu0 %v568
          %v579 = vpop.f32.mrf.mxu0
          %v580 = vadd.f32 0.0, %v579
          %v581 = vpop.f32.mrf.mxu0
          %582 = vdwg.mxu0
          %v583 = vpack.c.bf16 %v580, %v580
          %vm584 = vcmask 257024
          %585 = vst.msk [vmem:[#allocation2] sm:$0xf] %vm584, %v583
          %v586 = vld [vmem:[#allocation9] sm:$0xf]
          %v587 = vld [vmem:[#allocation9 + $0x4] sm:$0xf]
          %v588 = vld [vmem:[#allocation9 + $0x8] sm:$0xf]
          %v589 = vld [vmem:[#allocation9 + $0xc] sm:$0xf]
          %v594 = vunpack.c.l.b16 %v586
          %v595 = vunpack.c.l.b16 %v587
          %v596 = vunpack.c.l.b16 %v588
          %v597 = vunpack.c.l.b16 %v589
          %v598 = vpack.c.b16 %v595, %v594
          %v599 = vpack.c.b16 %v597, %v596
          %602 = vmatpush.bf16.msra.mxu0 0
          %603 = vmatpush.bf16.msra.mxu0 0
          %604 = vmatpush.bf16.msra.mxu0 0
          %605 = vmatpush.bf16.msra.mxu0 0
          %606 = vmatpush.bf16.msra.mxu0 0
          %607 = vmatpush.bf16.msra.mxu0 0
          %608 = vmatpush.bf16.msra.mxu0 %v599
          %609 = vmatpush.bf16.msra.mxu0 %v598
          %610 = vmatmul.bf16.gmra.mxu0 %v568
          %v611 = vpop.f32.mrf.mxu0
          %v612 = vadd.f32 0.0, %v611
          %v613 = vpop.f32.mrf.mxu0
          %614 = vdwg.mxu0
          %v615 = vpack.c.bf16 %v612, %v612
          %616 = vst.msk [vmem:[#allocation3] sm:$0xf] %vm584, %v615
          %v617 = vld [vmem:[#allocation11] sm:$0xf]
          %v618 = vld [vmem:[#allocation11 + $0x4] sm:$0xf]
          %v619 = vld [vmem:[#allocation11 + $0x8] sm:$0xf]
          %v620 = vld [vmem:[#allocation11 + $0xc] sm:$0xf]
          %v625 = vunpack.c.l.b16 %v617
          %v626 = vunpack.c.l.b16 %v618
          %v627 = vunpack.c.l.b16 %v619
          %v628 = vunpack.c.l.b16 %v620
          %v629 = vpack.c.b16 %v626, %v625
          %v630 = vpack.c.b16 %v628, %v627
          %633 = vmatpush.bf16.msra.mxu0 0
          %634 = vmatpush.bf16.msra.mxu0 0
          %635 = vmatpush.bf16.msra.mxu0 0
          %636 = vmatpush.bf16.msra.mxu0 0
          %637 = vmatpush.bf16.msra.mxu0 0
          %638 = vmatpush.bf16.msra.mxu0 0
          %639 = vmatpush.bf16.msra.mxu0 %v630
          %640 = vmatpush.bf16.msra.mxu0 %v629
          %641 = vmatmul.bf16.gmra.mxu0 %v568
          %v642 = vpop.f32.mrf.mxu0
          %v643 = vadd.f32 0.0, %v642
          %v644 = vpop.f32.mrf.mxu0
          %645 = vdwg.mxu0
          %v646 = vpack.c.bf16 %v643, %v643
          %647 = vst.msk [vmem:[#allocation4] sm:$0xf] %vm584, %v646
        $region88: #{tpu_custom_call.1} parent=63 // pred_fallthru
          _
        %s648 = smul.u32 %s35, 8
        %s649 = scalar_lea.vmem %s509, %s648
        %v650 = vld [vmem:[%s649] sm:$0xff]
        %s651 = sshra.s32 %s648, 3
        %s652 = sand.u32 %s648, 7
        %s653 = smul.addr %s651, 4
        %s654 = scalar_lea.vmem [#allocation2], %s653
        %v655 = vld [vmem:[%s654] sm:$0xf]
        %v656 = vld [vmem:[%s439] sm:$0x1]
        %658 = vrot.lane.b32.xlu0 %v655, 120
        %v659 = vpop.permute.xlu0 %658
        %v660 = vld [vmem:[#allocation3] sm:$0xf]
        %662 = vrot.lane.b32.xlu0 %v660, 120
        %v663 = vpop.permute.xlu0 %662
        %v665 = vld [vmem:[#allocation4] sm:$0xf]
        %667 = vrot.lane.b32.xlu0 %v665, 120
        %v668 = vpop.permute.xlu0 %667
        %v670 = vld [vmem:[%s513] sm:$0xf]
        %v671 = vld [vmem:[%s513 + $0x4] sm:$0xf]
        %v672 = vunpack.c.l.bf16 %v670
        %v673 = vunpack.c.l.bf16 %v671
        %674 = vxpose.xlu0.c.b16.start [1/8] %v660, 128
        %675 = vxpose.xlu0.c.b16.cont [2/8] 0, 128
        %676 = vxpose.xlu0.c.b16.cont [3/8] 0, 128
        %677 = vxpose.xlu0.c.b16.cont [4/8] 0, 128
        %678 = vxpose.xlu0.c.b16.cont [5/8] 0, 128
        %679 = vxpose.xlu0.c.b16.cont [6/8] 0, 128
        %680 = vxpose.xlu0.c.b16.cont [7/8] 0, 128
        %681 = vxpose.xlu0.c.b16.end [8/8] 0, 128
        %v682 = vpop.trf.xlu0
        %v683 = vpop.trf.xlu0
        %v684 = vpop.trf.xlu0
        %v685 = vpop.trf.xlu0
        %v686 = vpop.trf.xlu0
        %v687 = vpop.trf.xlu0
        %v688 = vpop.trf.xlu0
        %v689 = vpop.trf.xlu0
        %690 = vxpose.xlu0.c.b16.start [1/8] %v663, 128
        %691 = vxpose.xlu0.c.b16.cont [2/8] 0, 128
        %692 = vxpose.xlu0.c.b16.cont [3/8] 0, 128
        %693 = vxpose.xlu0.c.b16.cont [4/8] 0, 128
        %694 = vxpose.xlu0.c.b16.cont [5/8] 0, 128
        %695 = vxpose.xlu0.c.b16.cont [6/8] 0, 128
        %696 = vxpose.xlu0.c.b16.cont [7/8] 0, 128
        %697 = vxpose.xlu0.c.b16.end [8/8] 0, 128
        %v698 = vpop.trf.xlu0
        %v699 = vpop.trf.xlu0
        %v700 = vpop.trf.xlu0
        %v701 = vpop.trf.xlu0
        %v702 = vpop.trf.xlu0
        %v703 = vpop.trf.xlu0
        %v704 = vpop.trf.xlu0
        %v705 = vpop.trf.xlu0
        %vm706 = vcmask 64512
        %v708 = vsel %vm706, %v655, 0
        %vm710 = vcmask 1043456
        %v712 = vsel %vm710, %v682, 0
        %714 = vmatpush.bf16.msra.mxu0 0
        %715 = vmatpush.bf16.msra.mxu0 0
        %716 = vmatpush.bf16.msra.mxu0 0
        %717 = vmatpush.bf16.msra.mxu0 0
        %718 = vmatpush.bf16.msra.mxu0 0
        %719 = vmatpush.bf16.msra.mxu0 0
        %720 = vmatpush.bf16.msra.mxu0 0
        %721 = vmatpush.bf16.msra.mxu0 %v712
        %722 = vmatmul.bf16.gmra.mxu0 %v708
        %v723 = vpop.f32.mrf.mxu0
        %v724 = vadd.f32 %v672, %v723
        %v725 = vpop.f32.mrf.mxu0
        %726 = vdwg.mxu0
        %v728 = vsel %vm706, %v659, 0
        %v731 = vsel %vm710, %v698, 0
        %733 = vmatpush.bf16.msra.mxu0 0
        %734 = vmatpush.bf16.msra.mxu0 0
        %735 = vmatpush.bf16.msra.mxu0 0
        %736 = vmatpush.bf16.msra.mxu0 0
        %737 = vmatpush.bf16.msra.mxu0 0
        %738 = vmatpush.bf16.msra.mxu0 0
        %739 = vmatpush.bf16.msra.mxu0 0
        %740 = vmatpush.bf16.msra.mxu0 %v731
        %741 = vmatmul.bf16.gmra.mxu0 %v728
        %v742 = vpop.f32.mrf.mxu0
        %v743 = vadd.f32 %v673, %v742
        %v744 = vpop.f32.mrf.mxu0
        %745 = vdwg.mxu0
        %v747 = vperm.slane %v656, 0
        %v749 = vadd.f32 %v724, %v747
        %v750 = vadd.f32 %v743, %v747
        %v751 = vsel %vm706, %v749, -inf
        %752 = vmax.xlane.f32.xlu0 %v751
        %v753 = vpop.xlane.xlu0 %752
        %v754 = vsel %vm706, %v750, -inf
        %755 = vmax.xlane.f32.xlu0 %v754
        %v756 = vpop.xlane.xlu0 %755
        %v757 = vsub.f32 %v749, %v753
        %v758 = vsub.f32 %v750, %v756
        %v759 = vmul.f32 %v757, 1.442695
        %v760 = vpow.pop %v759
        %v761 = vmul.f32 %v758, 1.442695
        %v762 = vpow.pop %v761
        %v763 = vsel %vm706, %v760, 0.0
        %764 = vadd.xlane.f32.xlu0 %v763
        %v765 = vpop.xlane.xlu0 %764
        %v766 = vsel %vm706, %v762, 0.0
        %767 = vadd.xlane.f32.xlu0 %v766
        %v768 = vpop.xlane.xlu0 %767
        %v769 = vrcp.pop %v765
        %v770 = vrcp.pop %v768
        %v771 = vmul.f32 %v760, %v769
        %v772 = vmul.f32 %v762, %v770
        %v773 = vpack.c.bf16 %v771, %v771
        %v774 = vpack.c.bf16 %v772, %v772
        %775 = vxpose.xlu0.c.b16.start [1/8] %v665, 128
        %776 = vxpose.xlu0.c.b16.cont [2/8] 0, 128
        %777 = vxpose.xlu0.c.b16.cont [3/8] 0, 128
        %778 = vxpose.xlu0.c.b16.cont [4/8] 0, 128
        %779 = vxpose.xlu0.c.b16.cont [5/8] 0, 128
        %780 = vxpose.xlu0.c.b16.cont [6/8] 0, 128
        %781 = vxpose.xlu0.c.b16.cont [7/8] 0, 128
        %782 = vxpose.xlu0.c.b16.end [8/8] 0, 128
        %v783 = vpop.trf.xlu0
        %v784 = vpop.trf.xlu0
        %v785 = vpop.trf.xlu0
        %v786 = vpop.trf.xlu0
        %v787 = vpop.trf.xlu0
        %v788 = vpop.trf.xlu0
        %v789 = vpop.trf.xlu0
        %v790 = vpop.trf.xlu0
        %791 = vxpose.xlu0.c.b16.start [1/8] %v668, 128
        %792 = vxpose.xlu0.c.b16.cont [2/8] 0, 128
        %793 = vxpose.xlu0.c.b16.cont [3/8] 0, 128
        %794 = vxpose.xlu0.c.b16.cont [4/8] 0, 128
        %795 = vxpose.xlu0.c.b16.cont [5/8] 0, 128
        %796 = vxpose.xlu0.c.b16.cont [6/8] 0, 128
        %797 = vxpose.xlu0.c.b16.cont [7/8] 0, 128
        %798 = vxpose.xlu0.c.b16.end [8/8] 0, 128
        %v799 = vpop.trf.xlu0
        %v800 = vpop.trf.xlu0
        %v801 = vpop.trf.xlu0
        %v802 = vpop.trf.xlu0
        %v803 = vpop.trf.xlu0
        %v804 = vpop.trf.xlu0
        %v805 = vpop.trf.xlu0
        %v806 = vpop.trf.xlu0
        %v808 = vsel %vm706, %v783, 0
        %v811 = vsel %vm706, %v773, 0
        %813 = vmatpush.bf16.xpose.msra.mxu0 0
        %814 = vmatpush.bf16.xpose.msra.mxu0 0
        %815 = vmatpush.bf16.xpose.msra.mxu0 0
        %816 = vmatpush.bf16.xpose.msra.mxu0 0
        %817 = vmatpush.bf16.xpose.msra.mxu0 0
        %818 = vmatpush.bf16.xpose.msra.mxu0 0
        %819 = vmatpush.bf16.xpose.msra.mxu0 0
        %820 = vmatpush.bf16.xpose.msra.mxu0 %v811
        %821 = vmatmul.bf16.gmra.mxu0 %v808
        %v822 = vpop.f32.mrf.mxu0
        %v823 = vadd.f32 0.0, %v822
        %v824 = vpop.f32.mrf.mxu0
        %825 = vdwg.mxu0
        %v827 = vsel %vm706, %v799, 0
        %v830 = vsel %vm706, %v774, 0
        %832 = vmatpush.bf16.xpose.msra.mxu0 0
        %833 = vmatpush.bf16.xpose.msra.mxu0 0
        %834 = vmatpush.bf16.xpose.msra.mxu0 0
        %835 = vmatpush.bf16.xpose.msra.mxu0 0
        %836 = vmatpush.bf16.xpose.msra.mxu0 0
        %837 = vmatpush.bf16.xpose.msra.mxu0 0
        %838 = vmatpush.bf16.xpose.msra.mxu0 0
        %839 = vmatpush.bf16.xpose.msra.mxu0 %v830
        %840 = vmatmul.bf16.gmra.mxu0 %v827
        %v841 = vpop.f32.mrf.mxu0
        %v842 = vadd.f32 0.0, %v841
        %v843 = vpop.f32.mrf.mxu0
        %844 = vdwg.mxu0
        %845 = vxpose.xlu0.b32.start [1/16] %v823, 128
        %846 = vxpose.xlu0.b32.cont [2/16] 0.0, 128
        %847 = vxpose.xlu0.b32.cont [3/16] 0.0, 128
        %848 = vxpose.xlu0.b32.cont [4/16] 0.0, 128
        %849 = vxpose.xlu0.b32.cont [5/16] 0.0, 128
        %850 = vxpose.xlu0.b32.cont [6/16] 0.0, 128
        %851 = vxpose.xlu0.b32.cont [7/16] 0.0, 128
        %852 = vxpose.xlu0.b32.cont [8/16] 0.0, 128
        %853 = vxpose.xlu0.b32.cont [9/16] 0.0, 128
        %854 = vxpose.xlu0.b32.cont [10/16] 0.0, 128
        %855 = vxpose.xlu0.b32.cont [11/16] 0.0, 128
        %856 = vxpose.xlu0.b32.cont [12/16] 0.0, 128
        %857 = vxpose.xlu0.b32.cont [13/16] 0.0, 128
        %858 = vxpose.xlu0.b32.cont [14/16] 0.0, 128
        %859 = vxpose.xlu0.b32.cont [15/16] 0.0, 128
        %860 = vxpose.xlu0.b32.end [16/16] 0.0, 128
        %v861 = vpop.trf.xlu0
        %v862 = vpop.trf.xlu0
        %v863 = vpop.trf.xlu0
        %v864 = vpop.trf.xlu0
        %v865 = vpop.trf.xlu0
        %v866 = vpop.trf.xlu0
        %v867 = vpop.trf.xlu0
        %v868 = vpop.trf.xlu0
        %v869 = vpop.trf.xlu0
        %v870 = vpop.trf.xlu0
        %v871 = vpop.trf.xlu0
        %v872 = vpop.trf.xlu0
        %v873 = vpop.trf.xlu0
        %v874 = vpop.trf.xlu0
        %v875 = vpop.trf.xlu0
        %v876 = vpop.trf.xlu0
        %877 = vxpose.xlu0.b32.start [1/16] %v842, 128
        %878 = vxpose.xlu0.b32.cont [2/16] 0.0, 128
        %879 = vxpose.xlu0.b32.cont [3/16] 0.0, 128
        %880 = vxpose.xlu0.b32.cont [4/16] 0.0, 128
        %881 = vxpose.xlu0.b32.cont [5/16] 0.0, 128
        %882 = vxpose.xlu0.b32.cont [6/16] 0.0, 128
        %883 = vxpose.xlu0.b32.cont [7/16] 0.0, 128
        %884 = vxpose.xlu0.b32.cont [8/16] 0.0, 128
        %885 = vxpose.xlu0.b32.cont [9/16] 0.0, 128
        %886 = vxpose.xlu0.b32.cont [10/16] 0.0, 128
        %887 = vxpose.xlu0.b32.cont [11/16] 0.0, 128
        %888 = vxpose.xlu0.b32.cont [12/16] 0.0, 128
        %889 = vxpose.xlu0.b32.cont [13/16] 0.0, 128
        %890 = vxpose.xlu0.b32.cont [14/16] 0.0, 128
        %891 = vxpose.xlu0.b32.cont [15/16] 0.0, 128
        %892 = vxpose.xlu0.b32.end [16/16] 0.0, 128
        %v893 = vpop.trf.xlu0
        %v894 = vpop.trf.xlu0
        %v895 = vpop.trf.xlu0
        %v896 = vpop.trf.xlu0
        %v897 = vpop.trf.xlu0
        %v898 = vpop.trf.xlu0
        %v899 = vpop.trf.xlu0
        %v900 = vpop.trf.xlu0
        %v901 = vpop.trf.xlu0
        %v902 = vpop.trf.xlu0
        %v903 = vpop.trf.xlu0
        %v904 = vpop.trf.xlu0
        %v905 = vpop.trf.xlu0
        %v906 = vpop.trf.xlu0
        %v907 = vpop.trf.xlu0
        %v908 = vpop.trf.xlu0
        %v909 = vrot.slane %v861, 4
        %vm910 = vcmask 1047556
        %v911 = vsel %vm910, 0.0, %v909
        %v913 = vunpack.c.l.s4 1983009808
        %v914 = vunpack.c.0.s8 %v913
        %v915 = vperm.slane %v861, %v914
        %v917 = vunpack.c.l.s4 1983009808
        %v918 = vunpack.c.0.s8 %v917
        %v919 = vperm.slane %v911, %v918
        %v920 = vrot.slane %v893, 4
        %v921 = vsel %vm910, 0.0, %v920
        %v923 = vunpack.c.l.s4 1983009808
        %v924 = vunpack.c.0.s8 %v923
        %v925 = vperm.slane %v893, %v924
        %v927 = vunpack.c.l.s4 1983009808
        %v928 = vunpack.c.0.s8 %v927
        %v929 = vperm.slane %v921, %v928
        %v930 = vrot.slane %v925, 4
        %v931 = vsel %vm910, %v930, %v915
        %v932 = vrot.slane %v915, 4
        %v933 = vsel %vm910, %v925, %v932
        %v935 = vunpack.c.l.s4 1934713408
        %v936 = vunpack.c.0.s8 %v935
        %v937 = vperm.slane %v931, %v936
        %v939 = vunpack.c.l.s4 1934713408
        %v940 = vunpack.c.0.s8 %v939
        %v941 = vperm.slane %v933, %v940
        %v942 = vrot.slane %v929, 4
        %v943 = vsel %vm910, %v942, %v919
        %v944 = vrot.slane %v919, 4
        %v945 = vsel %vm910, %v929, %v944
        %v947 = vunpack.c.l.s4 1934713408
        %v948 = vunpack.c.0.s8 %v947
        %v949 = vperm.slane %v943, %v948
        %v951 = vunpack.c.l.s4 1934713408
        %v952 = vunpack.c.0.s8 %v951
        %v953 = vperm.slane %v945, %v952
        %v954 = vrot.slane %v937, 4
        %v955 = vsel %vm910, 0.0, %v954
        %v956 = vrot.slane %v941, 4
        %v957 = vsel %vm910, 0.0, %v956
        %v958 = vrot.slane %v949, 4
        %v959 = vsel %vm910, 0.0, %v958
        %v960 = vrot.slane %v953, 4
        %v961 = vsel %vm910, 0.0, %v960
        %v962 = vsel %vm910, %v956, %v937
        %v964 = vunpack.c.l.s4 1983009808
        %v965 = vunpack.c.0.s8 %v964
        %v966 = vperm.slane %v962, %v965
        %v967 = vrot.slane %v957, 4
        %v968 = vsel %vm910, %v967, %v955
        %v970 = vunpack.c.l.s4 1983009808
        %v971 = vunpack.c.0.s8 %v970
        %v972 = vperm.slane %v968, %v971
        %v973 = vsel %vm910, %v960, %v949
        %v975 = vunpack.c.l.s4 1983009808
        %v976 = vunpack.c.0.s8 %v975
        %v977 = vperm.slane %v973, %v976
        %v978 = vrot.slane %v961, 4
        %v979 = vsel %vm910, %v978, %v959
        %v981 = vunpack.c.l.s4 1983009808
        %v982 = vunpack.c.0.s8 %v981
        %v983 = vperm.slane %v979, %v982
        %v984 = vrot.slane %v972, 4
        %v985 = vsel %vm910, %v984, %v966
        %v987 = vunpack.c.l.s4 1934713408
        %v988 = vunpack.c.0.s8 %v987
        %v989 = vperm.slane %v985, %v988
        %v990 = vrot.slane %v983, 4
        %v991 = vsel %vm910, %v990, %v977
        %v993 = vunpack.c.l.s4 1934713408
        %v994 = vunpack.c.0.s8 %v993
        %v995 = vperm.slane %v991, %v994
        %v996 = vrot.slane %v995, 4
        %v997 = vsel %vm910, %v996, %v989
        %v998 = vrot.slane %v989, 4
        %v999 = vsel %vm910, %v995, %v998
        %1001 = vrot.lane.b32.xlu0 %v999, 8
        %v1002 = vpop.permute.xlu0 %1001
        %v1004 = vsel %vm706, %v997, %v1002
        %v1005 = vpack.c.bf16 %v1004, %v1004
        %vm1006 = vcmask 125952
        %1007 = vst.msk [vmem:[#allocation5] sm:$0xf] %vm1006, %v1005
        %v1008 = vld [vmem:[#allocation3] sm:$0xf]
        %1010 = vrot.lane.b32.xlu0 %v1008, 120
        %v1011 = vpop.permute.xlu0 %1010
        %v1012 = vld [vmem:[#allocation4] sm:$0xf]
        %1014 = vrot.lane.b32.xlu0 %v1012, 120
        %v1015 = vpop.permute.xlu0 %1014
        %s1016 = scalar_lea.vmem %s513, 8
        %v1017 = vld [vmem:[%s1016] sm:$0xf]
        %v1018 = vld [vmem:[%s1016 + $0x4] sm:$0xf]
        %v1019 = vunpack.c.l.bf16 %v1017
        %v1020 = vunpack.c.l.bf16 %v1018
        %v1021 = vunpack.c.l.b16 %v1008
        %v1022 = vunpack.c.l.b16 %v1011
        %v1023 = vpack.c.b16 %v1021, %v1021
        %v1024 = vpack.c.b16 %v1022, %v1022
        %1025 = vrot.lane.b32.xlu0 %v1023, 112
        %v1026 = vpop.permute.xlu0 %1025
        %1027 = vrot.lane.b32.xlu0 %v1024, 112
        %v1028 = vpop.permute.xlu0 %1027
        %1031 = vxpose.xlu0.c.b16.start [1/8] %v1026, 128
        %1032 = vxpose.xlu0.c.b16.cont [2/8] 0, 128
        %1033 = vxpose.xlu0.c.b16.cont [3/8] 0, 128
        %1034 = vxpose.xlu0.c.b16.cont [4/8] 0, 128
        %1035 = vxpose.xlu0.c.b16.cont [5/8] 0, 128
        %1036 = vxpose.xlu0.c.b16.cont [6/8] 0, 128
        %1037 = vxpose.xlu0.c.b16.cont [7/8] 0, 128
        %1038 = vxpose.xlu0.c.b16.end [8/8] 0, 128
        %v1039 = vpop.trf.xlu0
        %v1040 = vpop.trf.xlu0
        %v1041 = vpop.trf.xlu0
        %v1042 = vpop.trf.xlu0
        %v1043 = vpop.trf.xlu0
        %v1044 = vpop.trf.xlu0
        %v1045 = vpop.trf.xlu0
        %v1046 = vpop.trf.xlu0
        %1047 = vxpose.xlu0.c.b16.start [1/8] %v1028, 128
        %1048 = vxpose.xlu0.c.b16.cont [2/8] 0, 128
        %1049 = vxpose.xlu0.c.b16.cont [3/8] 0, 128
        %1050 = vxpose.xlu0.c.b16.cont [4/8] 0, 128
        %1051 = vxpose.xlu0.c.b16.cont [5/8] 0, 128
        %1052 = vxpose.xlu0.c.b16.cont [6/8] 0, 128
        %1053 = vxpose.xlu0.c.b16.cont [7/8] 0, 128
        %1054 = vxpose.xlu0.c.b16.end [8/8] 0, 128
        %v1055 = vpop.trf.xlu0
        %v1056 = vpop.trf.xlu0
        %v1057 = vpop.trf.xlu0
        %v1058 = vpop.trf.xlu0
        %v1059 = vpop.trf.xlu0
        %v1060 = vpop.trf.xlu0
        %v1061 = vpop.trf.xlu0
        %v1062 = vpop.trf.xlu0
        %v1063 = vunpack.c.l.b16 %v655
        %v1064 = vpack.c.b16 %v1063, %v1063
        %1065 = vrot.lane.b32.xlu0 %v1064, 112
        %v1066 = vpop.permute.xlu0 %1065
        %v1068 = vsel %vm706, %v1066, 0
        %v1071 = vsel %vm710, %v1039, 0
        %1073 = vmatpush.bf16.msra.mxu0 0
        %1074 = vmatpush.bf16.msra.mxu0 0
        %1075 = vmatpush.bf16.msra.mxu0 0
        %1076 = vmatpush.bf16.msra.mxu0 0
        %1077 = vmatpush.bf16.msra.mxu0 0
        %1078 = vmatpush.bf16.msra.mxu0 0
        %1079 = vmatpush.bf16.msra.mxu0 0
        %1080 = vmatpush.bf16.msra.mxu0 %v1071
        %1081 = vmatmul.bf16.gmra.mxu0 %v1068
        %v1082 = vpop.f32.mrf.mxu0
        %v1083 = vadd.f32 %v1019, %v1082
        %v1084 = vpop.f32.mrf.mxu0
        %1085 = vdwg.mxu0
        %v1086 = vunpack.c.l.b16 %v659
        %v1087 = vpack.c.b16 %v1086, %v1086
        %1088 = vrot.lane.b32.xlu0 %v1087, 112
        %v1089 = vpop.permute.xlu0 %1088
        %v1091 = vsel %vm706, %v1089, 0
        %v1094 = vsel %vm710, %v1055, 0
        %1096 = vmatpush.bf16.msra.mxu0 0
        %1097 = vmatpush.bf16.msra.mxu0 0
        %1098 = vmatpush.bf16.msra.mxu0 0
        %1099 = vmatpush.bf16.msra.mxu0 0
        %1100 = vmatpush.bf16.msra.mxu0 0
        %1101 = vmatpush.bf16.msra.mxu0 0
        %1102 = vmatpush.bf16.msra.mxu0 0
        %1103 = vmatpush.bf16.msra.mxu0 %v1094
        %1104 = vmatmul.bf16.gmra.mxu0 %v1091
        %v1105 = vpop.f32.mrf.mxu0
        %v1106 = vadd.f32 %v1020, %v1105
        %v1107 = vpop.f32.mrf.mxu0
        %1108 = vdwg.mxu0
        %v1109 = vadd.f32 %v1083, %v747
        %v1110 = vadd.f32 %v1106, %v747
        %v1111 = vsel %vm706, %v1109, -inf
        %1112 = vmax.xlane.f32.xlu0 %v1111
        %v1113 = vpop.xlane.xlu0 %1112
        %v1114 = vsel %vm706, %v1110, -inf
        %1115 = vmax.xlane.f32.xlu0 %v1114
        %v1116 = vpop.xlane.xlu0 %1115
        %v1117 = vsub.f32 %v1109, %v1113
        %v1118 = vsub.f32 %v1110, %v1116
        %v1119 = vmul.f32 %v1117, 1.442695
        %v1120 = vpow.pop %v1119
        %v1121 = vmul.f32 %v1118, 1.442695
        %v1122 = vpow.pop %v1121
        %v1123 = vsel %vm706, %v1120, 0.0
        %1124 = vadd.xlane.f32.xlu0 %v1123
        %v1125 = vpop.xlane.xlu0 %1124
        %v1126 = vsel %vm706, %v1122, 0.0
        %1127 = vadd.xlane.f32.xlu0 %v1126
        %v1128 = vpop.xlane.xlu0 %1127
        %v1129 = vrcp.pop %v1125
        %v1130 = vrcp.pop %v1128
        %v1131 = vmul.f32 %v1120, %v1129
        %v1132 = vmul.f32 %v1122, %v1130
        %v1133 = vpack.c.bf16 %v1131, %v1131
        %v1134 = vpack.c.bf16 %v1132, %v1132
        %v1135 = vunpack.c.l.b16 %v1012
        %v1136 = vunpack.c.l.b16 %v1015
        %v1137 = vpack.c.b16 %v1135, %v1135
        %v1138 = vpack.c.b16 %v1136, %v1136
        %1139 = vrot.lane.b32.xlu0 %v1137, 112
        %v1140 = vpop.permute.xlu0 %1139
        %1141 = vrot.lane.b32.xlu0 %v1138, 112
        %v1142 = vpop.permute.xlu0 %1141
        %1145 = vxpose.xlu0.c.b16.start [1/8] %v1140, 128
        %1146 = vxpose.xlu0.c.b16.cont [2/8] 0, 128
        %1147 = vxpose.xlu0.c.b16.cont [3/8] 0, 128
        %1148 = vxpose.xlu0.c.b16.cont [4/8] 0, 128
        %1149 = vxpose.xlu0.c.b16.cont [5/8] 0, 128
        %1150 = vxpose.xlu0.c.b16.cont [6/8] 0, 128
        %1151 = vxpose.xlu0.c.b16.cont [7/8] 0, 128
        %1152 = vxpose.xlu0.c.b16.end [8/8] 0, 128
        %v1153 = vpop.trf.xlu0
        %v1154 = vpop.trf.xlu0
        %v1155 = vpop.trf.xlu0
        %v1156 = vpop.trf.xlu0
        %v1157 = vpop.trf.xlu0
        %v1158 = vpop.trf.xlu0
        %v1159 = vpop.trf.xlu0
        %v1160 = vpop.trf.xlu0
        %1161 = vxpose.xlu0.c.b16.start [1/8] %v1142, 128
        %1162 = vxpose.xlu0.c.b16.cont [2/8] 0, 128
        %1163 = vxpose.xlu0.c.b16.cont [3/8] 0, 128
        %1164 = vxpose.xlu0.c.b16.cont [4/8] 0, 128
        %1165 = vxpose.xlu0.c.b16.cont [5/8] 0, 128
        %1166 = vxpose.xlu0.c.b16.cont [6/8] 0, 128
        %1167 = vxpose.xlu0.c.b16.cont [7/8] 0, 128
        %1168 = vxpose.xlu0.c.b16.end [8/8] 0, 128
        %v1169 = vpop.trf.xlu0
        %v1170 = vpop.trf.xlu0
        %v1171 = vpop.trf.xlu0
        %v1172 = vpop.trf.xlu0
        %v1173 = vpop.trf.xlu0
        %v1174 = vpop.trf.xlu0
        %v1175 = vpop.trf.xlu0
        %v1176 = vpop.trf.xlu0
        %v1178 = vsel %vm706, %v1153, 0
        %v1181 = vsel %vm706, %v1133, 0
        %1183 = vmatpush.bf16.xpose.msra.mxu0 0
        %1184 = vmatpush.bf16.xpose.msra.mxu0 0
        %1185 = vmatpush.bf16.xpose.msra.mxu0 0
        %1186 = vmatpush.bf16.xpose.msra.mxu0 0
        %1187 = vmatpush.bf16.xpose.msra.mxu0 0
        %1188 = vmatpush.bf16.xpose.msra.mxu0 0
        %1189 = vmatpush.bf16.xpose.msra.mxu0 0
        %1190 = vmatpush.bf16.xpose.msra.mxu0 %v1181
        %1191 = vmatmul.bf16.gmra.mxu0 %v1178
        %v1192 = vpop.f32.mrf.mxu0
        %v1193 = vadd.f32 0.0, %v1192
        %v1194 = vpop.f32.mrf.mxu0
        %1195 = vdwg.mxu0
        %v1197 = vsel %vm706, %v1169, 0
        %v1200 = vsel %vm706, %v1134, 0
        %1202 = vmatpush.bf16.xpose.msra.mxu0 0
        %1203 = vmatpush.bf16.xpose.msra.mxu0 0
        %1204 = vmatpush.bf16.xpose.msra.mxu0 0
        %1205 = vmatpush.bf16.xpose.msra.mxu0 0
        %1206 = vmatpush.bf16.xpose.msra.mxu0 0
        %1207 = vmatpush.bf16.xpose.msra.mxu0 0
        %1208 = vmatpush.bf16.xpose.msra.mxu0 0
        %1209 = vmatpush.bf16.xpose.msra.mxu0 %v1200
        %1210 = vmatmul.bf16.gmra.mxu0 %v1197
        %v1211 = vpop.f32.mrf.mxu0
        %v1212 = vadd.f32 0.0, %v1211
        %v1213 = vpop.f32.mrf.mxu0
        %1214 = vdwg.mxu0
        %1215 = vxpose.xlu0.b32.start [1/16] %v1193, 128
        %1216 = vxpose.xlu0.b32.cont [2/16] 0.0, 128
        %1217 = vxpose.xlu0.b32.cont [3/16] 0.0, 128
        %1218 = vxpose.xlu0.b32.cont [4/16] 0.0, 128
        %1219 = vxpose.xlu0.b32.cont [5/16] 0.0, 128
        %1220 = vxpose.xlu0.b32.cont [6/16] 0.0, 128
        %1221 = vxpose.xlu0.b32.cont [7/16] 0.0, 128
        %1222 = vxpose.xlu0.b32.cont [8/16] 0.0, 128
        %1223 = vxpose.xlu0.b32.cont [9/16] 0.0, 128
        %1224 = vxpose.xlu0.b32.cont [10/16] 0.0, 128
        %1225 = vxpose.xlu0.b32.cont [11/16] 0.0, 128
        %1226 = vxpose.xlu0.b32.cont [12/16] 0.0, 128
        %1227 = vxpose.xlu0.b32.cont [13/16] 0.0, 128
        %1228 = vxpose.xlu0.b32.cont [14/16] 0.0, 128
        %1229 = vxpose.xlu0.b32.cont [15/16] 0.0, 128
        %1230 = vxpose.xlu0.b32.end [16/16] 0.0, 128
        %v1231 = vpop.trf.xlu0
        %v1232 = vpop.trf.xlu0
        %v1233 = vpop.trf.xlu0
        %v1234 = vpop.trf.xlu0
        %v1235 = vpop.trf.xlu0
        %v1236 = vpop.trf.xlu0
        %v1237 = vpop.trf.xlu0
        %v1238 = vpop.trf.xlu0
        %v1239 = vpop.trf.xlu0
        %v1240 = vpop.trf.xlu0
        %v1241 = vpop.trf.xlu0
        %v1242 = vpop.trf.xlu0
        %v1243 = vpop.trf.xlu0
        %v1244 = vpop.trf.xlu0
        %v1245 = vpop.trf.xlu0
        %v1246 = vpop.trf.xlu0
        %1247 = vxpose.xlu0.b32.start [1/16] %v1212, 128
        %1248 = vxpose.xlu0.b32.cont [2/16] 0.0, 128
        %1249 = vxpose.xlu0.b32.cont [3/16] 0.0, 128
        %1250 = vxpose.xlu0.b32.cont [4/16] 0.0, 128
        %1251 = vxpose.xlu0.b32.cont [5/16] 0.0, 128
        %1252 = vxpose.xlu0.b32.cont [6/16] 0.0, 128
        %1253 = vxpose.xlu0.b32.cont [7/16] 0.0, 128
        %1254 = vxpose.xlu0.b32.cont [8/16] 0.0, 128
        %1255 = vxpose.xlu0.b32.cont [9/16] 0.0, 128
        %1256 = vxpose.xlu0.b32.cont [10/16] 0.0, 128
        %1257 = vxpose.xlu0.b32.cont [11/16] 0.0, 128
        %1258 = vxpose.xlu0.b32.cont [12/16] 0.0, 128
        %1259 = vxpose.xlu0.b32.cont [13/16] 0.0, 128
        %1260 = vxpose.xlu0.b32.cont [14/16] 0.0, 128
        %1261 = vxpose.xlu0.b32.cont [15/16] 0.0, 128
        %1262 = vxpose.xlu0.b32.end [16/16] 0.0, 128
        %v1263 = vpop.trf.xlu0
        %v1264 = vpop.trf.xlu0
        %v1265 = vpop.trf.xlu0
        %v1266 = vpop.trf.xlu0
        %v1267 = vpop.trf.xlu0
        %v1268 = vpop.trf.xlu0
        %v1269 = vpop.trf.xlu0
        %v1270 = vpop.trf.xlu0
        %v1271 = vpop.trf.xlu0
        %v1272 = vpop.trf.xlu0
        %v1273 = vpop.trf.xlu0
        %v1274 = vpop.trf.xlu0
        %v1275 = vpop.trf.xlu0
        %v1276 = vpop.trf.xlu0
        %v1277 = vpop.trf.xlu0
        %v1278 = vpop.trf.xlu0
        %v1279 = vrot.slane %v1231, 4
        %v1280 = vsel %vm910, 0.0, %v1279
        %v1282 = vunpack.c.l.s4 1983009808
        %v1283 = vunpack.c.0.s8 %v1282
        %v1284 = vperm.slane %v1231, %v1283
        %v1286 = vunpack.c.l.s4 1983009808
        %v1287 = vunpack.c.0.s8 %v1286
        %v1288 = vperm.slane %v1280, %v1287
        %v1289 = vrot.slane %v1263, 4
        %v1290 = vsel %vm910, 0.0, %v1289
        %v1292 = vunpack.c.l.s4 1983009808
        %v1293 = vunpack.c.0.s8 %v1292
        %v1294 = vperm.slane %v1263, %v1293
        %v1296 = vunpack.c.l.s4 1983009808
        %v1297 = vunpack.c.0.s8 %v1296
        %v1298 = vperm.slane %v1290, %v1297
        %v1299 = vrot.slane %v1294, 4
        %v1300 = vsel %vm910, %v1299, %v1284
        %v1301 = vrot.slane %v1284, 4
        %v1302 = vsel %vm910, %v1294, %v1301
        %v1304 = vunpack.c.l.s4 1934713408
        %v1305 = vunpack.c.0.s8 %v1304
        %v1306 = vperm.slane %v1300, %v1305
        %v1308 = vunpack.c.l.s4 1934713408
        %v1309 = vunpack.c.0.s8 %v1308
        %v1310 = vperm.slane %v1302, %v1309
        %v1311 = vrot.slane %v1298, 4
        %v1312 = vsel %vm910, %v1311, %v1288
        %v1313 = vrot.slane %v1288, 4
        %v1314 = vsel %vm910, %v1298, %v1313
        %v1316 = vunpack.c.l.s4 1934713408
        %v1317 = vunpack.c.0.s8 %v1316
        %v1318 = vperm.slane %v1312, %v1317
        %v1320 = vunpack.c.l.s4 1934713408
        %v1321 = vunpack.c.0.s8 %v1320
        %v1322 = vperm.slane %v1314, %v1321
        %v1323 = vrot.slane %v1306, 4
        %v1324 = vsel %vm910, 0.0, %v1323
        %v1325 = vrot.slane %v1310, 4
        %v1326 = vsel %vm910, 0.0, %v1325
        %v1327 = vrot.slane %v1318, 4
        %v1328 = vsel %vm910, 0.0, %v1327
        %v1329 = vrot.slane %v1322, 4
        %v1330 = vsel %vm910, 0.0, %v1329
        %v1331 = vsel %vm910, %v1325, %v1306
        %v1333 = vunpack.c.l.s4 1983009808
        %v1334 = vunpack.c.0.s8 %v1333
        %v1335 = vperm.slane %v1331, %v1334
        %v1336 = vrot.slane %v1326, 4
        %v1337 = vsel %vm910, %v1336, %v1324
        %v1339 = vunpack.c.l.s4 1983009808
        %v1340 = vunpack.c.0.s8 %v1339
        %v1341 = vperm.slane %v1337, %v1340
        %v1342 = vsel %vm910, %v1329, %v1318
        %v1344 = vunpack.c.l.s4 1983009808
        %v1345 = vunpack.c.0.s8 %v1344
        %v1346 = vperm.slane %v1342, %v1345
        %v1347 = vrot.slane %v1330, 4
        %v1348 = vsel %vm910, %v1347, %v1328
        %v1350 = vunpack.c.l.s4 1983009808
        %v1351 = vunpack.c.0.s8 %v1350
        %v1352 = vperm.slane %v1348, %v1351
        %v1353 = vrot.slane %v1341, 4
        %v1354 = vsel %vm910, %v1353, %v1335
        %v1356 = vunpack.c.l.s4 1934713408
        %v1357 = vunpack.c.0.s8 %v1356
        %v1358 = vperm.slane %v1354, %v1357
        %v1359 = vrot.slane %v1352, 4
        %v1360 = vsel %vm910, %v1359, %v1346
        %v1362 = vunpack.c.l.s4 1934713408
        %v1363 = vunpack.c.0.s8 %v1362
        %v1364 = vperm.slane %v1360, %v1363
        %v1365 = vrot.slane %v1364, 4
        %v1366 = vsel %vm910, %v1365, %v1358
        %v1367 = vrot.slane %v1358, 4
        %v1368 = vsel %vm910, %v1364, %v1367
        %1370 = vrot.lane.b32.xlu0 %v1368, 8
        %v1371 = vpop.permute.xlu0 %1370
        %v1373 = vsel %vm706, %v1366, %v1371
        %v1374 = vpack.c.bf16 %v1373, %v1373
        %1376 = vrot.lane.b32.xlu0 %v1374, 16
        %v1377 = vpop.permute.xlu0 %1376
        %vm1379 = vcmask 257152
        %1380 = vst.msk [vmem:[#allocation5] sm:$0xf] %vm1379, %v1377
        %v1381 = vld [vmem:[#allocation5] sm:$0xf]
        %v1382 = vld [vmem:[#allocation12] sm:$0xf]
        %v1383 = vld [vmem:[#allocation12 + $0x4] sm:$0xf]
        %v1384 = vld [vmem:[#allocation12 + $0x8] sm:$0xf]
        %v1385 = vld [vmem:[#allocation12 + $0xc] sm:$0xf]
        %v1390 = vunpack.c.l.b16 %v1382
        %v1391 = vunpack.c.l.b16 %v1383
        %v1392 = vunpack.c.l.b16 %v1384
        %v1393 = vunpack.c.l.b16 %v1385
        %v1394 = vpack.c.b16 %v1391, %v1390
        %v1395 = vpack.c.b16 %v1393, %v1392
        %vm1398 = vcmask 261120
        %v1400 = vsel %vm1398, %v1381, 0
        %1402 = vmatpush.bf16.msra.mxu0 0
        %1403 = vmatpush.bf16.msra.mxu0 0
        %1404 = vmatpush.bf16.msra.mxu0 0
        %1405 = vmatpush.bf16.msra.mxu0 0
        %1406 = vmatpush.bf16.msra.mxu0 0
        %1407 = vmatpush.bf16.msra.mxu0 0
        %1408 = vmatpush.bf16.msra.mxu0 %v1395
        %1409 = vmatpush.bf16.msra.mxu0 %v1394
        %1410 = vmatmul.bf16.gmra.mxu0 %v1400
        %v1411 = vpop.f32.mrf.mxu0
        %v1412 = vadd.f32 0.0, %v1411
        %v1413 = vpop.f32.mrf.mxu0
        %1414 = vdwg.mxu0
        %v1415 = vadd.f32 %v650, %v1412
        %v1416 = vld [vmem:[%s8] sm:$0x1]
        %v1417 = vmul.f32 %v1415, %v1415
        %v1418 = vsel %vm1398, %v1417, 0.0
        %1419 = vadd.xlane.f32.xlu0 %v1418
        %v1420 = vpop.xlane.xlu0 %1419
        %v1421 = vrcp.pop 32.0
        %v1422 = vmul.f32 32.0, %v1421
        %v1423 = vsub.f32 1.0, %v1422
        %v1424 = vmul.f32 %v1421, %v1423
        %v1425 = vadd.f32 %v1421, %v1424
        %vm1426 = vweird.f32 %v1421
        %v1427 = vsel %vm1426, %v1421, %v1425
        %v1428 = vmul.f32 %v1420, %v1427
        %v1429 = vadd.f32 %v1428, 1e-06
        %v1430 = vrsqrt.pop %v1429
        %v1431 = vmul.f32 %v1430, %v1429
        %v1432 = vmul.f32 %v1431, %v1430
        %v1433 = vmul.f32 0.5, %v1432
        %v1434 = vsub.f32 1.5, %v1433
        %v1435 = vmul.f32 %v1430, %v1434
        %vm1436 = vweird.f32 %v1429
        %vm1437 = vweird.f32 %v1430
        %vm1438 = vmor %vm1436, %vm1437
        %v1439 = vsel %vm1438, %v1430, %v1435
        %v1440 = vmul.f32 %v1415, %v1439
        %v1442 = vperm.slane %v1416, 0
        %v1444 = vmul.f32 %v1440, %v1442
        %v1445 = vpack.c.bf16 %v1444, %v1444
        %v1446 = vld [vmem:[#allocation14] sm:$0xf]
        %v1447 = vld [vmem:[#allocation14 + $0x4] sm:$0xf]
        %v1448 = vld [vmem:[#allocation14 + $0x8] sm:$0xf]
        %v1449 = vld [vmem:[#allocation14 + $0xc] sm:$0xf]
        %v1454 = vunpack.c.l.b16 %v1446
        %v1455 = vunpack.c.l.b16 %v1447
        %v1456 = vunpack.c.l.b16 %v1448
        %v1457 = vunpack.c.l.b16 %v1449
        %v1458 = vpack.c.b16 %v1455, %v1454
        %v1459 = vpack.c.b16 %v1457, %v1456
        %v1463 = vsel %vm1398, %v1445, 0
        %1465 = vmatpush.bf16.msra.mxu0 0
        %1466 = vmatpush.bf16.msra.mxu0 0
        %1467 = vmatpush.bf16.msra.mxu0 0
        %1468 = vmatpush.bf16.msra.mxu0 0
        %1469 = vmatpush.bf16.msra.mxu0 0
        %1470 = vmatpush.bf16.msra.mxu0 0
        %1471 = vmatpush.bf16.msra.mxu0 %v1459
        %1472 = vmatpush.bf16.msra.mxu0 %v1458
        %1473 = vmatmul.bf16.gmra.mxu0 %v1463
        %v1474 = vpop.f32.mrf.mxu0
        %v1475 = vadd.f32 0.0, %v1474
        %v1476 = vpop.f32.mrf.mxu0
        %1477 = vdwg.mxu0
        %v1478 = vmax.f32 %v1475, 0.0
        %v1479 = vpack.c.bf16 %v1478, %v1478
        %v1480 = vld [vmem:[%s10] sm:$0xf]
        %v1481 = vld [vmem:[%s10 + $0x4] sm:$0xf]
        %v1482 = vld [vmem:[%s10 + $0x8] sm:$0xf]
        %v1483 = vld [vmem:[%s10 + $0xc] sm:$0xf]
        %v1484 = vld [vmem:[%s10 + $0x10] sm:$0xf]
        %v1485 = vld [vmem:[%s10 + $0x14] sm:$0xf]
        %v1486 = vld [vmem:[%s10 + $0x18] sm:$0xf]
        %v1487 = vld [vmem:[%s10 + $0x1c] sm:$0xf]
        %v1496 = vunpack.c.l.b16 %v1480
        %v1497 = vunpack.c.l.b16 %v1481
        %v1498 = vunpack.c.l.b16 %v1482
        %v1499 = vunpack.c.l.b16 %v1483
        %v1500 = vunpack.c.l.b16 %v1484
        %v1501 = vunpack.c.l.b16 %v1485
        %v1502 = vunpack.c.l.b16 %v1486
        %v1503 = vunpack.c.l.b16 %v1487
        %v1504 = vpack.c.b16 %v1497, %v1496
        %v1505 = vpack.c.b16 %v1499, %v1498
        %v1506 = vpack.c.b16 %v1501, %v1500
        %v1507 = vpack.c.b16 %v1503, %v1502
        %vm1512 = vcmask 523264
        %v1514 = vsel %vm1512, %v1479, 0
        %1516 = vmatpush.bf16.msra.mxu0 0
        %1517 = vmatpush.bf16.msra.mxu0 0
        %1518 = vmatpush.bf16.msra.mxu0 0
        %1519 = vmatpush.bf16.msra.mxu0 0
        %1520 = vmatpush.bf16.msra.mxu0 %v1507
        %1521 = vmatpush.bf16.msra.mxu0 %v1506
        %1522 = vmatpush.bf16.msra.mxu0 %v1505
        %1523 = vmatpush.bf16.msra.mxu0 %v1504
        %1524 = vmatmul.bf16.gmra.mxu0 %v1514
        %v1525 = vpop.f32.mrf.mxu0
        %v1526 = vadd.f32 0.0, %v1525
        %v1527 = vpop.f32.mrf.mxu0
        %1528 = vdwg.mxu0
        %v1529 = vadd.f32 %v1415, %v1526
        %1530 = vst.msk [vmem:[%s505] sm:$0xff] %vm1398, %v1529
        %s1531 = sand.u32 %s298, 1
        %s1532 = scalar_lea.sflag [#allocation8], %s1531
        %s1533 = sand.u32 %s298, 1
        %s1534 = smul.addr %s1533, 8
        %s1535 = scalar_lea.vmem [#allocation15], %s1534
        // Predicated region
        $region89: #{tpu_custom_call.1} parent=63 // pred_check
          %p1536 = pneg %p308
        $region90: #{tpu_custom_call.1} parent=63 // pred_check_branch
          %1538 = sbr.rel (%p1536) target = $region92
        $region91: #{tpu_custom_call.1} parent=63 // pred_region
          %1540 = vsyncadd %s1532, 0
          %s1541 = sadd.s32 %s35, %s34
          %s1542 = smul.addr %s1541, 8
          %s1543 = scalar_lea.hbm %s11, %s1542
          %s1545 = sshll.u32 %s1535, 4
          %s1546 = int_to_ptr.vmem [resolvable:$true] %s1545
          %s1547 = sshll.u32 %s1543, 4
          %s1548 = int_to_ptr.hbm [resolvable:$true] %s1547
          %1550 = dma.vmem_to_hbm [thread:$0]  %s1546, 128, %s1548, %s1532
        $region92: #{tpu_custom_call.1} parent=63 // pred_fallthru
          _
      $region64: #{tpu_custom_call.1} parent=5 // pred_fallthru
        _
      %p1551 = scmp.le.s32.totalorder 2, %s25
      // Predicated region
      $region93: #{tpu_custom_call.1} parent=5 // pred_check
        %p1552 = pneg %p1551
      $region94: #{tpu_custom_call.1} parent=5 // pred_check_branch
        %1554 = sbr.rel (%p1552) target = $region96
      $region95: #{tpu_custom_call.1} parent=5 // pred_region
        %s1555 = ssub.s32 %s25, 2
        // Predicated region
        $region97: #{tpu_custom_call.1} parent=95 // pred_check
          %p1556 = pneg %p314
        $region98: #{tpu_custom_call.1} parent=95 // pred_check_branch
          %1558 = sbr.rel (%p1556) target = $region100
        $region99: #{tpu_custom_call.1} parent=95 // pred_region
          %s1559 = sand.u32 %s299, 1
          %s1560 = scalar_lea.sflag [#allocation8], %s1559
          %s1561 = sand.u32 %s299, 1
          %s1562 = smul.addr %s1561, 8
          %s1563 = scalar_lea.vmem [#allocation15], %s1562
          %1565 = dma.done %s1560, 128
        $region100: #{tpu_custom_call.1} parent=95 // pred_fallthru
          _
      $region96: #{tpu_custom_call.1} parent=5 // pred_fallthru
        _
    $region6: #{tpu_custom_call.1} parent=1 // loop_footer
      %s29 = sadd.s32 1, %s25
    $region7: #{tpu_custom_call.1} parent=1 // loop_footer_branch
      %24 = sbr.rel target = $region3
    $region8: #{tpu_custom_call.1} parent=1 // loop_exit
      _
    %1566 = vsyncpa [#allocation7], 1
    %s1567 = scalar_lea.sflag [#allocation7], 1
    %1568 = vsyncpa %s1567, 1
    %1569 = vsyncpa [#allocation10], 1
    %1570 = vsyncpa [#allocation13], 1
    %1571 = vsyncpa [#allocation8], 1
    %s1572 = scalar_lea.sflag [#allocation8], 1
    %1573 = vsyncpa %s1572, 1

</llo_original>
